<compile_context>
chip_gen: v6e
topology: v6e:2x2x1
jax: 0.10.0
libtpu: 0.0.40
codegen_flags: <defaults>
</compile_context>

<pallas_src>
import functools
import math

import jax
import jax.numpy as jnp
import numpy as np
from jax.experimental import pallas as pl
from jax.experimental.pallas import tpu as pltpu


# ----------------------------------------------------------------------------
# Pallas kernel: one full encoder layer for a single batch element.
# ----------------------------------------------------------------------------
def _encoder_layer_kernel(x_ref,
                          wq_ref, wk_ref, wv_ref, bq_ref, bk_ref, bv_ref,
                          wo_ref, bo_ref,
                          ln1_w_ref, ln1_b_ref,
                          w1_ref, b1_ref, w2_ref, b2_ref,
                          ln2_w_ref, ln2_b_ref,
                          o_ref, *, num_heads, eps=1e-5):
    x = x_ref[0]                                   # (S, D) float32
    S, D = x.shape
    x_bf = x.astype(jnp.bfloat16)

    # ---- multi-head self-attention (mask path is None) ---------------------
    # Per-head weights are sliced on the *leading* axis of 3-D refs, so there
    # is no lane-slicing / relayout of activations and no concat: each head's
    # output projection is accumulated directly into a full-lane (S, D) slab.
    attn = jnp.zeros((S, D), jnp.float32)
    for h in range(num_heads):                     # static, unrolled
        qh = jnp.dot(x_bf, wq_ref[h],
                     preferred_element_type=jnp.float32) + bq_ref[h]   # (S, hd)
        kh = jnp.dot(x_bf, wk_ref[h],
                     preferred_element_type=jnp.float32) + bk_ref[h]
        vh = jnp.dot(x_bf, wv_ref[h],
                     preferred_element_type=jnp.float32) + bv_ref[h]

        # scores: contract head_dim of both operands (no materialized kh.T)
        s = jax.lax.dot_general(
            qh.astype(jnp.bfloat16), kh.astype(jnp.bfloat16),
            dimension_numbers=(((1,), (1,)), ((), ())),
            preferred_element_type=jnp.float32)                         # (S, S)
        s = s - jnp.max(s, axis=-1, keepdims=True)
        p = jnp.exp(s)
        p = p * pl.reciprocal(jnp.sum(p, axis=-1, keepdims=True), approx=True)

        ctx = jnp.dot(p.astype(jnp.bfloat16), vh.astype(jnp.bfloat16),
                      preferred_element_type=jnp.float32)               # (S, hd)
        attn = attn + jnp.dot(ctx.astype(jnp.bfloat16), wo_ref[h],
                              preferred_element_type=jnp.float32)       # (S, D)
    attn = attn + bo_ref[...]

    # ---- residual + LayerNorm 1 (dropout1 = identity, eval mode) -----------
    y = x + attn
    mu = jnp.mean(y, axis=-1, keepdims=True)
    var = jnp.mean((y - mu) ** 2, axis=-1, keepdims=True)
    y = (y - mu) * jax.lax.rsqrt(var + eps) * ln1_w_ref[...] + ln1_b_ref[...]

    # ---- feed-forward: linear1 -> exact GELU -> linear2 --------------------
    h1 = jnp.dot(y.astype(jnp.bfloat16), w1_ref[...],
                 preferred_element_type=jnp.float32) + b1_ref[...]      # (S, F)
    h1 = 0.5 * h1 * (1.0 + jax.lax.erf(h1 * 0.7071067811865476))        # exact GELU
    h2 = jnp.dot(h1.astype(jnp.bfloat16), w2_ref[...],
                 preferred_element_type=jnp.float32) + b2_ref[...]      # (S, D)

    # ---- residual + LayerNorm 2 (dropout2 = identity, eval mode) -----------
    z = y + h2
    mu2 = jnp.mean(z, axis=-1, keepdims=True)
    var2 = jnp.mean((z - mu2) ** 2, axis=-1, keepdims=True)
    z = (z - mu2) * jax.lax.rsqrt(var2 + eps) * ln2_w_ref[...] + ln2_b_ref[...]

    o_ref[0] = z


# ----------------------------------------------------------------------------
# Wrapper: parameter plumbing + pallas_call (batch-major activations).
# ----------------------------------------------------------------------------
def transformer_encoder_layer(x, params, num_heads):
    """x: (B, S, D) float32, batch-major.

    For best results S should be a multiple of 8 and D / dim_feedforward
    multiples of 128 (lane-dense blocks).
    """
    B, S, D = x.shape
    hd = D // num_heads
    F_dim = params["linear1_w"].shape[0]
    scale = 1.0 / math.sqrt(hd)

    in_w = params["in_proj_w"]                       # (3D, D)
    in_b = params["in_proj_b"]                       # (3D,)

    # Right-multiplication weights; fold 1/sqrt(hd) into the Q projection.
    wq = in_w[0:D].T * scale                         # (D, D)
    wk = in_w[D:2 * D].T
    wv = in_w[2 * D:3 * D].T
    bq = in_b[0:D] * scale
    bk = in_b[D:2 * D]
    bv = in_b[2 * D:3 * D]

    def head_major_w(w):                             # (D, D) -> (H, D, hd)
        return w.reshape(D, num_heads, hd).transpose(1, 0, 2).astype(jnp.bfloat16)

    def head_major_b(b):                             # (D,) -> (H, 1, hd) f32
        return b.reshape(num_heads, hd)[:, None, :].astype(jnp.float32)

    wq_h, wk_h, wv_h = head_major_w(wq), head_major_w(wk), head_major_w(wv)
    bq_h, bk_h, bv_h = head_major_b(bq), head_major_b(bk), head_major_b(bv)
    # output projection, split on its input (head) axis: (H, hd, D)
    wo_h = params["out_proj_w"].T.reshape(num_heads, hd, D).astype(jnp.bfloat16)
    bo = params["out_proj_b"].reshape(1, D).astype(jnp.float32)

    ln1_w = params["ln1_w"].reshape(1, D).astype(jnp.float32)
    ln1_b = params["ln1_b"].reshape(1, D).astype(jnp.float32)
    w1 = params["linear1_w"].T.astype(jnp.bfloat16)              # (D, F)
    b1 = params["linear1_b"].reshape(1, F_dim).astype(jnp.float32)
    w2 = params["linear2_w"].T.astype(jnp.bfloat16)              # (F, D)
    b2 = params["linear2_b"].reshape(1, D).astype(jnp.float32)
    ln2_w = params["ln2_w"].reshape(1, D).astype(jnp.float32)
    ln2_b = params["ln2_b"].reshape(1, D).astype(jnp.float32)

    def full_spec(a):
        nd = a.ndim
        return pl.BlockSpec(a.shape, lambda b, _nd=nd: (0,) * _nd)

    operands = (x.astype(jnp.float32),
                wq_h, wk_h, wv_h, bq_h, bk_h, bv_h,
                wo_h, bo, ln1_w, ln1_b, w1, b1, w2, b2, ln2_w, ln2_b)

    in_specs = [pl.BlockSpec((1, S, D), lambda b: (b, 0, 0))]
    in_specs += [full_spec(op) for op in operands[1:]]

    kernel = functools.partial(_encoder_layer_kernel, num_heads=num_heads)
    out = pl.pallas_call(
        kernel,
        out_shape=jax.ShapeDtypeStruct((B, S, D), jnp.float32),
        grid_spec=pltpu.PrefetchScalarGridSpec(
            num_scalar_prefetch=0,
            grid=(B,),
            in_specs=in_specs,
            out_specs=pl.BlockSpec((1, S, D), lambda b: (b, 0, 0)),
        ),
        compiler_params=pltpu.CompilerParams(
            dimension_semantics=("parallel",),          # batch elems independent
            vmem_limit_bytes=56 * 1024 * 1024,          # fits v5e/v6e/v7x
        ),
    )(*operands)
    return out


def transformer_encoder_layer_seq_first(src, params, num_heads):
    """Compatibility wrapper for the PyTorch seq-first (S, B, D) convention."""
    out = transformer_encoder_layer(jnp.transpose(src, (1, 0, 2)), params, num_heads)
    return jnp.transpose(out, (1, 0, 2))


# ----------------------------------------------------------------------------
# Pure-JAX f32 reference (correctness check only), batch-major.
# ----------------------------------------------------------------------------
def _layernorm(x, w, b, eps=1e-5):
    mu = jnp.mean(x, axis=-1, keepdims=True)
    var = jnp.mean((x - mu) ** 2, axis=-1, keepdims=True)
    return (x - mu) / jnp.sqrt(var + eps) * w + b


def reference(x, params, num_heads):
    B, S, D = x.shape
    hd = D // num_heads
    qkv = jnp.einsum("bsd,ed->bse", x, params["in_proj_w"]) + params["in_proj_b"]
    q, k, v = jnp.split(qkv, 3, axis=-1)
    q = q * (hd ** -0.5)

    def split_heads(t):
        return t.reshape(B, S, num_heads, hd).transpose(0, 2, 1, 3)  # (B,H,S,hd)

    qh, kh, vh = split_heads(q), split_heads(k), split_heads(v)
    scores = jnp.einsum("bhqd,bhkd->bhqk", qh, kh)
    p = jax.nn.softmax(scores, axis=-1)
    ctx = jnp.einsum("bhqk,bhkd->bhqd", p, vh)
    ctx = ctx.transpose(0, 2, 1, 3).reshape(B, S, D)
    attn = jnp.einsum("bsd,ed->bse", ctx, params["out_proj_w"]) + params["out_proj_b"]
    y = _layernorm(x + attn, params["ln1_w"], params["ln1_b"])
    h1 = jnp.einsum("bsd,fd->bsf", y, params["linear1_w"]) + params["linear1_b"]
    h1 = jax.nn.gelu(h1, approximate=False)
    h2 = jnp.einsum("bsf,df->bsd", h1, params["linear2_w"]) + params["linear2_b"]
    return _layernorm(y + h2, params["ln2_w"], params["ln2_b"])


# ----------------------------------------------------------------------------
if __name__ == "__main__":
    B, S, D = 2, 8, 128        # batch, seq, d_model (lane-dense D)
    H = 4                      # num heads (head_dim = 32)
    F_dim = 256                # dim_feedforward (lane-dense)

    key = jax.random.PRNGKey(0)
    ks = jax.random.split(key, 10)
    rnd = lambda k, shape: 0.05 * jax.random.normal(k, shape, jnp.float32)

    params = {
        "in_proj_w": rnd(ks[0], (3 * D, D)),
        "in_proj_b": rnd(ks[1], (3 * D,)),
        "out_proj_w": rnd(ks[2], (D, D)),
        "out_proj_b": rnd(ks[3], (D,)),
        "ln1_w": jnp.ones((D,), jnp.float32),
        "ln1_b": jnp.zeros((D,), jnp.float32),
        "linear1_w": rnd(ks[4], (F_dim, D)),
        "linear1_b": rnd(ks[5], (F_dim,)),
        "linear2_w": rnd(ks[6], (D, F_dim)),
        "linear2_b": rnd(ks[7], (D,)),
        "ln2_w": jnp.ones((D,), jnp.float32),
        "ln2_b": jnp.zeros((D,), jnp.float32),
    }

    x = jax.random.normal(ks[8], (B, S, D), jnp.float32)    # batch-major input

    out = transformer_encoder_layer(x, params, H)
    out = jax.block_until_ready(out)

    ref = jax.block_until_ready(reference(x, params, H))
    # kernel uses bf16 MXU matmuls with f32 accumulation -> relaxed tolerance
    np.testing.assert_allclose(np.asarray(out), np.asarray(ref),
                               rtol=3e-2, atol=3e-2)
    print("KERNEL_OK")
</pallas_src>

<mosaic_0001>
module attributes {stable_mosaic.version = 11 : i64} {
  func.func @_encoder_layer_kernel(%arg0: i32, %arg1: memref<1x8x128xf32, #tpu.memory_space<vmem>>, %arg2: memref<4x128x32xbf16, #tpu.memory_space<vmem>>, %arg3: memref<4x128x32xbf16, #tpu.memory_space<vmem>>, %arg4: memref<4x128x32xbf16, #tpu.memory_space<vmem>>, %arg5: memref<4x1x32xf32, #tpu.memory_space<vmem>>, %arg6: memref<4x1x32xf32, #tpu.memory_space<vmem>>, %arg7: memref<4x1x32xf32, #tpu.memory_space<vmem>>, %arg8: memref<4x32x128xbf16, #tpu.memory_space<vmem>>, %arg9: memref<1x128xf32, #tpu.memory_space<vmem>>, %arg10: memref<1x128xf32, #tpu.memory_space<vmem>>, %arg11: memref<1x128xf32, #tpu.memory_space<vmem>>, %arg12: memref<128x256xbf16, #tpu.memory_space<vmem>>, %arg13: memref<1x256xf32, #tpu.memory_space<vmem>>, %arg14: memref<256x128xbf16, #tpu.memory_space<vmem>>, %arg15: memref<1x128xf32, #tpu.memory_space<vmem>>, %arg16: memref<1x128xf32, #tpu.memory_space<vmem>>, %arg17: memref<1x128xf32, #tpu.memory_space<vmem>>, %arg18: memref<1x8x128xf32, #tpu.memory_space<vmem>>) attributes {dimension_semantics = [#tpu.dimension_semantics<parallel>], iteration_bounds = array<i64: 2>, scalar_prefetch = 0 : i64, scratch_operands = 0 : i64, tpu.core_type = #tpu.core_type<tc>, window_params = [{transform_indices = @transform_0, window_bounds = array<i64: 1, 8, 128>}, {pipeline_mode = #tpu.pipeline_mode<synchronous>, transform_indices = @transform_1, window_bounds = array<i64: 4, 128, 32>}, {pipeline_mode = #tpu.pipeline_mode<synchronous>, transform_indices = @transform_2, window_bounds = array<i64: 4, 128, 32>}, {pipeline_mode = #tpu.pipeline_mode<synchronous>, transform_indices = @transform_3, window_bounds = array<i64: 4, 128, 32>}, {pipeline_mode = #tpu.pipeline_mode<synchronous>, transform_indices = @transform_4, window_bounds = array<i64: 4, 1, 32>}, {pipeline_mode = #tpu.pipeline_mode<synchronous>, transform_indices = @transform_5, window_bounds = array<i64: 4, 1, 32>}, {pipeline_mode = #tpu.pipeline_mode<synchronous>, transform_indices = @transform_6, window_bounds = array<i64: 4, 1, 32>}, {pipeline_mode = #tpu.pipeline_mode<synchronous>, transform_indices = @transform_7, window_bounds = array<i64: 4, 32, 128>}, {pipeline_mode = #tpu.pipeline_mode<synchronous>, transform_indices = @transform_8, window_bounds = array<i64: 1, 128>}, {pipeline_mode = #tpu.pipeline_mode<synchronous>, transform_indices = @transform_9, window_bounds = array<i64: 1, 128>}, {pipeline_mode = #tpu.pipeline_mode<synchronous>, transform_indices = @transform_10, window_bounds = array<i64: 1, 128>}, {pipeline_mode = #tpu.pipeline_mode<synchronous>, transform_indices = @transform_11, window_bounds = array<i64: 128, 256>}, {pipeline_mode = #tpu.pipeline_mode<synchronous>, transform_indices = @transform_12, window_bounds = array<i64: 1, 256>}, {pipeline_mode = #tpu.pipeline_mode<synchronous>, transform_indices = @transform_13, window_bounds = array<i64: 256, 128>}, {pipeline_mode = #tpu.pipeline_mode<synchronous>, transform_indices = @transform_14, window_bounds = array<i64: 1, 128>}, {pipeline_mode = #tpu.pipeline_mode<synchronous>, transform_indices = @transform_15, window_bounds = array<i64: 1, 128>}, {pipeline_mode = #tpu.pipeline_mode<synchronous>, transform_indices = @transform_16, window_bounds = array<i64: 1, 128>}, {transform_indices = @transform_17, window_bounds = array<i64: 1, 8, 128>}]} {
    %c0 = arith.constant 0 : index
    %c0_0 = arith.constant 0 : index
    %c0_1 = arith.constant 0 : index
    %0 = vector.load %arg1[%c0, %c0_0, %c0_1] : memref<1x8x128xf32, #tpu.memory_space<vmem>>, vector<1x8x128xf32>
    %1 = vector.shape_cast %0 : vector<1x8x128xf32> to vector<8x128xf32>
    %2 = arith.truncf %1 : vector<8x128xf32> to vector<8x128xbf16>
    %cst = arith.constant 0.000000e+00 : f32
    %3 = vector.broadcast %cst : f32 to vector<8x128xf32>
    %c0_2 = arith.constant 0 : index
    %c0_3 = arith.constant 0 : index
    %c0_4 = arith.constant 0 : index
    %4 = vector.load %arg2[%c0_2, %c0_3, %c0_4] : memref<4x128x32xbf16, #tpu.memory_space<vmem>>, vector<1x128x32xbf16>
    %5 = vector.shape_cast %4 : vector<1x128x32xbf16> to vector<128x32xbf16>
    %cst_5 = arith.constant dense<0.000000e+00> : vector<8x32xf32>
    %6 = tpu.matmul %2, %5, %cst_5 {dimension_numbers = #tpu.dot_dimension_numbers<[1], [0], [0], [1], [0, 0, 1, 1], [], []>} : vector<8x128xbf16>, vector<128x32xbf16>, vector<8x32xf32> -> vector<8x32xf32>
    %c0_6 = arith.constant 0 : index
    %c0_7 = arith.constant 0 : index
    %c0_8 = arith.constant 0 : index
    %7 = vector.load %arg5[%c0_6, %c0_7, %c0_8] : memref<4x1x32xf32, #tpu.memory_space<vmem>>, vector<1x1x32xf32>
    %8 = vector.shape_cast %7 : vector<1x1x32xf32> to vector<1x32xf32>
    %9 = vector.broadcast %8 : vector<1x32xf32> to vector<8x32xf32>
    %10 = arith.addf %6, %9 : vector<8x32xf32>
    %c0_9 = arith.constant 0 : index
    %c0_10 = arith.constant 0 : index
    %c0_11 = arith.constant 0 : index
    %11 = vector.load %arg3[%c0_9, %c0_10, %c0_11] : memref<4x128x32xbf16, #tpu.memory_space<vmem>>, vector<1x128x32xbf16>
    %12 = vector.shape_cast %11 : vector<1x128x32xbf16> to vector<128x32xbf16>
    %cst_12 = arith.constant dense<0.000000e+00> : vector<8x32xf32>
    %13 = tpu.matmul %2, %12, %cst_12 {dimension_numbers = #tpu.dot_dimension_numbers<[1], [0], [0], [1], [0, 0, 1, 1], [], []>} : vector<8x128xbf16>, vector<128x32xbf16>, vector<8x32xf32> -> vector<8x32xf32>
    %c0_13 = arith.constant 0 : index
    %c0_14 = arith.constant 0 : index
    %c0_15 = arith.constant 0 : index
    %14 = vector.load %arg6[%c0_13, %c0_14, %c0_15] : memref<4x1x32xf32, #tpu.memory_space<vmem>>, vector<1x1x32xf32>
    %15 = vector.shape_cast %14 : vector<1x1x32xf32> to vector<1x32xf32>
    %16 = vector.broadcast %15 : vector<1x32xf32> to vector<8x32xf32>
    %17 = arith.addf %13, %16 : vector<8x32xf32>
    %c0_16 = arith.constant 0 : index
    %c0_17 = arith.constant 0 : index
    %c0_18 = arith.constant 0 : index
    %18 = vector.load %arg4[%c0_16, %c0_17, %c0_18] : memref<4x128x32xbf16, #tpu.memory_space<vmem>>, vector<1x128x32xbf16>
    %19 = vector.shape_cast %18 : vector<1x128x32xbf16> to vector<128x32xbf16>
    %cst_19 = arith.constant dense<0.000000e+00> : vector<8x32xf32>
    %20 = tpu.matmul %2, %19, %cst_19 {dimension_numbers = #tpu.dot_dimension_numbers<[1], [0], [0], [1], [0, 0, 1, 1], [], []>} : vector<8x128xbf16>, vector<128x32xbf16>, vector<8x32xf32> -> vector<8x32xf32>
    %c0_20 = arith.constant 0 : index
    %c0_21 = arith.constant 0 : index
    %c0_22 = arith.constant 0 : index
    %21 = vector.load %arg7[%c0_20, %c0_21, %c0_22] : memref<4x1x32xf32, #tpu.memory_space<vmem>>, vector<1x1x32xf32>
    %22 = vector.shape_cast %21 : vector<1x1x32xf32> to vector<1x32xf32>
    %23 = vector.broadcast %22 : vector<1x32xf32> to vector<8x32xf32>
    %24 = arith.addf %20, %23 : vector<8x32xf32>
    %25 = arith.truncf %10 : vector<8x32xf32> to vector<8x32xbf16>
    %26 = arith.truncf %17 : vector<8x32xf32> to vector<8x32xbf16>
    %cst_23 = arith.constant dense<0.000000e+00> : vector<8x8xf32>
    %27 = tpu.matmul %25, %26, %cst_23 {dimension_numbers = #tpu.dot_dimension_numbers<[1], [1], [0], [0], [0, 0, 1, 0], [], []>} : vector<8x32xbf16>, vector<8x32xbf16>, vector<8x8xf32> -> vector<8x8xf32>
    %cst_24 = arith.constant dense<0xFF800000> : vector<8xf32>
    %28 = vector.multi_reduction <maximumf>, %27, %cst_24 [1] : vector<8x8xf32> to vector<8xf32>
    %29 = vector.shape_cast %28 : vector<8xf32> to vector<8x1xf32>
    %30 = vector.broadcast %29 : vector<8x1xf32> to vector<8x8xf32>
    %31 = arith.subf %27, %30 : vector<8x8xf32>
    %32 = math.exp %31 : vector<8x8xf32>
    %cst_25 = arith.constant dense<0.000000e+00> : vector<8xf32>
    %33 = vector.multi_reduction <add>, %32, %cst_25 [1] : vector<8x8xf32> to vector<8xf32>
    %34 = vector.shape_cast %33 : vector<8xf32> to vector<8x1xf32>
    %35 = tpu.reciprocal %34 {approx = true} : vector<8x1xf32> -> vector<8x1xf32>
    %36 = vector.broadcast %35 : vector<8x1xf32> to vector<8x8xf32>
    %37 = arith.mulf %32, %36 : vector<8x8xf32>
    %38 = arith.truncf %37 : vector<8x8xf32> to vector<8x8xbf16>
    %39 = arith.truncf %24 : vector<8x32xf32> to vector<8x32xbf16>
    %cst_26 = arith.constant dense<0.000000e+00> : vector<8x32xf32>
    %40 = tpu.matmul %38, %39, %cst_26 {dimension_numbers = #tpu.dot_dimension_numbers<[1], [0], [0], [1], [0, 0, 1, 1], [], []>} : vector<8x8xbf16>, vector<8x32xbf16>, vector<8x32xf32> -> vector<8x32xf32>
    %41 = arith.truncf %40 : vector<8x32xf32> to vector<8x32xbf16>
    %c0_27 = arith.constant 0 : index
    %c0_28 = arith.constant 0 : index
    %c0_29 = arith.constant 0 : index
    %42 = vector.load %arg8[%c0_27, %c0_28, %c0_29] : memref<4x32x128xbf16, #tpu.memory_space<vmem>>, vector<1x32x128xbf16>
    %43 = vector.shape_cast %42 : vector<1x32x128xbf16> to vector<32x128xbf16>
    %cst_30 = arith.constant dense<0.000000e+00> : vector<8x128xf32>
    %44 = tpu.matmul %41, %43, %cst_30 {dimension_numbers = #tpu.dot_dimension_numbers<[1], [0], [0], [1], [0, 0, 1, 1], [], []>} : vector<8x32xbf16>, vector<32x128xbf16>, vector<8x128xf32> -> vector<8x128xf32>
    %45 = arith.addf %3, %44 : vector<8x128xf32>
    %c1 = arith.constant 1 : index
    %c0_31 = arith.constant 0 : index
    %c0_32 = arith.constant 0 : index
    %46 = vector.load %arg2[%c1, %c0_31, %c0_32] : memref<4x128x32xbf16, #tpu.memory_space<vmem>>, vector<1x128x32xbf16>
    %47 = vector.shape_cast %46 : vector<1x128x32xbf16> to vector<128x32xbf16>
    %cst_33 = arith.constant dense<0.000000e+00> : vector<8x32xf32>
    %48 = tpu.matmul %2, %47, %cst_33 {dimension_numbers = #tpu.dot_dimension_numbers<[1], [0], [0], [1], [0, 0, 1, 1], [], []>} : vector<8x128xbf16>, vector<128x32xbf16>, vector<8x32xf32> -> vector<8x32xf32>
    %c1_34 = arith.constant 1 : index
    %c0_35 = arith.constant 0 : index
    %c0_36 = arith.constant 0 : index
    %49 = vector.load %arg5[%c1_34, %c0_35, %c0_36] : memref<4x1x32xf32, #tpu.memory_space<vmem>>, vector<1x1x32xf32>
    %50 = vector.shape_cast %49 : vector<1x1x32xf32> to vector<1x32xf32>
    %51 = vector.broadcast %50 : vector<1x32xf32> to vector<8x32xf32>
    %52 = arith.addf %48, %51 : vector<8x32xf32>
    %c1_37 = arith.constant 1 : index
    %c0_38 = arith.constant 0 : index
    %c0_39 = arith.constant 0 : index
    %53 = vector.load %arg3[%c1_37, %c0_38, %c0_39] : memref<4x128x32xbf16, #tpu.memory_space<vmem>>, vector<1x128x32xbf16>
    %54 = vector.shape_cast %53 : vector<1x128x32xbf16> to vector<128x32xbf16>
    %cst_40 = arith.constant dense<0.000000e+00> : vector<8x32xf32>
    %55 = tpu.matmul %2, %54, %cst_40 {dimension_numbers = #tpu.dot_dimension_numbers<[1], [0], [0], [1], [0, 0, 1, 1], [], []>} : vector<8x128xbf16>, vector<128x32xbf16>, vector<8x32xf32> -> vector<8x32xf32>
    %c1_41 = arith.constant 1 : index
    %c0_42 = arith.constant 0 : index
    %c0_43 = arith.constant 0 : index
    %56 = vector.load %arg6[%c1_41, %c0_42, %c0_43] : memref<4x1x32xf32, #tpu.memory_space<vmem>>, vector<1x1x32xf32>
    %57 = vector.shape_cast %56 : vector<1x1x32xf32> to vector<1x32xf32>
    %58 = vector.broadcast %57 : vector<1x32xf32> to vector<8x32xf32>
    %59 = arith.addf %55, %58 : vector<8x32xf32>
    %c1_44 = arith.constant 1 : index
    %c0_45 = arith.constant 0 : index
    %c0_46 = arith.constant 0 : index
    %60 = vector.load %arg4[%c1_44, %c0_45, %c0_46] : memref<4x128x32xbf16, #tpu.memory_space<vmem>>, vector<1x128x32xbf16>
    %61 = vector.shape_cast %60 : vector<1x128x32xbf16> to vector<128x32xbf16>
    %cst_47 = arith.constant dense<0.000000e+00> : vector<8x32xf32>
    %62 = tpu.matmul %2, %61, %cst_47 {dimension_numbers = #tpu.dot_dimension_numbers<[1], [0], [0], [1], [0, 0, 1, 1], [], []>} : vector<8x128xbf16>, vector<128x32xbf16>, vector<8x32xf32> -> vector<8x32xf32>
    %c1_48 = arith.constant 1 : index
    %c0_49 = arith.constant 0 : index
    %c0_50 = arith.constant 0 : index
    %63 = vector.load %arg7[%c1_48, %c0_49, %c0_50] : memref<4x1x32xf32, #tpu.memory_space<vmem>>, vector<1x1x32xf32>
    %64 = vector.shape_cast %63 : vector<1x1x32xf32> to vector<1x32xf32>
    %65 = vector.broadcast %64 : vector<1x32xf32> to vector<8x32xf32>
    %66 = arith.addf %62, %65 : vector<8x32xf32>
    %67 = arith.truncf %52 : vector<8x32xf32> to vector<8x32xbf16>
    %68 = arith.truncf %59 : vector<8x32xf32> to vector<8x32xbf16>
    %cst_51 = arith.constant dense<0.000000e+00> : vector<8x8xf32>
    %69 = tpu.matmul %67, %68, %cst_51 {dimension_numbers = #tpu.dot_dimension_numbers<[1], [1], [0], [0], [0, 0, 1, 0], [], []>} : vector<8x32xbf16>, vector<8x32xbf16>, vector<8x8xf32> -> vector<8x8xf32>
    %cst_52 = arith.constant dense<0xFF800000> : vector<8xf32>
    %70 = vector.multi_reduction <maximumf>, %69, %cst_52 [1] : vector<8x8xf32> to vector<8xf32>
    %71 = vector.shape_cast %70 : vector<8xf32> to vector<8x1xf32>
    %72 = vector.broadcast %71 : vector<8x1xf32> to vector<8x8xf32>
    %73 = arith.subf %69, %72 : vector<8x8xf32>
    %74 = math.exp %73 : vector<8x8xf32>
    %cst_53 = arith.constant dense<0.000000e+00> : vector<8xf32>
    %75 = vector.multi_reduction <add>, %74, %cst_53 [1] : vector<8x8xf32> to vector<8xf32>
    %76 = vector.shape_cast %75 : vector<8xf32> to vector<8x1xf32>
    %77 = tpu.reciprocal %76 {approx = true} : vector<8x1xf32> -> vector<8x1xf32>
    %78 = vector.broadcast %77 : vector<8x1xf32> to vector<8x8xf32>
    %79 = arith.mulf %74, %78 : vector<8x8xf32>
    %80 = arith.truncf %79 : vector<8x8xf32> to vector<8x8xbf16>
    %81 = arith.truncf %66 : vector<8x32xf32> to vector<8x32xbf16>
    %cst_54 = arith.constant dense<0.000000e+00> : vector<8x32xf32>
    %82 = tpu.matmul %80, %81, %cst_54 {dimension_numbers = #tpu.dot_dimension_numbers<[1], [0], [0], [1], [0, 0, 1, 1], [], []>} : vector<8x8xbf16>, vector<8x32xbf16>, vector<8x32xf32> -> vector<8x32xf32>
    %83 = arith.truncf %82 : vector<8x32xf32> to vector<8x32xbf16>
    %c1_55 = arith.constant 1 : index
    %c0_56 = arith.constant 0 : index
    %c0_57 = arith.constant 0 : index
    %84 = vector.load %arg8[%c1_55, %c0_56, %c0_57] : memref<4x32x128xbf16, #tpu.memory_space<vmem>>, vector<1x32x128xbf16>
    %85 = vector.shape_cast %84 : vector<1x32x128xbf16> to vector<32x128xbf16>
    %cst_58 = arith.constant dense<0.000000e+00> : vector<8x128xf32>
    %86 = tpu.matmul %83, %85, %cst_58 {dimension_numbers = #tpu.dot_dimension_numbers<[1], [0], [0], [1], [0, 0, 1, 1], [], []>} : vector<8x32xbf16>, vector<32x128xbf16>, vector<8x128xf32> -> vector<8x128xf32>
    %87 = arith.addf %45, %86 : vector<8x128xf32>
    %c2 = arith.constant 2 : index
    %c0_59 = arith.constant 0 : index
    %c0_60 = arith.constant 0 : index
    %88 = vector.load %arg2[%c2, %c0_59, %c0_60] : memref<4x128x32xbf16, #tpu.memory_space<vmem>>, vector<1x128x32xbf16>
    %89 = vector.shape_cast %88 : vector<1x128x32xbf16> to vector<128x32xbf16>
    %cst_61 = arith.constant dense<0.000000e+00> : vector<8x32xf32>
    %90 = tpu.matmul %2, %89, %cst_61 {dimension_numbers = #tpu.dot_dimension_numbers<[1], [0], [0], [1], [0, 0, 1, 1], [], []>} : vector<8x128xbf16>, vector<128x32xbf16>, vector<8x32xf32> -> vector<8x32xf32>
    %c2_62 = arith.constant 2 : index
    %c0_63 = arith.constant 0 : index
    %c0_64 = arith.constant 0 : index
    %91 = vector.load %arg5[%c2_62, %c0_63, %c0_64] : memref<4x1x32xf32, #tpu.memory_space<vmem>>, vector<1x1x32xf32>
    %92 = vector.shape_cast %91 : vector<1x1x32xf32> to vector<1x32xf32>
    %93 = vector.broadcast %92 : vector<1x32xf32> to vector<8x32xf32>
    %94 = arith.addf %90, %93 : vector<8x32xf32>
    %c2_65 = arith.constant 2 : index
    %c0_66 = arith.constant 0 : index
    %c0_67 = arith.constant 0 : index
    %95 = vector.load %arg3[%c2_65, %c0_66, %c0_67] : memref<4x128x32xbf16, #tpu.memory_space<vmem>>, vector<1x128x32xbf16>
    %96 = vector.shape_cast %95 : vector<1x128x32xbf16> to vector<128x32xbf16>
    %cst_68 = arith.constant dense<0.000000e+00> : vector<8x32xf32>
    %97 = tpu.matmul %2, %96, %cst_68 {dimension_numbers = #tpu.dot_dimension_numbers<[1], [0], [0], [1], [0, 0, 1, 1], [], []>} : vector<8x128xbf16>, vector<128x32xbf16>, vector<8x32xf32> -> vector<8x32xf32>
    %c2_69 = arith.constant 2 : index
    %c0_70 = arith.constant 0 : index
    %c0_71 = arith.constant 0 : index
    %98 = vector.load %arg6[%c2_69, %c0_70, %c0_71] : memref<4x1x32xf32, #tpu.memory_space<vmem>>, vector<1x1x32xf32>
    %99 = vector.shape_cast %98 : vector<1x1x32xf32> to vector<1x32xf32>
    %100 = vector.broadcast %99 : vector<1x32xf32> to vector<8x32xf32>
    %101 = arith.addf %97, %100 : vector<8x32xf32>
    %c2_72 = arith.constant 2 : index
    %c0_73 = arith.constant 0 : index
    %c0_74 = arith.constant 0 : index
    %102 = vector.load %arg4[%c2_72, %c0_73, %c0_74] : memref<4x128x32xbf16, #tpu.memory_space<vmem>>, vector<1x128x32xbf16>
    %103 = vector.shape_cast %102 : vector<1x128x32xbf16> to vector<128x32xbf16>
    %cst_75 = arith.constant dense<0.000000e+00> : vector<8x32xf32>
    %104 = tpu.matmul %2, %103, %cst_75 {dimension_numbers = #tpu.dot_dimension_numbers<[1], [0], [0], [1], [0, 0, 1, 1], [], []>} : vector<8x128xbf16>, vector<128x32xbf16>, vector<8x32xf32> -> vector<8x32xf32>
    %c2_76 = arith.constant 2 : index
    %c0_77 = arith.constant 0 : index
    %c0_78 = arith.constant 0 : index
    %105 = vector.load %arg7[%c2_76, %c0_77, %c0_78] : memref<4x1x32xf32, #tpu.memory_space<vmem>>, vector<1x1x32xf32>
    %106 = vector.shape_cast %105 : vector<1x1x32xf32> to vector<1x32xf32>
    %107 = vector.broadcast %106 : vector<1x32xf32> to vector<8x32xf32>
    %108 = arith.addf %104, %107 : vector<8x32xf32>
    %109 = arith.truncf %94 : vector<8x32xf32> to vector<8x32xbf16>
    %110 = arith.truncf %101 : vector<8x32xf32> to vector<8x32xbf16>
    %cst_79 = arith.constant dense<0.000000e+00> : vector<8x8xf32>
    %111 = tpu.matmul %109, %110, %cst_79 {dimension_numbers = #tpu.dot_dimension_numbers<[1], [1], [0], [0], [0, 0, 1, 0], [], []>} : vector<8x32xbf16>, vector<8x32xbf16>, vector<8x8xf32> -> vector<8x8xf32>
    %cst_80 = arith.constant dense<0xFF800000> : vector<8xf32>
    %112 = vector.multi_reduction <maximumf>, %111, %cst_80 [1] : vector<8x8xf32> to vector<8xf32>
    %113 = vector.shape_cast %112 : vector<8xf32> to vector<8x1xf32>
    %114 = vector.broadcast %113 : vector<8x1xf32> to vector<8x8xf32>
    %115 = arith.subf %111, %114 : vector<8x8xf32>
    %116 = math.exp %115 : vector<8x8xf32>
    %cst_81 = arith.constant dense<0.000000e+00> : vector<8xf32>
    %117 = vector.multi_reduction <add>, %116, %cst_81 [1] : vector<8x8xf32> to vector<8xf32>
    %118 = vector.shape_cast %117 : vector<8xf32> to vector<8x1xf32>
    %119 = tpu.reciprocal %118 {approx = true} : vector<8x1xf32> -> vector<8x1xf32>
    %120 = vector.broadcast %119 : vector<8x1xf32> to vector<8x8xf32>
    %121 = arith.mulf %116, %120 : vector<8x8xf32>
    %122 = arith.truncf %121 : vector<8x8xf32> to vector<8x8xbf16>
    %123 = arith.truncf %108 : vector<8x32xf32> to vector<8x32xbf16>
    %cst_82 = arith.constant dense<0.000000e+00> : vector<8x32xf32>
    %124 = tpu.matmul %122, %123, %cst_82 {dimension_numbers = #tpu.dot_dimension_numbers<[1], [0], [0], [1], [0, 0, 1, 1], [], []>} : vector<8x8xbf16>, vector<8x32xbf16>, vector<8x32xf32> -> vector<8x32xf32>
    %125 = arith.truncf %124 : vector<8x32xf32> to vector<8x32xbf16>
    %c2_83 = arith.constant 2 : index
    %c0_84 = arith.constant 0 : index
    %c0_85 = arith.constant 0 : index
    %126 = vector.load %arg8[%c2_83, %c0_84, %c0_85] : memref<4x32x128xbf16, #tpu.memory_space<vmem>>, vector<1x32x128xbf16>
    %127 = vector.shape_cast %126 : vector<1x32x128xbf16> to vector<32x128xbf16>
    %cst_86 = arith.constant dense<0.000000e+00> : vector<8x128xf32>
    %128 = tpu.matmul %125, %127, %cst_86 {dimension_numbers = #tpu.dot_dimension_numbers<[1], [0], [0], [1], [0, 0, 1, 1], [], []>} : vector<8x32xbf16>, vector<32x128xbf16>, vector<8x128xf32> -> vector<8x128xf32>
    %129 = arith.addf %87, %128 : vector<8x128xf32>
    %c3 = arith.constant 3 : index
    %c0_87 = arith.constant 0 : index
    %c0_88 = arith.constant 0 : index
    %130 = vector.load %arg2[%c3, %c0_87, %c0_88] : memref<4x128x32xbf16, #tpu.memory_space<vmem>>, vector<1x128x32xbf16>
    %131 = vector.shape_cast %130 : vector<1x128x32xbf16> to vector<128x32xbf16>
    %cst_89 = arith.constant dense<0.000000e+00> : vector<8x32xf32>
    %132 = tpu.matmul %2, %131, %cst_89 {dimension_numbers = #tpu.dot_dimension_numbers<[1], [0], [0], [1], [0, 0, 1, 1], [], []>} : vector<8x128xbf16>, vector<128x32xbf16>, vector<8x32xf32> -> vector<8x32xf32>
    %c3_90 = arith.constant 3 : index
    %c0_91 = arith.constant 0 : index
    %c0_92 = arith.constant 0 : index
    %133 = vector.load %arg5[%c3_90, %c0_91, %c0_92] : memref<4x1x32xf32, #tpu.memory_space<vmem>>, vector<1x1x32xf32>
    %134 = vector.shape_cast %133 : vector<1x1x32xf32> to vector<1x32xf32>
    %135 = vector.broadcast %134 : vector<1x32xf32> to vector<8x32xf32>
    %136 = arith.addf %132, %135 : vector<8x32xf32>
    %c3_93 = arith.constant 3 : index
    %c0_94 = arith.constant 0 : index
    %c0_95 = arith.constant 0 : index
    %137 = vector.load %arg3[%c3_93, %c0_94, %c0_95] : memref<4x128x32xbf16, #tpu.memory_space<vmem>>, vector<1x128x32xbf16>
    %138 = vector.shape_cast %137 : vector<1x128x32xbf16> to vector<128x32xbf16>
    %cst_96 = arith.constant dense<0.000000e+00> : vector<8x32xf32>
    %139 = tpu.matmul %2, %138, %cst_96 {dimension_numbers = #tpu.dot_dimension_numbers<[1], [0], [0], [1], [0, 0, 1, 1], [], []>} : vector<8x128xbf16>, vector<128x32xbf16>, vector<8x32xf32> -> vector<8x32xf32>
    %c3_97 = arith.constant 3 : index
    %c0_98 = arith.constant 0 : index
    %c0_99 = arith.constant 0 : index
    %140 = vector.load %arg6[%c3_97, %c0_98, %c0_99] : memref<4x1x32xf32, #tpu.memory_space<vmem>>, vector<1x1x32xf32>
    %141 = vector.shape_cast %140 : vector<1x1x32xf32> to vector<1x32xf32>
    %142 = vector.broadcast %141 : vector<1x32xf32> to vector<8x32xf32>
    %143 = arith.addf %139, %142 : vector<8x32xf32>
    %c3_100 = arith.constant 3 : index
    %c0_101 = arith.constant 0 : index
    %c0_102 = arith.constant 0 : index
    %144 = vector.load %arg4[%c3_100, %c0_101, %c0_102] : memref<4x128x32xbf16, #tpu.memory_space<vmem>>, vector<1x128x32xbf16>
    %145 = vector.shape_cast %144 : vector<1x128x32xbf16> to vector<128x32xbf16>
    %cst_103 = arith.constant dense<0.000000e+00> : vector<8x32xf32>
    %146 = tpu.matmul %2, %145, %cst_103 {dimension_numbers = #tpu.dot_dimension_numbers<[1], [0], [0], [1], [0, 0, 1, 1], [], []>} : vector<8x128xbf16>, vector<128x32xbf16>, vector<8x32xf32> -> vector<8x32xf32>
    %c3_104 = arith.constant 3 : index
    %c0_105 = arith.constant 0 : index
    %c0_106 = arith.constant 0 : index
    %147 = vector.load %arg7[%c3_104, %c0_105, %c0_106] : memref<4x1x32xf32, #tpu.memory_space<vmem>>, vector<1x1x32xf32>
    %148 = vector.shape_cast %147 : vector<1x1x32xf32> to vector<1x32xf32>
    %149 = vector.broadcast %148 : vector<1x32xf32> to vector<8x32xf32>
    %150 = arith.addf %146, %149 : vector<8x32xf32>
    %151 = arith.truncf %136 : vector<8x32xf32> to vector<8x32xbf16>
    %152 = arith.truncf %143 : vector<8x32xf32> to vector<8x32xbf16>
    %cst_107 = arith.constant dense<0.000000e+00> : vector<8x8xf32>
    %153 = tpu.matmul %151, %152, %cst_107 {dimension_numbers = #tpu.dot_dimension_numbers<[1], [1], [0], [0], [0, 0, 1, 0], [], []>} : vector<8x32xbf16>, vector<8x32xbf16>, vector<8x8xf32> -> vector<8x8xf32>
    %cst_108 = arith.constant dense<0xFF800000> : vector<8xf32>
    %154 = vector.multi_reduction <maximumf>, %153, %cst_108 [1] : vector<8x8xf32> to vector<8xf32>
    %155 = vector.shape_cast %154 : vector<8xf32> to vector<8x1xf32>
    %156 = vector.broadcast %155 : vector<8x1xf32> to vector<8x8xf32>
    %157 = arith.subf %153, %156 : vector<8x8xf32>
    %158 = math.exp %157 : vector<8x8xf32>
    %cst_109 = arith.constant dense<0.000000e+00> : vector<8xf32>
    %159 = vector.multi_reduction <add>, %158, %cst_109 [1] : vector<8x8xf32> to vector<8xf32>
    %160 = vector.shape_cast %159 : vector<8xf32> to vector<8x1xf32>
    %161 = tpu.reciprocal %160 {approx = true} : vector<8x1xf32> -> vector<8x1xf32>
    %162 = vector.broadcast %161 : vector<8x1xf32> to vector<8x8xf32>
    %163 = arith.mulf %158, %162 : vector<8x8xf32>
    %164 = arith.truncf %163 : vector<8x8xf32> to vector<8x8xbf16>
    %165 = arith.truncf %150 : vector<8x32xf32> to vector<8x32xbf16>
    %cst_110 = arith.constant dense<0.000000e+00> : vector<8x32xf32>
    %166 = tpu.matmul %164, %165, %cst_110 {dimension_numbers = #tpu.dot_dimension_numbers<[1], [0], [0], [1], [0, 0, 1, 1], [], []>} : vector<8x8xbf16>, vector<8x32xbf16>, vector<8x32xf32> -> vector<8x32xf32>
    %167 = arith.truncf %166 : vector<8x32xf32> to vector<8x32xbf16>
    %c3_111 = arith.constant 3 : index
    %c0_112 = arith.constant 0 : index
    %c0_113 = arith.constant 0 : index
    %168 = vector.load %arg8[%c3_111, %c0_112, %c0_113] : memref<4x32x128xbf16, #tpu.memory_space<vmem>>, vector<1x32x128xbf16>
    %169 = vector.shape_cast %168 : vector<1x32x128xbf16> to vector<32x128xbf16>
    %cst_114 = arith.constant dense<0.000000e+00> : vector<8x128xf32>
    %170 = tpu.matmul %167, %169, %cst_114 {dimension_numbers = #tpu.dot_dimension_numbers<[1], [0], [0], [1], [0, 0, 1, 1], [], []>} : vector<8x32xbf16>, vector<32x128xbf16>, vector<8x128xf32> -> vector<8x128xf32>
    %171 = arith.addf %129, %170 : vector<8x128xf32>
    %c0_115 = arith.constant 0 : index
    %c0_116 = arith.constant 0 : index
    %172 = vector.load %arg9[%c0_115, %c0_116] : memref<1x128xf32, #tpu.memory_space<vmem>>, vector<1x128xf32>
    %173 = vector.broadcast %172 : vector<1x128xf32> to vector<8x128xf32>
    %174 = arith.addf %171, %173 : vector<8x128xf32>
    %175 = arith.addf %1, %174 : vector<8x128xf32>
    %cst_117 = arith.constant dense<0.000000e+00> : vector<8xf32>
    %176 = vector.multi_reduction <add>, %175, %cst_117 [1] : vector<8x128xf32> to vector<8xf32>
    %177 = vector.shape_cast %176 : vector<8xf32> to vector<8x1xf32>
    %cst_118 = arith.constant 1.280000e+02 : f32
    %178 = vector.broadcast %cst_118 : f32 to vector<8x1xf32>
    %179 = arith.divf %177, %178 : vector<8x1xf32>
    %180 = vector.broadcast %179 : vector<8x1xf32> to vector<8x128xf32>
    %181 = arith.subf %175, %180 : vector<8x128xf32>
    %182 = arith.mulf %181, %181 : vector<8x128xf32>
    %cst_119 = arith.constant dense<0.000000e+00> : vector<8xf32>
    %183 = vector.multi_reduction <add>, %182, %cst_119 [1] : vector<8x128xf32> to vector<8xf32>
    %184 = vector.shape_cast %183 : vector<8xf32> to vector<8x1xf32>
    %cst_120 = arith.constant 1.280000e+02 : f32
    %185 = vector.broadcast %cst_120 : f32 to vector<8x1xf32>
    %186 = arith.divf %184, %185 : vector<8x1xf32>
    %187 = vector.broadcast %179 : vector<8x1xf32> to vector<8x128xf32>
    %188 = arith.subf %175, %187 : vector<8x128xf32>
    %cst_121 = arith.constant 9.99999974E-6 : f32
    %189 = vector.broadcast %cst_121 : f32 to vector<8x1xf32>
    %190 = arith.addf %186, %189 : vector<8x1xf32>
    %191 = math.rsqrt %190 : vector<8x1xf32>
    %192 = vector.broadcast %191 : vector<8x1xf32> to vector<8x128xf32>
    %193 = arith.mulf %188, %192 : vector<8x128xf32>
    %c0_122 = arith.constant 0 : index
    %c0_123 = arith.constant 0 : index
    %194 = vector.load %arg10[%c0_122, %c0_123] : memref<1x128xf32, #tpu.memory_space<vmem>>, vector<1x128xf32>
    %195 = vector.broadcast %194 : vector<1x128xf32> to vector<8x128xf32>
    %196 = arith.mulf %193, %195 : vector<8x128xf32>
    %c0_124 = arith.constant 0 : index
    %c0_125 = arith.constant 0 : index
    %197 = vector.load %arg11[%c0_124, %c0_125] : memref<1x128xf32, #tpu.memory_space<vmem>>, vector<1x128xf32>
    %198 = vector.broadcast %197 : vector<1x128xf32> to vector<8x128xf32>
    %199 = arith.addf %196, %198 : vector<8x128xf32>
    %200 = arith.truncf %199 : vector<8x128xf32> to vector<8x128xbf16>
    %c0_126 = arith.constant 0 : index
    %c0_127 = arith.constant 0 : index
    %201 = vector.load %arg12[%c0_126, %c0_127] : memref<128x256xbf16, #tpu.memory_space<vmem>>, vector<128x256xbf16>
    %cst_128 = arith.constant dense<0.000000e+00> : vector<8x256xf32>
    %202 = tpu.matmul %200, %201, %cst_128 {dimension_numbers = #tpu.dot_dimension_numbers<[1], [0], [0], [1], [0, 0, 1, 1], [], []>} : vector<8x128xbf16>, vector<128x256xbf16>, vector<8x256xf32> -> vector<8x256xf32>
    %c0_129 = arith.constant 0 : index
    %c0_130 = arith.constant 0 : index
    %203 = vector.load %arg13[%c0_129, %c0_130] : memref<1x256xf32, #tpu.memory_space<vmem>>, vector<1x256xf32>
    %204 = vector.broadcast %203 : vector<1x256xf32> to vector<8x256xf32>
    %205 = arith.addf %202, %204 : vector<8x256xf32>
    %cst_131 = arith.constant 5.000000e-01 : f32
    %206 = vector.broadcast %cst_131 : f32 to vector<8x256xf32>
    %207 = arith.mulf %206, %205 : vector<8x256xf32>
    %cst_132 = arith.constant 0.707106769 : f32
    %208 = vector.broadcast %cst_132 : f32 to vector<8x256xf32>
    %209 = arith.mulf %205, %208 : vector<8x256xf32>
    %210 = math.erf %209 : vector<8x256xf32>
    %cst_133 = arith.constant 1.000000e+00 : f32
    %211 = vector.broadcast %cst_133 : f32 to vector<8x256xf32>
    %212 = arith.addf %211, %210 : vector<8x256xf32>
    %213 = arith.mulf %207, %212 : vector<8x256xf32>
    %214 = arith.truncf %213 : vector<8x256xf32> to vector<8x256xbf16>
    %c0_134 = arith.constant 0 : index
    %c0_135 = arith.constant 0 : index
    %215 = vector.load %arg14[%c0_134, %c0_135] : memref<256x128xbf16, #tpu.memory_space<vmem>>, vector<256x128xbf16>
    %cst_136 = arith.constant dense<0.000000e+00> : vector<8x128xf32>
    %216 = tpu.matmul %214, %215, %cst_136 {dimension_numbers = #tpu.dot_dimension_numbers<[1], [0], [0], [1], [0, 0, 1, 1], [], []>} : vector<8x256xbf16>, vector<256x128xbf16>, vector<8x128xf32> -> vector<8x128xf32>
    %c0_137 = arith.constant 0 : index
    %c0_138 = arith.constant 0 : index
    %217 = vector.load %arg15[%c0_137, %c0_138] : memref<1x128xf32, #tpu.memory_space<vmem>>, vector<1x128xf32>
    %218 = vector.broadcast %217 : vector<1x128xf32> to vector<8x128xf32>
    %219 = arith.addf %216, %218 : vector<8x128xf32>
    %220 = arith.addf %199, %219 : vector<8x128xf32>
    %cst_139 = arith.constant dense<0.000000e+00> : vector<8xf32>
    %221 = vector.multi_reduction <add>, %220, %cst_139 [1] : vector<8x128xf32> to vector<8xf32>
    %222 = vector.shape_cast %221 : vector<8xf32> to vector<8x1xf32>
    %cst_140 = arith.constant 1.280000e+02 : f32
    %223 = vector.broadcast %cst_140 : f32 to vector<8x1xf32>
    %224 = arith.divf %222, %223 : vector<8x1xf32>
    %225 = vector.broadcast %224 : vector<8x1xf32> to vector<8x128xf32>
    %226 = arith.subf %220, %225 : vector<8x128xf32>
    %227 = arith.mulf %226, %226 : vector<8x128xf32>
    %cst_141 = arith.constant dense<0.000000e+00> : vector<8xf32>
    %228 = vector.multi_reduction <add>, %227, %cst_141 [1] : vector<8x128xf32> to vector<8xf32>
    %229 = vector.shape_cast %228 : vector<8xf32> to vector<8x1xf32>
    %cst_142 = arith.constant 1.280000e+02 : f32
    %230 = vector.broadcast %cst_142 : f32 to vector<8x1xf32>
    %231 = arith.divf %229, %230 : vector<8x1xf32>
    %232 = vector.broadcast %224 : vector<8x1xf32> to vector<8x128xf32>
    %233 = arith.subf %220, %232 : vector<8x128xf32>
    %cst_143 = arith.constant 9.99999974E-6 : f32
    %234 = vector.broadcast %cst_143 : f32 to vector<8x1xf32>
    %235 = arith.addf %231, %234 : vector<8x1xf32>
    %236 = math.rsqrt %235 : vector<8x1xf32>
    %237 = vector.broadcast %236 : vector<8x1xf32> to vector<8x128xf32>
    %238 = arith.mulf %233, %237 : vector<8x128xf32>
    %c0_144 = arith.constant 0 : index
    %c0_145 = arith.constant 0 : index
    %239 = vector.load %arg16[%c0_144, %c0_145] : memref<1x128xf32, #tpu.memory_space<vmem>>, vector<1x128xf32>
    %240 = vector.broadcast %239 : vector<1x128xf32> to vector<8x128xf32>
    %241 = arith.mulf %238, %240 : vector<8x128xf32>
    %c0_146 = arith.constant 0 : index
    %c0_147 = arith.constant 0 : index
    %242 = vector.load %arg17[%c0_146, %c0_147] : memref<1x128xf32, #tpu.memory_space<vmem>>, vector<1x128xf32>
    %243 = vector.broadcast %242 : vector<1x128xf32> to vector<8x128xf32>
    %244 = arith.addf %241, %243 : vector<8x128xf32>
    %c0_148 = arith.constant 0 : index
    %c0_149 = arith.constant 0 : index
    %c0_150 = arith.constant 0 : index
    %245 = vector.load %arg18[%c0_148, %c0_149, %c0_150] : memref<1x8x128xf32, #tpu.memory_space<vmem>>, vector<1x8x128xf32>
    %246 = vector.shape_cast %245 : vector<1x8x128xf32> to vector<8x128xf32>
    %247 = vector.shape_cast %244 : vector<8x128xf32> to vector<1x8x128xf32>
    tpu.vector_store %arg18[%c0_148, %c0_149, %c0_150], %247 {strides = array<i32>} : memref<1x8x128xf32, #tpu.memory_space<vmem>>, vector<1x8x128xf32>,
    return
  }
  func.func @transform_0(%arg0: i32) -> (i32, i32, i32) {
    %c0_i32 = arith.constant 0 : i32
    %c0_i32_0 = arith.constant 0 : i32
    %c0_i32_1 = arith.constant 0 : i32
    return %arg0, %c0_i32, %c0_i32_0 : i32, i32, i32
  }
  func.func @transform_1(%arg0: i32) -> (i32, i32, i32) {
    %c0_i32 = arith.constant 0 : i32
    %c0_i32_0 = arith.constant 0 : i32
    %c0_i32_1 = arith.constant 0 : i32
    %c0_i32_2 = arith.constant 0 : i32
    return %c0_i32, %c0_i32_0, %c0_i32_1 : i32, i32, i32
  }
  func.func @transform_2(%arg0: i32) -> (i32, i32, i32) {
    %c0_i32 = arith.constant 0 : i32
    %c0_i32_0 = arith.constant 0 : i32
    %c0_i32_1 = arith.constant 0 : i32
    %c0_i32_2 = arith.constant 0 : i32
    return %c0_i32, %c0_i32_0, %c0_i32_1 : i32, i32, i32
  }
  func.func @transform_3(%arg0: i32) -> (i32, i32, i32) {
    %c0_i32 = arith.constant 0 : i32
    %c0_i32_0 = arith.constant 0 : i32
    %c0_i32_1 = arith.constant 0 : i32
    %c0_i32_2 = arith.constant 0 : i32
    return %c0_i32, %c0_i32_0, %c0_i32_1 : i32, i32, i32
  }
  func.func @transform_4(%arg0: i32) -> (i32, i32, i32) {
    %c0_i32 = arith.constant 0 : i32
    %c0_i32_0 = arith.constant 0 : i32
    %c0_i32_1 = arith.constant 0 : i32
    %c0_i32_2 = arith.constant 0 : i32
    return %c0_i32, %c0_i32_0, %c0_i32_1 : i32, i32, i32
  }
  func.func @transform_5(%arg0: i32) -> (i32, i32, i32) {
    %c0_i32 = arith.constant 0 : i32
    %c0_i32_0 = arith.constant 0 : i32
    %c0_i32_1 = arith.constant 0 : i32
    %c0_i32_2 = arith.constant 0 : i32
    return %c0_i32, %c0_i32_0, %c0_i32_1 : i32, i32, i32
  }
  func.func @transform_6(%arg0: i32) -> (i32, i32, i32) {
    %c0_i32 = arith.constant 0 : i32
    %c0_i32_0 = arith.constant 0 : i32
    %c0_i32_1 = arith.constant 0 : i32
    %c0_i32_2 = arith.constant 0 : i32
    return %c0_i32, %c0_i32_0, %c0_i32_1 : i32, i32, i32
  }
  func.func @transform_7(%arg0: i32) -> (i32, i32, i32) {
    %c0_i32 = arith.constant 0 : i32
    %c0_i32_0 = arith.constant 0 : i32
    %c0_i32_1 = arith.constant 0 : i32
    %c0_i32_2 = arith.constant 0 : i32
    return %c0_i32, %c0_i32_0, %c0_i32_1 : i32, i32, i32
  }
  func.func @transform_8(%arg0: i32) -> (i32, i32) {
    %c0_i32 = arith.constant 0 : i32
    %c0_i32_0 = arith.constant 0 : i32
    %c0_i32_1 = arith.constant 0 : i32
    return %c0_i32, %c0_i32_0 : i32, i32
  }
  func.func @transform_9(%arg0: i32) -> (i32, i32) {
    %c0_i32 = arith.constant 0 : i32
    %c0_i32_0 = arith.constant 0 : i32
    %c0_i32_1 = arith.constant 0 : i32
    return %c0_i32, %c0_i32_0 : i32, i32
  }
  func.func @transform_10(%arg0: i32) -> (i32, i32) {
    %c0_i32 = arith.constant 0 : i32
    %c0_i32_0 = arith.constant 0 : i32
    %c0_i32_1 = arith.constant 0 : i32
    return %c0_i32, %c0_i32_0 : i32, i32
  }
  func.func @transform_11(%arg0: i32) -> (i32, i32) {
    %c0_i32 = arith.constant 0 : i32
    %c0_i32_0 = arith.constant 0 : i32
    %c0_i32_1 = arith.constant 0 : i32
    return %c0_i32, %c0_i32_0 : i32, i32
  }
  func.func @transform_12(%arg0: i32) -> (i32, i32) {
    %c0_i32 = arith.constant 0 : i32
    %c0_i32_0 = arith.constant 0 : i32
    %c0_i32_1 = arith.constant 0 : i32
    return %c0_i32, %c0_i32_0 : i32, i32
  }
  func.func @transform_13(%arg0: i32) -> (i32, i32) {
    %c0_i32 = arith.constant 0 : i32
    %c0_i32_0 = arith.constant 0 : i32
    %c0_i32_1 = arith.constant 0 : i32
    return %c0_i32, %c0_i32_0 : i32, i32
  }
  func.func @transform_14(%arg0: i32) -> (i32, i32) {
    %c0_i32 = arith.constant 0 : i32
    %c0_i32_0 = arith.constant 0 : i32
    %c0_i32_1 = arith.constant 0 : i32
    return %c0_i32, %c0_i32_0 : i32, i32
  }
  func.func @transform_15(%arg0: i32) -> (i32, i32) {
    %c0_i32 = arith.constant 0 : i32
    %c0_i32_0 = arith.constant 0 : i32
    %c0_i32_1 = arith.constant 0 : i32
    return %c0_i32, %c0_i32_0 : i32, i32
  }
  func.func @transform_16(%arg0: i32) -> (i32, i32) {
    %c0_i32 = arith.constant 0 : i32
    %c0_i32_0 = arith.constant 0 : i32
    %c0_i32_1 = arith.constant 0 : i32
    return %c0_i32, %c0_i32_0 : i32, i32
  }
  func.func @transform_17(%arg0: i32) -> (i32, i32, i32) {
    %c0_i32 = arith.constant 0 : i32
    %c0_i32_0 = arith.constant 0 : i32
    %c0_i32_1 = arith.constant 0 : i32
    return %arg0, %c0_i32, %c0_i32_0 : i32, i32, i32
  }
}

</mosaic_0001>

<llo_original>
// kernel: tpu_custom_call.1
$region0: #{tpu_custom_call.1}
  #allocation0 [shape = 'u32[]', space=smem, size = 0x4, offset = 0x4, fixed_abs, tag = 'smem constant byte address 0x4 - core index']
  #allocation1 [shape = 'u32[144,128]{1,0:T(1,128)}', space=vmem, size = 0x12000, scoped, tag = 'internal scratch']
  %s0 = inlined_call_operand.vmem [shape: f32[2,8,128], index: 0, kind: input, shape index: {}]
  %s1 = inlined_call_operand.vmem [shape: bf16[4,128,32], index: 1, kind: input, shape index: {}]
  %s2 = inlined_call_operand.vmem [shape: bf16[4,128,32], index: 2, kind: input, shape index: {}]
  %s3 = inlined_call_operand.vmem [shape: bf16[4,128,32], index: 3, kind: input, shape index: {}]
  %s4 = inlined_call_operand.vmem [shape: f32[4,1,32], index: 4, kind: input, shape index: {}]
  %s5 = inlined_call_operand.vmem [shape: f32[4,1,32], index: 5, kind: input, shape index: {}]
  %s6 = inlined_call_operand.vmem [shape: f32[4,1,32], index: 6, kind: input, shape index: {}]
  %s7 = inlined_call_operand.vmem [shape: bf16[4,32,128], index: 7, kind: input, shape index: {}]
  %s8 = inlined_call_operand.vmem [shape: f32[1,128], index: 8, kind: input, shape index: {}]
  %s9 = inlined_call_operand.vmem [shape: f32[1,128], index: 9, kind: input, shape index: {}]
  %s10 = inlined_call_operand.vmem [shape: f32[1,128], index: 10, kind: input, shape index: {}]
  %s11 = inlined_call_operand.vmem [shape: bf16[128,256], index: 11, kind: input, shape index: {}]
  %s12 = inlined_call_operand.vmem [shape: f32[1,256], index: 12, kind: input, shape index: {}]
  %s13 = inlined_call_operand.vmem [shape: bf16[256,128], index: 13, kind: input, shape index: {}]
  %s14 = inlined_call_operand.vmem [shape: f32[1,128], index: 14, kind: input, shape index: {}]
  %s15 = inlined_call_operand.vmem [shape: f32[1,128], index: 15, kind: input, shape index: {}]
  %s16 = inlined_call_operand.vmem [shape: f32[1,128], index: 16, kind: input, shape index: {}]
  %s17 = inlined_call_operand.hbm [shape: f32[2,8,128], index: 17, kind: output, shape index: {}]
  %s18 = sld [smem:[#allocation0]]
  $region101: #{tpu_custom_call.1} parent=0
    _
  %s20 = ssub.s32 1, %s18
  %s21 = scalar_select 0, %s20, %s18
  $region1: #{tpu_custom_call.1} parent=0
    #allocation2 [shape = 'u8[8192]{0}', space=vmem, size = 0x2000, scoped, tag = 'output window, operand 0']
    #allocation3 [shape = 's32[2]{0}', space=sflag, size = 0x8, scoped, tag = 'scoped memory for tpu_custom_call.1']
    %22 = vsyncpa [#allocation3], 0
    %s23 = scalar_lea.sflag [#allocation3], 1
    %24 = vsyncpa %s23, 0
    loop: start=0, step=1, limit=4
    $region2: #{tpu_custom_call.1} parent=1 // loop_pre_header
      _
    $region3: #{tpu_custom_call.1} parent=1 // loop_header
      %s26 = sphi 0, %s30
      %p27 = scmp.ge.s32.totalorder %s26, 4
      %s36 = sphi 0, %s38
      %s39 = sphi 0, %s36
      %s40 = sphi 0, %s39
      %s56 = sphi 0, %s40
      %s60 = sphi 0, %s60
      %s62 = sphi 0, %s60
      %s63 = sphi 0, %s62
      %s77 = sphi 0, %s63
      %s81 = sphi 0, %s81
      %s83 = sphi 0, %s81
      %s84 = sphi 0, %s83
      %s98 = sphi 0, %s84
      %s102 = sphi 0, %s102
      %s104 = sphi 0, %s102
      %s105 = sphi 0, %s104
      %s119 = sphi 0, %s105
      %s123 = sphi 0, %s123
      %s125 = sphi 0, %s123
      %s126 = sphi 0, %s125
      %s140 = sphi 0, %s126
      %s144 = sphi 0, %s144
      %s146 = sphi 0, %s144
      %s147 = sphi 0, %s146
      %s161 = sphi 0, %s147
      %s165 = sphi 0, %s165
      %s167 = sphi 0, %s165
      %s168 = sphi 0, %s167
      %s182 = sphi 0, %s168
      %s186 = sphi 0, %s186
      %s188 = sphi 0, %s186
      %s189 = sphi 0, %s188
      %s203 = sphi 0, %s189
      %s207 = sphi 0, %s207
      %s209 = sphi 0, %s207
      %s210 = sphi 0, %s209
      %s224 = sphi 0, %s210
      %s228 = sphi 0, %s228
      %s230 = sphi 0, %s228
      %s231 = sphi 0, %s230
      %s245 = sphi 0, %s231
      %s249 = sphi 0, %s249
      %s251 = sphi 0, %s249
      %s252 = sphi 0, %s251
      %s266 = sphi 0, %s252
      %s270 = sphi 0, %s270
      %s272 = sphi 0, %s270
      %s273 = sphi 0, %s272
      %s287 = sphi 0, %s273
      %s291 = sphi 0, %s291
      %s293 = sphi 0, %s291
      %s294 = sphi 0, %s293
      %s308 = sphi 0, %s294
      %s312 = sphi 0, %s312
      %s314 = sphi 0, %s312
      %s315 = sphi 0, %s314
      %s329 = sphi 0, %s315
      %s333 = sphi 0, %s333
      %s335 = sphi 0, %s333
      %s336 = sphi 0, %s335
      %s350 = sphi 0, %s336
      %s354 = sphi 0, %s354
      %s356 = sphi 0, %s354
      %s357 = sphi 0, %s356
      %s371 = sphi 0, %s357
      %s375 = sphi 0, %s375
      %s377 = sphi 0, %s375
      %s378 = sphi 0, %s377
      %s392 = sphi 0, %s378
      %s398 = sphi 0, %s400
      %s401 = sphi 0, %s398
      %s402 = sphi 0, %s401
      %s418 = sphi 0, %s402
    $region4: #{tpu_custom_call.1} parent=1 // loop_header_branch
      %29 = sbr.rel (%p27) target = $region8
    $region5: #{tpu_custom_call.1} parent=1 // loop_body
      %s31 = ssub.s32 %s26, 1
      %s32 = ssub.s32 %s26, 2
      %s33 = sadd.s32 %s26, 1
      %s34 = ssub.s32 %s26, %s33
      %p35 = scmp.eq.s32.totalorder %s34, 0
      %s37 = sadd.s32 %s36, 1
      %s38 = scalar_select %p35, %s36, %s37
      %p41 = pneg %p35
      %p42 = scmp.eq.s32.totalorder %s26, 1
      %p43 = por %p41, %p42
      %p44 = scmp.ne.s32.totalorder %s36, %s39
      %p45 = scmp.eq.s32.totalorder %s26, 0
      %p46 = por %p44, %p45
      %p47 = scmp.ne.s32.totalorder %s36, %s39
      %p48 = scmp.eq.s32.totalorder %s31, 1
      %p49 = por %p47, %p48
      %p50 = scmp.ne.s32.totalorder %s39, %s40
      %p51 = scmp.eq.s32.totalorder %s31, 0
      %p52 = por %p50, %p51
      %p53 = scmp.ne.s32.totalorder %s39, %s40
      %p54 = scmp.eq.s32.totalorder %s32, 1
      %p55 = por %p53, %p54
      %p57 = scmp.ne.s32.totalorder %s40, %s56
      %p58 = scmp.eq.s32.totalorder %s32, 0
      %p59 = por %p57, %p58
      %s61 = sadd.s32 %s60, 1
      %p64 = scmp.eq.s32.totalorder %s26, 1
      %p65 = scmp.ne.s32.totalorder %s60, %s62
      %p66 = scmp.eq.s32.totalorder %s26, 0
      %p67 = por %p65, %p66
      %p68 = scmp.ne.s32.totalorder %s60, %s62
      %p69 = scmp.eq.s32.totalorder %s31, 1
      %p70 = por %p68, %p69
      %p71 = scmp.ne.s32.totalorder %s62, %s63
      %p72 = scmp.eq.s32.totalorder %s31, 0
      %p73 = por %p71, %p72
      %p74 = scmp.ne.s32.totalorder %s62, %s63
      %p75 = scmp.eq.s32.totalorder %s32, 1
      %p76 = por %p74, %p75
      %p78 = scmp.ne.s32.totalorder %s63, %s77
      %p79 = scmp.eq.s32.totalorder %s32, 0
      %p80 = por %p78, %p79
      %s82 = sadd.s32 %s81, 1
      %p85 = scmp.eq.s32.totalorder %s26, 1
      %p86 = scmp.ne.s32.totalorder %s81, %s83
      %p87 = scmp.eq.s32.totalorder %s26, 0
      %p88 = por %p86, %p87
      %p89 = scmp.ne.s32.totalorder %s81, %s83
      %p90 = scmp.eq.s32.totalorder %s31, 1
      %p91 = por %p89, %p90
      %p92 = scmp.ne.s32.totalorder %s83, %s84
      %p93 = scmp.eq.s32.totalorder %s31, 0
      %p94 = por %p92, %p93
      %p95 = scmp.ne.s32.totalorder %s83, %s84
      %p96 = scmp.eq.s32.totalorder %s32, 1
      %p97 = por %p95, %p96
      %p99 = scmp.ne.s32.totalorder %s84, %s98
      %p100 = scmp.eq.s32.totalorder %s32, 0
      %p101 = por %p99, %p100
      %s103 = sadd.s32 %s102, 1
      %p106 = scmp.eq.s32.totalorder %s26, 1
      %p107 = scmp.ne.s32.totalorder %s102, %s104
      %p108 = scmp.eq.s32.totalorder %s26, 0
      %p109 = por %p107, %p108
      %p110 = scmp.ne.s32.totalorder %s102, %s104
      %p111 = scmp.eq.s32.totalorder %s31, 1
      %p112 = por %p110, %p111
      %p113 = scmp.ne.s32.totalorder %s104, %s105
      %p114 = scmp.eq.s32.totalorder %s31, 0
      %p115 = por %p113, %p114
      %p116 = scmp.ne.s32.totalorder %s104, %s105
      %p117 = scmp.eq.s32.totalorder %s32, 1
      %p118 = por %p116, %p117
      %p120 = scmp.ne.s32.totalorder %s105, %s119
      %p121 = scmp.eq.s32.totalorder %s32, 0
      %p122 = por %p120, %p121
      %s124 = sadd.s32 %s123, 1
      %p127 = scmp.eq.s32.totalorder %s26, 1
      %p128 = scmp.ne.s32.totalorder %s123, %s125
      %p129 = scmp.eq.s32.totalorder %s26, 0
      %p130 = por %p128, %p129
      %p131 = scmp.ne.s32.totalorder %s123, %s125
      %p132 = scmp.eq.s32.totalorder %s31, 1
      %p133 = por %p131, %p132
      %p134 = scmp.ne.s32.totalorder %s125, %s126
      %p135 = scmp.eq.s32.totalorder %s31, 0
      %p136 = por %p134, %p135
      %p137 = scmp.ne.s32.totalorder %s125, %s126
      %p138 = scmp.eq.s32.totalorder %s32, 1
      %p139 = por %p137, %p138
      %p141 = scmp.ne.s32.totalorder %s126, %s140
      %p142 = scmp.eq.s32.totalorder %s32, 0
      %p143 = por %p141, %p142
      %s145 = sadd.s32 %s144, 1
      %p148 = scmp.eq.s32.totalorder %s26, 1
      %p149 = scmp.ne.s32.totalorder %s144, %s146
      %p150 = scmp.eq.s32.totalorder %s26, 0
      %p151 = por %p149, %p150
      %p152 = scmp.ne.s32.totalorder %s144, %s146
      %p153 = scmp.eq.s32.totalorder %s31, 1
      %p154 = por %p152, %p153
      %p155 = scmp.ne.s32.totalorder %s146, %s147
      %p156 = scmp.eq.s32.totalorder %s31, 0
      %p157 = por %p155, %p156
      %p158 = scmp.ne.s32.totalorder %s146, %s147
      %p159 = scmp.eq.s32.totalorder %s32, 1
      %p160 = por %p158, %p159
      %p162 = scmp.ne.s32.totalorder %s147, %s161
      %p163 = scmp.eq.s32.totalorder %s32, 0
      %p164 = por %p162, %p163
      %s166 = sadd.s32 %s165, 1
      %p169 = scmp.eq.s32.totalorder %s26, 1
      %p170 = scmp.ne.s32.totalorder %s165, %s167
      %p171 = scmp.eq.s32.totalorder %s26, 0
      %p172 = por %p170, %p171
      %p173 = scmp.ne.s32.totalorder %s165, %s167
      %p174 = scmp.eq.s32.totalorder %s31, 1
      %p175 = por %p173, %p174
      %p176 = scmp.ne.s32.totalorder %s167, %s168
      %p177 = scmp.eq.s32.totalorder %s31, 0
      %p178 = por %p176, %p177
      %p179 = scmp.ne.s32.totalorder %s167, %s168
      %p180 = scmp.eq.s32.totalorder %s32, 1
      %p181 = por %p179, %p180
      %p183 = scmp.ne.s32.totalorder %s168, %s182
      %p184 = scmp.eq.s32.totalorder %s32, 0
      %p185 = por %p183, %p184
      %s187 = sadd.s32 %s186, 1
      %p190 = scmp.eq.s32.totalorder %s26, 1
      %p191 = scmp.ne.s32.totalorder %s186, %s188
      %p192 = scmp.eq.s32.totalorder %s26, 0
      %p193 = por %p191, %p192
      %p194 = scmp.ne.s32.totalorder %s186, %s188
      %p195 = scmp.eq.s32.totalorder %s31, 1
      %p196 = por %p194, %p195
      %p197 = scmp.ne.s32.totalorder %s188, %s189
      %p198 = scmp.eq.s32.totalorder %s31, 0
      %p199 = por %p197, %p198
      %p200 = scmp.ne.s32.totalorder %s188, %s189
      %p201 = scmp.eq.s32.totalorder %s32, 1
      %p202 = por %p200, %p201
      %p204 = scmp.ne.s32.totalorder %s189, %s203
      %p205 = scmp.eq.s32.totalorder %s32, 0
      %p206 = por %p204, %p205
      %s208 = sadd.s32 %s207, 1
      %p211 = scmp.eq.s32.totalorder %s26, 1
      %p212 = scmp.ne.s32.totalorder %s207, %s209
      %p213 = scmp.eq.s32.totalorder %s26, 0
      %p214 = por %p212, %p213
      %p215 = scmp.ne.s32.totalorder %s207, %s209
      %p216 = scmp.eq.s32.totalorder %s31, 1
      %p217 = por %p215, %p216
      %p218 = scmp.ne.s32.totalorder %s209, %s210
      %p219 = scmp.eq.s32.totalorder %s31, 0
      %p220 = por %p218, %p219
      %p221 = scmp.ne.s32.totalorder %s209, %s210
      %p222 = scmp.eq.s32.totalorder %s32, 1
      %p223 = por %p221, %p222
      %p225 = scmp.ne.s32.totalorder %s210, %s224
      %p226 = scmp.eq.s32.totalorder %s32, 0
      %p227 = por %p225, %p226
      %s229 = sadd.s32 %s228, 1
      %p232 = scmp.eq.s32.totalorder %s26, 1
      %p233 = scmp.ne.s32.totalorder %s228, %s230
      %p234 = scmp.eq.s32.totalorder %s26, 0
      %p235 = por %p233, %p234
      %p236 = scmp.ne.s32.totalorder %s228, %s230
      %p237 = scmp.eq.s32.totalorder %s31, 1
      %p238 = por %p236, %p237
      %p239 = scmp.ne.s32.totalorder %s230, %s231
      %p240 = scmp.eq.s32.totalorder %s31, 0
      %p241 = por %p239, %p240
      %p242 = scmp.ne.s32.totalorder %s230, %s231
      %p243 = scmp.eq.s32.totalorder %s32, 1
      %p244 = por %p242, %p243
      %p246 = scmp.ne.s32.totalorder %s231, %s245
      %p247 = scmp.eq.s32.totalorder %s32, 0
      %p248 = por %p246, %p247
      %s250 = sadd.s32 %s249, 1
      %p253 = scmp.eq.s32.totalorder %s26, 1
      %p254 = scmp.ne.s32.totalorder %s249, %s251
      %p255 = scmp.eq.s32.totalorder %s26, 0
      %p256 = por %p254, %p255
      %p257 = scmp.ne.s32.totalorder %s249, %s251
      %p258 = scmp.eq.s32.totalorder %s31, 1
      %p259 = por %p257, %p258
      %p260 = scmp.ne.s32.totalorder %s251, %s252
      %p261 = scmp.eq.s32.totalorder %s31, 0
      %p262 = por %p260, %p261
      %p263 = scmp.ne.s32.totalorder %s251, %s252
      %p264 = scmp.eq.s32.totalorder %s32, 1
      %p265 = por %p263, %p264
      %p267 = scmp.ne.s32.totalorder %s252, %s266
      %p268 = scmp.eq.s32.totalorder %s32, 0
      %p269 = por %p267, %p268
      %s271 = sadd.s32 %s270, 1
      %p274 = scmp.eq.s32.totalorder %s26, 1
      %p275 = scmp.ne.s32.totalorder %s270, %s272
      %p276 = scmp.eq.s32.totalorder %s26, 0
      %p277 = por %p275, %p276
      %p278 = scmp.ne.s32.totalorder %s270, %s272
      %p279 = scmp.eq.s32.totalorder %s31, 1
      %p280 = por %p278, %p279
      %p281 = scmp.ne.s32.totalorder %s272, %s273
      %p282 = scmp.eq.s32.totalorder %s31, 0
      %p283 = por %p281, %p282
      %p284 = scmp.ne.s32.totalorder %s272, %s273
      %p285 = scmp.eq.s32.totalorder %s32, 1
      %p286 = por %p284, %p285
      %p288 = scmp.ne.s32.totalorder %s273, %s287
      %p289 = scmp.eq.s32.totalorder %s32, 0
      %p290 = por %p288, %p289
      %s292 = sadd.s32 %s291, 1
      %p295 = scmp.eq.s32.totalorder %s26, 1
      %p296 = scmp.ne.s32.totalorder %s291, %s293
      %p297 = scmp.eq.s32.totalorder %s26, 0
      %p298 = por %p296, %p297
      %p299 = scmp.ne.s32.totalorder %s291, %s293
      %p300 = scmp.eq.s32.totalorder %s31, 1
      %p301 = por %p299, %p300
      %p302 = scmp.ne.s32.totalorder %s293, %s294
      %p303 = scmp.eq.s32.totalorder %s31, 0
      %p304 = por %p302, %p303
      %p305 = scmp.ne.s32.totalorder %s293, %s294
      %p306 = scmp.eq.s32.totalorder %s32, 1
      %p307 = por %p305, %p306
      %p309 = scmp.ne.s32.totalorder %s294, %s308
      %p310 = scmp.eq.s32.totalorder %s32, 0
      %p311 = por %p309, %p310
      %s313 = sadd.s32 %s312, 1
      %p316 = scmp.eq.s32.totalorder %s26, 1
      %p317 = scmp.ne.s32.totalorder %s312, %s314
      %p318 = scmp.eq.s32.totalorder %s26, 0
      %p319 = por %p317, %p318
      %p320 = scmp.ne.s32.totalorder %s312, %s314
      %p321 = scmp.eq.s32.totalorder %s31, 1
      %p322 = por %p320, %p321
      %p323 = scmp.ne.s32.totalorder %s314, %s315
      %p324 = scmp.eq.s32.totalorder %s31, 0
      %p325 = por %p323, %p324
      %p326 = scmp.ne.s32.totalorder %s314, %s315
      %p327 = scmp.eq.s32.totalorder %s32, 1
      %p328 = por %p326, %p327
      %p330 = scmp.ne.s32.totalorder %s315, %s329
      %p331 = scmp.eq.s32.totalorder %s32, 0
      %p332 = por %p330, %p331
      %s334 = sadd.s32 %s333, 1
      %p337 = scmp.eq.s32.totalorder %s26, 1
      %p338 = scmp.ne.s32.totalorder %s333, %s335
      %p339 = scmp.eq.s32.totalorder %s26, 0
      %p340 = por %p338, %p339
      %p341 = scmp.ne.s32.totalorder %s333, %s335
      %p342 = scmp.eq.s32.totalorder %s31, 1
      %p343 = por %p341, %p342
      %p344 = scmp.ne.s32.totalorder %s335, %s336
      %p345 = scmp.eq.s32.totalorder %s31, 0
      %p346 = por %p344, %p345
      %p347 = scmp.ne.s32.totalorder %s335, %s336
      %p348 = scmp.eq.s32.totalorder %s32, 1
      %p349 = por %p347, %p348
      %p351 = scmp.ne.s32.totalorder %s336, %s350
      %p352 = scmp.eq.s32.totalorder %s32, 0
      %p353 = por %p351, %p352
      %s355 = sadd.s32 %s354, 1
      %p358 = scmp.eq.s32.totalorder %s26, 1
      %p359 = scmp.ne.s32.totalorder %s354, %s356
      %p360 = scmp.eq.s32.totalorder %s26, 0
      %p361 = por %p359, %p360
      %p362 = scmp.ne.s32.totalorder %s354, %s356
      %p363 = scmp.eq.s32.totalorder %s31, 1
      %p364 = por %p362, %p363
      %p365 = scmp.ne.s32.totalorder %s356, %s357
      %p366 = scmp.eq.s32.totalorder %s31, 0
      %p367 = por %p365, %p366
      %p368 = scmp.ne.s32.totalorder %s356, %s357
      %p369 = scmp.eq.s32.totalorder %s32, 1
      %p370 = por %p368, %p369
      %p372 = scmp.ne.s32.totalorder %s357, %s371
      %p373 = scmp.eq.s32.totalorder %s32, 0
      %p374 = por %p372, %p373
      %s376 = sadd.s32 %s375, 1
      %p379 = scmp.eq.s32.totalorder %s26, 1
      %p380 = scmp.ne.s32.totalorder %s375, %s377
      %p381 = scmp.eq.s32.totalorder %s26, 0
      %p382 = por %p380, %p381
      %p383 = scmp.ne.s32.totalorder %s375, %s377
      %p384 = scmp.eq.s32.totalorder %s31, 1
      %p385 = por %p383, %p384
      %p386 = scmp.ne.s32.totalorder %s377, %s378
      %p387 = scmp.eq.s32.totalorder %s31, 0
      %p388 = por %p386, %p387
      %p389 = scmp.ne.s32.totalorder %s377, %s378
      %p390 = scmp.eq.s32.totalorder %s32, 1
      %p391 = por %p389, %p390
      %p393 = scmp.ne.s32.totalorder %s378, %s392
      %p394 = scmp.eq.s32.totalorder %s32, 0
      %p395 = por %p393, %p394
      %s396 = ssub.s32 %s26, %s33
      %p397 = scmp.eq.s32.totalorder %s396, 0
      %s399 = sadd.s32 %s398, 1
      %s400 = scalar_select %p397, %s398, %s399
      %p403 = pneg %p397
      %p404 = scmp.eq.s32.totalorder %s26, 1
      %p405 = por %p403, %p404
      %p406 = scmp.ne.s32.totalorder %s398, %s401
      %p407 = scmp.eq.s32.totalorder %s26, 0
      %p408 = por %p406, %p407
      %p409 = scmp.ne.s32.totalorder %s398, %s401
      %p410 = scmp.eq.s32.totalorder %s31, 1
      %p411 = por %p409, %p410
      %p412 = scmp.ne.s32.totalorder %s401, %s402
      %p413 = scmp.eq.s32.totalorder %s31, 0
      %p414 = por %p412, %p413
      %p415 = scmp.ne.s32.totalorder %s401, %s402
      %p416 = scmp.eq.s32.totalorder %s32, 1
      %p417 = por %p415, %p416
      %p419 = scmp.ne.s32.totalorder %s402, %s418
      %p420 = scmp.eq.s32.totalorder %s32, 0
      %p421 = por %p419, %p420
      %p422 = scmp.le.s32.totalorder 1, %s26
      %p423 = scmp.lt.s32.totalorder %s26, 3
      %p424 = pnand %p422, %p423
      %p425 = pneg %p424
      // Predicated region
      $region9: #{tpu_custom_call.1} parent=5 // pred_check
        _
      $region10: #{tpu_custom_call.1} parent=5 // pred_check_branch
        %427 = sbr.rel (%p424) target = $region12
      $region11: #{tpu_custom_call.1} parent=5 // pred_region
        %s428 = ssub.s32 %s26, 1
        // Predicated region
        $region13: #{tpu_custom_call.1} parent=11 // pred_check
          %p429 = pneg %p73
        $region14: #{tpu_custom_call.1} parent=11 // pred_check_branch
          %431 = sbr.rel (%p429) target = $region16
        $region15: #{tpu_custom_call.1} parent=11 // pred_region
          _
        $region16: #{tpu_custom_call.1} parent=11 // pred_fallthru
          _
        // Predicated region
        $region17: #{tpu_custom_call.1} parent=11 // pred_check
          %p432 = pneg %p94
        $region18: #{tpu_custom_call.1} parent=11 // pred_check_branch
          %434 = sbr.rel (%p432) target = $region20
        $region19: #{tpu_custom_call.1} parent=11 // pred_region
          _
        $region20: #{tpu_custom_call.1} parent=11 // pred_fallthru
          _
        // Predicated region
        $region21: #{tpu_custom_call.1} parent=11 // pred_check
          %p435 = pneg %p115
        $region22: #{tpu_custom_call.1} parent=11 // pred_check_branch
          %437 = sbr.rel (%p435) target = $region24
        $region23: #{tpu_custom_call.1} parent=11 // pred_region
          _
        $region24: #{tpu_custom_call.1} parent=11 // pred_fallthru
          _
        // Predicated region
        $region25: #{tpu_custom_call.1} parent=11 // pred_check
          %p438 = pneg %p136
        $region26: #{tpu_custom_call.1} parent=11 // pred_check_branch
          %440 = sbr.rel (%p438) target = $region28
        $region27: #{tpu_custom_call.1} parent=11 // pred_region
          _
        $region28: #{tpu_custom_call.1} parent=11 // pred_fallthru
          _
        // Predicated region
        $region29: #{tpu_custom_call.1} parent=11 // pred_check
          %p441 = pneg %p157
        $region30: #{tpu_custom_call.1} parent=11 // pred_check_branch
          %443 = sbr.rel (%p441) target = $region32
        $region31: #{tpu_custom_call.1} parent=11 // pred_region
          _
        $region32: #{tpu_custom_call.1} parent=11 // pred_fallthru
          _
        // Predicated region
        $region33: #{tpu_custom_call.1} parent=11 // pred_check
          %p444 = pneg %p178
        $region34: #{tpu_custom_call.1} parent=11 // pred_check_branch
          %446 = sbr.rel (%p444) target = $region36
        $region35: #{tpu_custom_call.1} parent=11 // pred_region
          _
        $region36: #{tpu_custom_call.1} parent=11 // pred_fallthru
          _
        // Predicated region
        $region37: #{tpu_custom_call.1} parent=11 // pred_check
          %p447 = pneg %p199
        $region38: #{tpu_custom_call.1} parent=11 // pred_check_branch
          %449 = sbr.rel (%p447) target = $region40
        $region39: #{tpu_custom_call.1} parent=11 // pred_region
          _
        $region40: #{tpu_custom_call.1} parent=11 // pred_fallthru
          _
        // Predicated region
        $region41: #{tpu_custom_call.1} parent=11 // pred_check
          %p450 = pneg %p220
        $region42: #{tpu_custom_call.1} parent=11 // pred_check_branch
          %452 = sbr.rel (%p450) target = $region44
        $region43: #{tpu_custom_call.1} parent=11 // pred_region
          _
        $region44: #{tpu_custom_call.1} parent=11 // pred_fallthru
          _
        // Predicated region
        $region45: #{tpu_custom_call.1} parent=11 // pred_check
          %p453 = pneg %p241
        $region46: #{tpu_custom_call.1} parent=11 // pred_check_branch
          %455 = sbr.rel (%p453) target = $region48
        $region47: #{tpu_custom_call.1} parent=11 // pred_region
          _
        $region48: #{tpu_custom_call.1} parent=11 // pred_fallthru
          _
        // Predicated region
        $region49: #{tpu_custom_call.1} parent=11 // pred_check
          %p456 = pneg %p262
        $region50: #{tpu_custom_call.1} parent=11 // pred_check_branch
          %458 = sbr.rel (%p456) target = $region52
        $region51: #{tpu_custom_call.1} parent=11 // pred_region
          _
        $region52: #{tpu_custom_call.1} parent=11 // pred_fallthru
          _
        // Predicated region
        $region53: #{tpu_custom_call.1} parent=11 // pred_check
          %p459 = pneg %p283
        $region54: #{tpu_custom_call.1} parent=11 // pred_check_branch
          %461 = sbr.rel (%p459) target = $region56
        $region55: #{tpu_custom_call.1} parent=11 // pred_region
          _
        $region56: #{tpu_custom_call.1} parent=11 // pred_fallthru
          _
        // Predicated region
        $region57: #{tpu_custom_call.1} parent=11 // pred_check
          %p462 = pneg %p304
        $region58: #{tpu_custom_call.1} parent=11 // pred_check_branch
          %464 = sbr.rel (%p462) target = $region60
        $region59: #{tpu_custom_call.1} parent=11 // pred_region
          _
        $region60: #{tpu_custom_call.1} parent=11 // pred_fallthru
          _
        // Predicated region
        $region61: #{tpu_custom_call.1} parent=11 // pred_check
          %p465 = pneg %p325
        $region62: #{tpu_custom_call.1} parent=11 // pred_check_branch
          %467 = sbr.rel (%p465) target = $region64
        $region63: #{tpu_custom_call.1} parent=11 // pred_region
          _
        $region64: #{tpu_custom_call.1} parent=11 // pred_fallthru
          _
        // Predicated region
        $region65: #{tpu_custom_call.1} parent=11 // pred_check
          %p468 = pneg %p346
        $region66: #{tpu_custom_call.1} parent=11 // pred_check_branch
          %470 = sbr.rel (%p468) target = $region68
        $region67: #{tpu_custom_call.1} parent=11 // pred_region
          _
        $region68: #{tpu_custom_call.1} parent=11 // pred_fallthru
          _
        // Predicated region
        $region69: #{tpu_custom_call.1} parent=11 // pred_check
          %p471 = pneg %p367
        $region70: #{tpu_custom_call.1} parent=11 // pred_check_branch
          %473 = sbr.rel (%p471) target = $region72
        $region71: #{tpu_custom_call.1} parent=11 // pred_region
          _
        $region72: #{tpu_custom_call.1} parent=11 // pred_fallthru
          _
        // Predicated region
        $region73: #{tpu_custom_call.1} parent=11 // pred_check
          %p474 = pneg %p388
        $region74: #{tpu_custom_call.1} parent=11 // pred_check_branch
          %476 = sbr.rel (%p474) target = $region76
        $region75: #{tpu_custom_call.1} parent=11 // pred_region
          _
        $region76: #{tpu_custom_call.1} parent=11 // pred_fallthru
          _
      $region12: #{tpu_custom_call.1} parent=5 // pred_fallthru
        _
      %p477 = scmp.lt.s32.totalorder %s26, 2
      // Predicated region
      $region77: #{tpu_custom_call.1} parent=5 // pred_check
        %p478 = pneg %p477
      $region78: #{tpu_custom_call.1} parent=5 // pred_check_branch
        %480 = sbr.rel (%p478) target = $region80
      $region79: #{tpu_custom_call.1} parent=5 // pred_region
        // Predicated region
        $region81: #{tpu_custom_call.1} parent=79 // pred_check
          %p481 = pneg %p46
        $region82: #{tpu_custom_call.1} parent=79 // pred_check_branch
          %483 = sbr.rel (%p481) target = $region84
        $region83: #{tpu_custom_call.1} parent=79 // pred_region
          %p484 = scmp.lt.s32.totalorder %s26, 1
          %s485 = scalar_select %p484, %s26, 1
          %s486 = smul.addr %s485, 8
          %s487 = scalar_lea.vmem %s0, %s486
        $region84: #{tpu_custom_call.1} parent=79 // pred_fallthru
          _
      $region80: #{tpu_custom_call.1} parent=5 // pred_fallthru
        _
      %p488 = scmp.le.s32.totalorder 1, %s26
      %p489 = scmp.lt.s32.totalorder %s26, 3
      %p490 = pnand %p488, %p489
      %p491 = pneg %p490
      // Predicated region
      $region85: #{tpu_custom_call.1} parent=5 // pred_check
        _
      $region86: #{tpu_custom_call.1} parent=5 // pred_check_branch
        %493 = sbr.rel (%p490) target = $region88
      $region87: #{tpu_custom_call.1} parent=5 // pred_region
        %s494 = ssub.s32 %s26, 1
        %p495 = scmp.lt.s32.totalorder %s31, 1
        %s496 = scalar_select %p495, %s31, 1
        %s497 = smul.addr %s496, 8
        %s498 = scalar_lea.vmem %s0, %s497
        %p499 = pneg %p52
        %p500 = pneg %p49
        %p501 = pneg %p73
        %p502 = pneg %p70
        %p503 = pneg %p94
        %p504 = pneg %p91
        %p505 = pneg %p115
        %p506 = pneg %p112
        %p507 = pneg %p136
        %p508 = pneg %p133
        %p509 = pneg %p157
        %p510 = pneg %p154
        %p511 = pneg %p178
        %p512 = pneg %p175
        %p513 = pneg %p199
        %p514 = pneg %p196
        %p515 = pneg %p220
        %p516 = pneg %p217
        %p517 = pneg %p241
        %p518 = pneg %p238
        %p519 = pneg %p262
        %p520 = pneg %p259
        %p521 = pneg %p283
        %p522 = pneg %p280
        %p523 = pneg %p304
        %p524 = pneg %p301
        %p525 = pneg %p325
        %p526 = pneg %p322
        %p527 = pneg %p346
        %p528 = pneg %p343
        %p529 = pneg %p367
        %p530 = pneg %p364
        %p531 = pneg %p388
        %p532 = pneg %p385
        %p533 = pneg %p414
        %p534 = pneg %p411
        %s535 = sand.u32 %s401, 1
        %s536 = scalar_lea.sflag [#allocation3], %s535
        %s537 = sand.u32 %s401, 1
        %s538 = smul.addr %s537, 8
        %s539 = scalar_lea.vmem [#allocation2], %s538
        %p540 = scmp.lt.s32.totalorder %s31, 1
        %s541 = scalar_select %p540, %s31, 1
        %s542 = smul.addr %s541, 8
        %s543 = scalar_lea.vmem %s0, %s542
        %v545 = vld [vmem:[%s543] sm:$0xff]
        %v546 = vpack.c.bf16 %v545, %v545
        %v547 = vld [vmem:[%s1] sm:$0xf]
        %v548 = vld [vmem:[%s1 + $0x4] sm:$0xf]
        %v549 = vld [vmem:[%s1 + $0x8] sm:$0xf]
        %v550 = vld [vmem:[%s1 + $0xc] sm:$0xf]
        %v551 = vld [vmem:[%s1 + $0x10] sm:$0xf]
        %v552 = vld [vmem:[%s1 + $0x14] sm:$0xf]
        %v553 = vld [vmem:[%s1 + $0x18] sm:$0xf]
        %v554 = vld [vmem:[%s1 + $0x1c] sm:$0xf]
        %v555 = vld [vmem:[%s1 + $0x20] sm:$0xf]
        %v556 = vld [vmem:[%s1 + $0x24] sm:$0xf]
        %v557 = vld [vmem:[%s1 + $0x28] sm:$0xf]
        %v558 = vld [vmem:[%s1 + $0x2c] sm:$0xf]
        %v559 = vld [vmem:[%s1 + $0x30] sm:$0xf]
        %v560 = vld [vmem:[%s1 + $0x34] sm:$0xf]
        %v561 = vld [vmem:[%s1 + $0x38] sm:$0xf]
        %v562 = vld [vmem:[%s1 + $0x3c] sm:$0xf]
        %v563 = vld [vmem:[%s4] sm:$0x1]
        %v565 = vlaneseq
        %v566 = vshrl.u32 %v565, 7
        %v567 = vsub.s32 0, %v566
        %v568 = vrot.slane %v563, %v567
        %v586 = vunpack.c.l.b16 %v547
        %v587 = vunpack.c.l.b16 %v548
        %v588 = vunpack.c.l.b16 %v549
        %v589 = vunpack.c.l.b16 %v550
        %v590 = vunpack.c.l.b16 %v551
        %v591 = vunpack.c.l.b16 %v552
        %v592 = vunpack.c.l.b16 %v553
        %v593 = vunpack.c.l.b16 %v554
        %v594 = vunpack.c.l.b16 %v555
        %v595 = vunpack.c.l.b16 %v556
        %v596 = vunpack.c.l.b16 %v557
        %v597 = vunpack.c.l.b16 %v558
        %v598 = vunpack.c.l.b16 %v559
        %v599 = vunpack.c.l.b16 %v560
        %v600 = vunpack.c.l.b16 %v561
        %v601 = vunpack.c.l.b16 %v562
        %v602 = vpack.c.b16 %v587, %v586
        %v603 = vpack.c.b16 %v589, %v588
        %v604 = vpack.c.b16 %v591, %v590
        %v605 = vpack.c.b16 %v593, %v592
        %v606 = vpack.c.b16 %v595, %v594
        %v607 = vpack.c.b16 %v597, %v596
        %v608 = vpack.c.b16 %v599, %v598
        %v609 = vpack.c.b16 %v601, %v600
        %618 = vmatprep.subr.bf16.mxu0 0
        %619 = vmatpush1.bf16.msra.mxu0 %v609
        %620 = vmatprep.subr.bf16.mxu0 0
        %621 = vmatpush1.bf16.msra.mxu0 %v608
        %622 = vmatprep.subr.bf16.mxu0 0
        %623 = vmatpush1.bf16.msra.mxu0 %v607
        %624 = vmatprep.subr.bf16.mxu0 0
        %625 = vmatpush1.bf16.msra.mxu0 %v606
        %626 = vmatprep.subr.bf16.mxu0 0
        %627 = vmatpush1.bf16.msra.mxu0 %v605
        %628 = vmatprep.subr.bf16.mxu0 0
        %629 = vmatpush1.bf16.msra.mxu0 %v604
        %630 = vmatprep.subr.bf16.mxu0 0
        %631 = vmatpush1.bf16.msra.mxu0 %v603
        %632 = vmatprep.subr.bf16.mxu0 0
        %633 = vmatpush1.bf16.msra.mxu0 %v602
        %634 = vmatprep.subr.bf16.mxu0 0
        %635 = vmatpush2.bf16.msra.mxu0 0
        %636 = vmatprep.subr.bf16.mxu0 0
        %637 = vmatpush2.bf16.msra.mxu0 0
        %638 = vmatprep.subr.bf16.mxu0 0
        %639 = vmatpush2.bf16.msra.mxu0 0
        %640 = vmatprep.subr.bf16.mxu0 0
        %641 = vmatpush2.bf16.msra.mxu0 0
        %642 = vmatprep.subr.bf16.mxu0 0
        %643 = vmatpush2.bf16.msra.mxu0 0
        %644 = vmatprep.subr.bf16.mxu0 0
        %645 = vmatpush2.bf16.msra.mxu0 0
        %646 = vmatprep.subr.bf16.mxu0 0
        %647 = vmatpush2.bf16.msra.mxu0 0
        %648 = vmatprep.subr.bf16.mxu0 0
        %649 = vmatpush2.bf16.msra.mxu0 0
        %650 = vmatprep.mubr.bf16.mxu0 0
        %651 = vmatmul.mubr.bf16.gmra.mxu0 %v546
        %v652 = vpop.f32.mrf.mxu0
        %v653 = vadd.f32 %v568, %v652
        %v654 = vpop.f32.mrf.mxu0
        %v655 = vpop.f32.mrf.mxu0
        %v656 = vpop.f32.mrf.mxu0
        %657 = vdwg.mxu0
        %v658 = vld [vmem:[%s2] sm:$0xf]
        %v659 = vld [vmem:[%s2 + $0x4] sm:$0xf]
        %v660 = vld [vmem:[%s2 + $0x8] sm:$0xf]
        %v661 = vld [vmem:[%s2 + $0xc] sm:$0xf]
        %v662 = vld [vmem:[%s2 + $0x10] sm:$0xf]
        %v663 = vld [vmem:[%s2 + $0x14] sm:$0xf]
        %v664 = vld [vmem:[%s2 + $0x18] sm:$0xf]
        %v665 = vld [vmem:[%s2 + $0x1c] sm:$0xf]
        %v666 = vld [vmem:[%s2 + $0x20] sm:$0xf]
        %v667 = vld [vmem:[%s2 + $0x24] sm:$0xf]
        %v668 = vld [vmem:[%s2 + $0x28] sm:$0xf]
        %v669 = vld [vmem:[%s2 + $0x2c] sm:$0xf]
        %v670 = vld [vmem:[%s2 + $0x30] sm:$0xf]
        %v671 = vld [vmem:[%s2 + $0x34] sm:$0xf]
        %v672 = vld [vmem:[%s2 + $0x38] sm:$0xf]
        %v673 = vld [vmem:[%s2 + $0x3c] sm:$0xf]
        %v674 = vld [vmem:[%s5] sm:$0x1]
        %v676 = vlaneseq
        %v677 = vshrl.u32 %v676, 7
        %v678 = vsub.s32 0, %v677
        %v679 = vrot.slane %v674, %v678
        %v697 = vunpack.c.l.b16 %v658
        %v698 = vunpack.c.l.b16 %v659
        %v699 = vunpack.c.l.b16 %v660
        %v700 = vunpack.c.l.b16 %v661
        %v701 = vunpack.c.l.b16 %v662
        %v702 = vunpack.c.l.b16 %v663
        %v703 = vunpack.c.l.b16 %v664
        %v704 = vunpack.c.l.b16 %v665
        %v705 = vunpack.c.l.b16 %v666
        %v706 = vunpack.c.l.b16 %v667
        %v707 = vunpack.c.l.b16 %v668
        %v708 = vunpack.c.l.b16 %v669
        %v709 = vunpack.c.l.b16 %v670
        %v710 = vunpack.c.l.b16 %v671
        %v711 = vunpack.c.l.b16 %v672
        %v712 = vunpack.c.l.b16 %v673
        %v713 = vpack.c.b16 %v698, %v697
        %v714 = vpack.c.b16 %v700, %v699
        %v715 = vpack.c.b16 %v702, %v701
        %v716 = vpack.c.b16 %v704, %v703
        %v717 = vpack.c.b16 %v706, %v705
        %v718 = vpack.c.b16 %v708, %v707
        %v719 = vpack.c.b16 %v710, %v709
        %v720 = vpack.c.b16 %v712, %v711
        %729 = vmatprep.subr.bf16.mxu0 0
        %730 = vmatpush1.bf16.msra.mxu0 %v720
        %731 = vmatprep.subr.bf16.mxu0 0
        %732 = vmatpush1.bf16.msra.mxu0 %v719
        %733 = vmatprep.subr.bf16.mxu0 0
        %734 = vmatpush1.bf16.msra.mxu0 %v718
        %735 = vmatprep.subr.bf16.mxu0 0
        %736 = vmatpush1.bf16.msra.mxu0 %v717
        %737 = vmatprep.subr.bf16.mxu0 0
        %738 = vmatpush1.bf16.msra.mxu0 %v716
        %739 = vmatprep.subr.bf16.mxu0 0
        %740 = vmatpush1.bf16.msra.mxu0 %v715
        %741 = vmatprep.subr.bf16.mxu0 0
        %742 = vmatpush1.bf16.msra.mxu0 %v714
        %743 = vmatprep.subr.bf16.mxu0 0
        %744 = vmatpush1.bf16.msra.mxu0 %v713
        %745 = vmatprep.subr.bf16.mxu0 0
        %746 = vmatpush2.bf16.msra.mxu0 0
        %747 = vmatprep.subr.bf16.mxu0 0
        %748 = vmatpush2.bf16.msra.mxu0 0
        %749 = vmatprep.subr.bf16.mxu0 0
        %750 = vmatpush2.bf16.msra.mxu0 0
        %751 = vmatprep.subr.bf16.mxu0 0
        %752 = vmatpush2.bf16.msra.mxu0 0
        %753 = vmatprep.subr.bf16.mxu0 0
        %754 = vmatpush2.bf16.msra.mxu0 0
        %755 = vmatprep.subr.bf16.mxu0 0
        %756 = vmatpush2.bf16.msra.mxu0 0
        %757 = vmatprep.subr.bf16.mxu0 0
        %758 = vmatpush2.bf16.msra.mxu0 0
        %759 = vmatprep.subr.bf16.mxu0 0
        %760 = vmatpush2.bf16.msra.mxu0 0
        %761 = vmatprep.mubr.bf16.mxu0 0
        %762 = vmatmul.mubr.bf16.gmra.mxu0 %v546
        %v763 = vpop.f32.mrf.mxu0
        %v764 = vadd.f32 %v679, %v763
        %v765 = vpop.f32.mrf.mxu0
        %v766 = vpop.f32.mrf.mxu0
        %v767 = vpop.f32.mrf.mxu0
        %768 = vdwg.mxu0
        %v769 = vld [vmem:[%s3] sm:$0xf]
        %v770 = vld [vmem:[%s3 + $0x4] sm:$0xf]
        %v771 = vld [vmem:[%s3 + $0x8] sm:$0xf]
        %v772 = vld [vmem:[%s3 + $0xc] sm:$0xf]
        %v773 = vld [vmem:[%s3 + $0x10] sm:$0xf]
        %v774 = vld [vmem:[%s3 + $0x14] sm:$0xf]
        %v775 = vld [vmem:[%s3 + $0x18] sm:$0xf]
        %v776 = vld [vmem:[%s3 + $0x1c] sm:$0xf]
        %v777 = vld [vmem:[%s3 + $0x20] sm:$0xf]
        %v778 = vld [vmem:[%s3 + $0x24] sm:$0xf]
        %v779 = vld [vmem:[%s3 + $0x28] sm:$0xf]
        %v780 = vld [vmem:[%s3 + $0x2c] sm:$0xf]
        %v781 = vld [vmem:[%s3 + $0x30] sm:$0xf]
        %v782 = vld [vmem:[%s3 + $0x34] sm:$0xf]
        %v783 = vld [vmem:[%s3 + $0x38] sm:$0xf]
        %v784 = vld [vmem:[%s3 + $0x3c] sm:$0xf]
        %v785 = vld [vmem:[%s6] sm:$0x1]
        %v787 = vlaneseq
        %v788 = vshrl.u32 %v787, 7
        %v789 = vsub.s32 0, %v788
        %v790 = vrot.slane %v785, %v789
        %v808 = vunpack.c.l.b16 %v769
        %v809 = vunpack.c.l.b16 %v770
        %v810 = vunpack.c.l.b16 %v771
        %v811 = vunpack.c.l.b16 %v772
        %v812 = vunpack.c.l.b16 %v773
        %v813 = vunpack.c.l.b16 %v774
        %v814 = vunpack.c.l.b16 %v775
        %v815 = vunpack.c.l.b16 %v776
        %v816 = vunpack.c.l.b16 %v777
        %v817 = vunpack.c.l.b16 %v778
        %v818 = vunpack.c.l.b16 %v779
        %v819 = vunpack.c.l.b16 %v780
        %v820 = vunpack.c.l.b16 %v781
        %v821 = vunpack.c.l.b16 %v782
        %v822 = vunpack.c.l.b16 %v783
        %v823 = vunpack.c.l.b16 %v784
        %v824 = vpack.c.b16 %v809, %v808
        %v825 = vpack.c.b16 %v811, %v810
        %v826 = vpack.c.b16 %v813, %v812
        %v827 = vpack.c.b16 %v815, %v814
        %v828 = vpack.c.b16 %v817, %v816
        %v829 = vpack.c.b16 %v819, %v818
        %v830 = vpack.c.b16 %v821, %v820
        %v831 = vpack.c.b16 %v823, %v822
        %840 = vmatprep.subr.bf16.mxu0 0
        %841 = vmatpush1.bf16.msra.mxu0 %v831
        %842 = vmatprep.subr.bf16.mxu0 0
        %843 = vmatpush1.bf16.msra.mxu0 %v830
        %844 = vmatprep.subr.bf16.mxu0 0
        %845 = vmatpush1.bf16.msra.mxu0 %v829
        %846 = vmatprep.subr.bf16.mxu0 0
        %847 = vmatpush1.bf16.msra.mxu0 %v828
        %848 = vmatprep.subr.bf16.mxu0 0
        %849 = vmatpush1.bf16.msra.mxu0 %v827
        %850 = vmatprep.subr.bf16.mxu0 0
        %851 = vmatpush1.bf16.msra.mxu0 %v826
        %852 = vmatprep.subr.bf16.mxu0 0
        %853 = vmatpush1.bf16.msra.mxu0 %v825
        %854 = vmatprep.subr.bf16.mxu0 0
        %855 = vmatpush1.bf16.msra.mxu0 %v824
        %856 = vmatprep.subr.bf16.mxu0 0
        %857 = vmatpush2.bf16.msra.mxu0 0
        %858 = vmatprep.subr.bf16.mxu0 0
        %859 = vmatpush2.bf16.msra.mxu0 0
        %860 = vmatprep.subr.bf16.mxu0 0
        %861 = vmatpush2.bf16.msra.mxu0 0
        %862 = vmatprep.subr.bf16.mxu0 0
        %863 = vmatpush2.bf16.msra.mxu0 0
        %864 = vmatprep.subr.bf16.mxu0 0
        %865 = vmatpush2.bf16.msra.mxu0 0
        %866 = vmatprep.subr.bf16.mxu0 0
        %867 = vmatpush2.bf16.msra.mxu0 0
        %868 = vmatprep.subr.bf16.mxu0 0
        %869 = vmatpush2.bf16.msra.mxu0 0
        %870 = vmatprep.subr.bf16.mxu0 0
        %871 = vmatpush2.bf16.msra.mxu0 0
        %872 = vmatprep.mubr.bf16.mxu0 0
        %873 = vmatmul.mubr.bf16.gmra.mxu0 %v546
        %v874 = vpop.f32.mrf.mxu0
        %v875 = vadd.f32 %v790, %v874
        %v876 = vpop.f32.mrf.mxu0
        %v877 = vpop.f32.mrf.mxu0
        %v878 = vpop.f32.mrf.mxu0
        %879 = vdwg.mxu0
        %v880 = vpack.c.bf16 %v653, %v653
        %v881 = vpack.c.bf16 %v764, %v764
        %vm882 = vcmask 261120
        %v884 = vsel %vm882, %v880, 0
        %v887 = vsel %vm882, %v881, 0
        %889 = vmatprep.subr.bf16.mxu0 0
        %890 = vmatpush1.bf16.xpose.msra.mxu0 0
        %891 = vmatprep.subr.bf16.mxu0 0
        %892 = vmatpush1.bf16.xpose.msra.mxu0 0
        %893 = vmatprep.subr.bf16.mxu0 0
        %894 = vmatpush1.bf16.xpose.msra.mxu0 0
        %895 = vmatprep.subr.bf16.mxu0 0
        %896 = vmatpush1.bf16.xpose.msra.mxu0 0
        %897 = vmatprep.subr.bf16.mxu0 0
        %898 = vmatpush1.bf16.xpose.msra.mxu0 0
        %899 = vmatprep.subr.bf16.mxu0 0
        %900 = vmatpush1.bf16.xpose.msra.mxu0 0
        %901 = vmatprep.subr.bf16.mxu0 0
        %902 = vmatpush1.bf16.xpose.msra.mxu0 0
        %903 = vmatprep.subr.bf16.mxu0 0
        %904 = vmatpush1.bf16.xpose.msra.mxu0 %v887
        %905 = vmatprep.subr.bf16.mxu0 0
        %906 = vmatpush2.bf16.xpose.msra.mxu0 0
        %907 = vmatprep.subr.bf16.mxu0 0
        %908 = vmatpush2.bf16.xpose.msra.mxu0 0
        %909 = vmatprep.subr.bf16.mxu0 0
        %910 = vmatpush2.bf16.xpose.msra.mxu0 0
        %911 = vmatprep.subr.bf16.mxu0 0
        %912 = vmatpush2.bf16.xpose.msra.mxu0 0
        %913 = vmatprep.subr.bf16.mxu0 0
        %914 = vmatpush2.bf16.xpose.msra.mxu0 0
        %915 = vmatprep.subr.bf16.mxu0 0
        %916 = vmatpush2.bf16.xpose.msra.mxu0 0
        %917 = vmatprep.subr.bf16.mxu0 0
        %918 = vmatpush2.bf16.xpose.msra.mxu0 0
        %919 = vmatprep.subr.bf16.mxu0 0
        %920 = vmatpush2.bf16.xpose.msra.mxu0 0
        %921 = vmatprep.mubr.bf16.mxu0 0
        %922 = vmatmul.mubr.bf16.gmra.mxu0 %v884
        %v923 = vpop.f32.mrf.mxu0
        %v924 = vadd.f32 0.0, %v923
        %v925 = vpop.f32.mrf.mxu0
        %v926 = vpop.f32.mrf.mxu0
        %v927 = vpop.f32.mrf.mxu0
        %928 = vdwg.mxu0
        %vm929 = vcmask 64512
        %v930 = vsel %vm929, %v924, -inf
        %931 = vmax.xlane.f32.xlu0 %v930
        %v932 = vpop.xlane.xlu0 %931
        %v933 = vsub.f32 %v924, %v932
        %v934 = vmul.f32 %v933, 1.442695
        %v935 = vpow.pop %v934
        %v936 = vsel %vm929, %v935, 0.0
        %937 = vadd.xlane.f32.xlu0 %v936
        %v938 = vpop.xlane.xlu0 %937
        %v939 = vrcp.pop %v938
        %v940 = vmul.f32 %v935, %v939
        %v941 = vpack.c.bf16 %v940, %v940
        %v942 = vpack.c.bf16 %v875, %v875
        %v944 = vsel %vm929, %v941, 0
        %vm946 = vcmask 1043456
        %v948 = vsel %vm946, %v942, 0
        %950 = vmatprep.subr.bf16.mxu0 0
        %951 = vmatpush1.bf16.msra.mxu0 0
        %952 = vmatprep.subr.bf16.mxu0 0
        %953 = vmatpush1.bf16.msra.mxu0 0
        %954 = vmatprep.subr.bf16.mxu0 0
        %955 = vmatpush1.bf16.msra.mxu0 0
        %956 = vmatprep.subr.bf16.mxu0 0
        %957 = vmatpush1.bf16.msra.mxu0 0
        %958 = vmatprep.subr.bf16.mxu0 0
        %959 = vmatpush1.bf16.msra.mxu0 0
        %960 = vmatprep.subr.bf16.mxu0 0
        %961 = vmatpush1.bf16.msra.mxu0 0
        %962 = vmatprep.subr.bf16.mxu0 0
        %963 = vmatpush1.bf16.msra.mxu0 0
        %964 = vmatprep.subr.bf16.mxu0 0
        %965 = vmatpush1.bf16.msra.mxu0 %v948
        %966 = vmatprep.subr.bf16.mxu0 0
        %967 = vmatpush2.bf16.msra.mxu0 0
        %968 = vmatprep.subr.bf16.mxu0 0
        %969 = vmatpush2.bf16.msra.mxu0 0
        %970 = vmatprep.subr.bf16.mxu0 0
        %971 = vmatpush2.bf16.msra.mxu0 0
        %972 = vmatprep.subr.bf16.mxu0 0
        %973 = vmatpush2.bf16.msra.mxu0 0
        %974 = vmatprep.subr.bf16.mxu0 0
        %975 = vmatpush2.bf16.msra.mxu0 0
        %976 = vmatprep.subr.bf16.mxu0 0
        %977 = vmatpush2.bf16.msra.mxu0 0
        %978 = vmatprep.subr.bf16.mxu0 0
        %979 = vmatpush2.bf16.msra.mxu0 0
        %980 = vmatprep.subr.bf16.mxu0 0
        %981 = vmatpush2.bf16.msra.mxu0 0
        %982 = vmatprep.mubr.bf16.mxu0 0
        %983 = vmatmul.mubr.bf16.gmra.mxu0 %v944
        %v984 = vpop.f32.mrf.mxu0
        %v985 = vadd.f32 0.0, %v984
        %v986 = vpop.f32.mrf.mxu0
        %v987 = vpop.f32.mrf.mxu0
        %v988 = vpop.f32.mrf.mxu0
        %989 = vdwg.mxu0
        %v990 = vpack.c.bf16 %v985, %v985
        %v991 = vld [vmem:[%s7] sm:$0xf]
        %v992 = vld [vmem:[%s7 + $0x4] sm:$0xf]
        %v993 = vld [vmem:[%s7 + $0x8] sm:$0xf]
        %v994 = vld [vmem:[%s7 + $0xc] sm:$0xf]
        %s995 = scalar_lea.vmem %s1, 64
        %v996 = vld [vmem:[%s995] sm:$0xf]
        %v997 = vld [vmem:[%s995 + $0x4] sm:$0xf]
        %v998 = vld [vmem:[%s995 + $0x8] sm:$0xf]
        %v999 = vld [vmem:[%s995 + $0xc] sm:$0xf]
        %v1000 = vld [vmem:[%s995 + $0x10] sm:$0xf]
        %v1001 = vld [vmem:[%s995 + $0x14] sm:$0xf]
        %v1002 = vld [vmem:[%s995 + $0x18] sm:$0xf]
        %v1003 = vld [vmem:[%s995 + $0x1c] sm:$0xf]
        %v1004 = vld [vmem:[%s995 + $0x20] sm:$0xf]
        %v1005 = vld [vmem:[%s995 + $0x24] sm:$0xf]
        %v1006 = vld [vmem:[%s995 + $0x28] sm:$0xf]
        %v1007 = vld [vmem:[%s995 + $0x2c] sm:$0xf]
        %v1008 = vld [vmem:[%s995 + $0x30] sm:$0xf]
        %v1009 = vld [vmem:[%s995 + $0x34] sm:$0xf]
        %v1010 = vld [vmem:[%s995 + $0x38] sm:$0xf]
        %v1011 = vld [vmem:[%s995 + $0x3c] sm:$0xf]
        %s1012 = scalar_lea.vmem %s4, 1
        %v1013 = vld [vmem:[%s1012] sm:$0x1]
        %v1015 = vlaneseq
        %v1016 = vshrl.u32 %v1015, 7
        %v1017 = vsub.s32 0, %v1016
        %v1018 = vrot.slane %v1013, %v1017
        %v1036 = vunpack.c.l.b16 %v996
        %v1037 = vunpack.c.l.b16 %v997
        %v1038 = vunpack.c.l.b16 %v998
        %v1039 = vunpack.c.l.b16 %v999
        %v1040 = vunpack.c.l.b16 %v1000
        %v1041 = vunpack.c.l.b16 %v1001
        %v1042 = vunpack.c.l.b16 %v1002
        %v1043 = vunpack.c.l.b16 %v1003
        %v1044 = vunpack.c.l.b16 %v1004
        %v1045 = vunpack.c.l.b16 %v1005
        %v1046 = vunpack.c.l.b16 %v1006
        %v1047 = vunpack.c.l.b16 %v1007
        %v1048 = vunpack.c.l.b16 %v1008
        %v1049 = vunpack.c.l.b16 %v1009
        %v1050 = vunpack.c.l.b16 %v1010
        %v1051 = vunpack.c.l.b16 %v1011
        %v1052 = vpack.c.b16 %v1037, %v1036
        %v1053 = vpack.c.b16 %v1039, %v1038
        %v1054 = vpack.c.b16 %v1041, %v1040
        %v1055 = vpack.c.b16 %v1043, %v1042
        %v1056 = vpack.c.b16 %v1045, %v1044
        %v1057 = vpack.c.b16 %v1047, %v1046
        %v1058 = vpack.c.b16 %v1049, %v1048
        %v1059 = vpack.c.b16 %v1051, %v1050
        %1068 = vmatprep.subr.bf16.mxu0 0
        %1069 = vmatpush1.bf16.msra.mxu0 %v1059
        %1070 = vmatprep.subr.bf16.mxu0 0
        %1071 = vmatpush1.bf16.msra.mxu0 %v1058
        %1072 = vmatprep.subr.bf16.mxu0 0
        %1073 = vmatpush1.bf16.msra.mxu0 %v1057
        %1074 = vmatprep.subr.bf16.mxu0 0
        %1075 = vmatpush1.bf16.msra.mxu0 %v1056
        %1076 = vmatprep.subr.bf16.mxu0 0
        %1077 = vmatpush1.bf16.msra.mxu0 %v1055
        %1078 = vmatprep.subr.bf16.mxu0 0
        %1079 = vmatpush1.bf16.msra.mxu0 %v1054
        %1080 = vmatprep.subr.bf16.mxu0 0
        %1081 = vmatpush1.bf16.msra.mxu0 %v1053
        %1082 = vmatprep.subr.bf16.mxu0 0
        %1083 = vmatpush1.bf16.msra.mxu0 %v1052
        %1084 = vmatprep.subr.bf16.mxu0 0
        %1085 = vmatpush2.bf16.msra.mxu0 0
        %1086 = vmatprep.subr.bf16.mxu0 0
        %1087 = vmatpush2.bf16.msra.mxu0 0
        %1088 = vmatprep.subr.bf16.mxu0 0
        %1089 = vmatpush2.bf16.msra.mxu0 0
        %1090 = vmatprep.subr.bf16.mxu0 0
        %1091 = vmatpush2.bf16.msra.mxu0 0
        %1092 = vmatprep.subr.bf16.mxu0 0
        %1093 = vmatpush2.bf16.msra.mxu0 0
        %1094 = vmatprep.subr.bf16.mxu0 0
        %1095 = vmatpush2.bf16.msra.mxu0 0
        %1096 = vmatprep.subr.bf16.mxu0 0
        %1097 = vmatpush2.bf16.msra.mxu0 0
        %1098 = vmatprep.subr.bf16.mxu0 0
        %1099 = vmatpush2.bf16.msra.mxu0 0
        %1100 = vmatprep.mubr.bf16.mxu0 0
        %1101 = vmatmul.mubr.bf16.gmra.mxu0 %v546
        %v1102 = vpop.f32.mrf.mxu0
        %v1103 = vadd.f32 %v1018, %v1102
        %v1104 = vpop.f32.mrf.mxu0
        %v1105 = vpop.f32.mrf.mxu0
        %v1106 = vpop.f32.mrf.mxu0
        %1107 = vdwg.mxu0
        %s1108 = scalar_lea.vmem %s2, 64
        %v1109 = vld [vmem:[%s1108] sm:$0xf]
        %v1110 = vld [vmem:[%s1108 + $0x4] sm:$0xf]
        %v1111 = vld [vmem:[%s1108 + $0x8] sm:$0xf]
        %v1112 = vld [vmem:[%s1108 + $0xc] sm:$0xf]
        %v1113 = vld [vmem:[%s1108 + $0x10] sm:$0xf]
        %v1114 = vld [vmem:[%s1108 + $0x14] sm:$0xf]
        %v1115 = vld [vmem:[%s1108 + $0x18] sm:$0xf]
        %v1116 = vld [vmem:[%s1108 + $0x1c] sm:$0xf]
        %v1117 = vld [vmem:[%s1108 + $0x20] sm:$0xf]
        %v1118 = vld [vmem:[%s1108 + $0x24] sm:$0xf]
        %v1119 = vld [vmem:[%s1108 + $0x28] sm:$0xf]
        %v1120 = vld [vmem:[%s1108 + $0x2c] sm:$0xf]
        %v1121 = vld [vmem:[%s1108 + $0x30] sm:$0xf]
        %v1122 = vld [vmem:[%s1108 + $0x34] sm:$0xf]
        %v1123 = vld [vmem:[%s1108 + $0x38] sm:$0xf]
        %v1124 = vld [vmem:[%s1108 + $0x3c] sm:$0xf]
        %s1125 = scalar_lea.vmem %s5, 1
        %v1126 = vld [vmem:[%s1125] sm:$0x1]
        %v1128 = vlaneseq
        %v1129 = vshrl.u32 %v1128, 7
        %v1130 = vsub.s32 0, %v1129
        %v1131 = vrot.slane %v1126, %v1130
        %v1149 = vunpack.c.l.b16 %v1109
        %v1150 = vunpack.c.l.b16 %v1110
        %v1151 = vunpack.c.l.b16 %v1111
        %v1152 = vunpack.c.l.b16 %v1112
        %v1153 = vunpack.c.l.b16 %v1113
        %v1154 = vunpack.c.l.b16 %v1114
        %v1155 = vunpack.c.l.b16 %v1115
        %v1156 = vunpack.c.l.b16 %v1116
        %v1157 = vunpack.c.l.b16 %v1117
        %v1158 = vunpack.c.l.b16 %v1118
        %v1159 = vunpack.c.l.b16 %v1119
        %v1160 = vunpack.c.l.b16 %v1120
        %v1161 = vunpack.c.l.b16 %v1121
        %v1162 = vunpack.c.l.b16 %v1122
        %v1163 = vunpack.c.l.b16 %v1123
        %v1164 = vunpack.c.l.b16 %v1124
        %v1165 = vpack.c.b16 %v1150, %v1149
        %v1166 = vpack.c.b16 %v1152, %v1151
        %v1167 = vpack.c.b16 %v1154, %v1153
        %v1168 = vpack.c.b16 %v1156, %v1155
        %v1169 = vpack.c.b16 %v1158, %v1157
        %v1170 = vpack.c.b16 %v1160, %v1159
        %v1171 = vpack.c.b16 %v1162, %v1161
        %v1172 = vpack.c.b16 %v1164, %v1163
        %1181 = vmatprep.subr.bf16.mxu0 0
        %1182 = vmatpush1.bf16.msra.mxu0 %v1172
        %1183 = vmatprep.subr.bf16.mxu0 0
        %1184 = vmatpush1.bf16.msra.mxu0 %v1171
        %1185 = vmatprep.subr.bf16.mxu0 0
        %1186 = vmatpush1.bf16.msra.mxu0 %v1170
        %1187 = vmatprep.subr.bf16.mxu0 0
        %1188 = vmatpush1.bf16.msra.mxu0 %v1169
        %1189 = vmatprep.subr.bf16.mxu0 0
        %1190 = vmatpush1.bf16.msra.mxu0 %v1168
        %1191 = vmatprep.subr.bf16.mxu0 0
        %1192 = vmatpush1.bf16.msra.mxu0 %v1167
        %1193 = vmatprep.subr.bf16.mxu0 0
        %1194 = vmatpush1.bf16.msra.mxu0 %v1166
        %1195 = vmatprep.subr.bf16.mxu0 0
        %1196 = vmatpush1.bf16.msra.mxu0 %v1165
        %1197 = vmatprep.subr.bf16.mxu0 0
        %1198 = vmatpush2.bf16.msra.mxu0 0
        %1199 = vmatprep.subr.bf16.mxu0 0
        %1200 = vmatpush2.bf16.msra.mxu0 0
        %1201 = vmatprep.subr.bf16.mxu0 0
        %1202 = vmatpush2.bf16.msra.mxu0 0
        %1203 = vmatprep.subr.bf16.mxu0 0
        %1204 = vmatpush2.bf16.msra.mxu0 0
        %1205 = vmatprep.subr.bf16.mxu0 0
        %1206 = vmatpush2.bf16.msra.mxu0 0
        %1207 = vmatprep.subr.bf16.mxu0 0
        %1208 = vmatpush2.bf16.msra.mxu0 0
        %1209 = vmatprep.subr.bf16.mxu0 0
        %1210 = vmatpush2.bf16.msra.mxu0 0
        %1211 = vmatprep.subr.bf16.mxu0 0
        %1212 = vmatpush2.bf16.msra.mxu0 0
        %1213 = vmatprep.mubr.bf16.mxu0 0
        %1214 = vmatmul.mubr.bf16.gmra.mxu0 %v546
        %v1215 = vpop.f32.mrf.mxu0
        %v1216 = vadd.f32 %v1131, %v1215
        %v1217 = vpop.f32.mrf.mxu0
        %v1218 = vpop.f32.mrf.mxu0
        %v1219 = vpop.f32.mrf.mxu0
        %1220 = vdwg.mxu0
        %s1221 = scalar_lea.vmem %s3, 64
        %v1222 = vld [vmem:[%s1221] sm:$0xf]
        %v1223 = vld [vmem:[%s1221 + $0x4] sm:$0xf]
        %v1224 = vld [vmem:[%s1221 + $0x8] sm:$0xf]
        %v1225 = vld [vmem:[%s1221 + $0xc] sm:$0xf]
        %v1226 = vld [vmem:[%s1221 + $0x10] sm:$0xf]
        %v1227 = vld [vmem:[%s1221 + $0x14] sm:$0xf]
        %v1228 = vld [vmem:[%s1221 + $0x18] sm:$0xf]
        %v1229 = vld [vmem:[%s1221 + $0x1c] sm:$0xf]
        %v1230 = vld [vmem:[%s1221 + $0x20] sm:$0xf]
        %v1231 = vld [vmem:[%s1221 + $0x24] sm:$0xf]
        %v1232 = vld [vmem:[%s1221 + $0x28] sm:$0xf]
        %v1233 = vld [vmem:[%s1221 + $0x2c] sm:$0xf]
        %v1234 = vld [vmem:[%s1221 + $0x30] sm:$0xf]
        %v1235 = vld [vmem:[%s1221 + $0x34] sm:$0xf]
        %v1236 = vld [vmem:[%s1221 + $0x38] sm:$0xf]
        %v1237 = vld [vmem:[%s1221 + $0x3c] sm:$0xf]
        %s1238 = scalar_lea.vmem %s6, 1
        %v1239 = vld [vmem:[%s1238] sm:$0x1]
        %v1241 = vlaneseq
        %v1242 = vshrl.u32 %v1241, 7
        %v1243 = vsub.s32 0, %v1242
        %v1244 = vrot.slane %v1239, %v1243
        %v1262 = vunpack.c.l.b16 %v1222
        %v1263 = vunpack.c.l.b16 %v1223
        %v1264 = vunpack.c.l.b16 %v1224
        %v1265 = vunpack.c.l.b16 %v1225
        %v1266 = vunpack.c.l.b16 %v1226
        %v1267 = vunpack.c.l.b16 %v1227
        %v1268 = vunpack.c.l.b16 %v1228
        %v1269 = vunpack.c.l.b16 %v1229
        %v1270 = vunpack.c.l.b16 %v1230
        %v1271 = vunpack.c.l.b16 %v1231
        %v1272 = vunpack.c.l.b16 %v1232
        %v1273 = vunpack.c.l.b16 %v1233
        %v1274 = vunpack.c.l.b16 %v1234
        %v1275 = vunpack.c.l.b16 %v1235
        %v1276 = vunpack.c.l.b16 %v1236
        %v1277 = vunpack.c.l.b16 %v1237
        %v1278 = vpack.c.b16 %v1263, %v1262
        %v1279 = vpack.c.b16 %v1265, %v1264
        %v1280 = vpack.c.b16 %v1267, %v1266
        %v1281 = vpack.c.b16 %v1269, %v1268
        %v1282 = vpack.c.b16 %v1271, %v1270
        %v1283 = vpack.c.b16 %v1273, %v1272
        %v1284 = vpack.c.b16 %v1275, %v1274
        %v1285 = vpack.c.b16 %v1277, %v1276
        %1294 = vmatprep.subr.bf16.mxu0 0
        %1295 = vmatpush1.bf16.msra.mxu0 %v1285
        %1296 = vmatprep.subr.bf16.mxu0 0
        %1297 = vmatpush1.bf16.msra.mxu0 %v1284
        %1298 = vmatprep.subr.bf16.mxu0 0
        %1299 = vmatpush1.bf16.msra.mxu0 %v1283
        %1300 = vmatprep.subr.bf16.mxu0 0
        %1301 = vmatpush1.bf16.msra.mxu0 %v1282
        %1302 = vmatprep.subr.bf16.mxu0 0
        %1303 = vmatpush1.bf16.msra.mxu0 %v1281
        %1304 = vmatprep.subr.bf16.mxu0 0
        %1305 = vmatpush1.bf16.msra.mxu0 %v1280
        %1306 = vmatprep.subr.bf16.mxu0 0
        %1307 = vmatpush1.bf16.msra.mxu0 %v1279
        %1308 = vmatprep.subr.bf16.mxu0 0
        %1309 = vmatpush1.bf16.msra.mxu0 %v1278
        %1310 = vmatprep.subr.bf16.mxu0 0
        %1311 = vmatpush2.bf16.msra.mxu0 0
        %1312 = vmatprep.subr.bf16.mxu0 0
        %1313 = vmatpush2.bf16.msra.mxu0 0
        %1314 = vmatprep.subr.bf16.mxu0 0
        %1315 = vmatpush2.bf16.msra.mxu0 0
        %1316 = vmatprep.subr.bf16.mxu0 0
        %1317 = vmatpush2.bf16.msra.mxu0 0
        %1318 = vmatprep.subr.bf16.mxu0 0
        %1319 = vmatpush2.bf16.msra.mxu0 0
        %1320 = vmatprep.subr.bf16.mxu0 0
        %1321 = vmatpush2.bf16.msra.mxu0 0
        %1322 = vmatprep.subr.bf16.mxu0 0
        %1323 = vmatpush2.bf16.msra.mxu0 0
        %1324 = vmatprep.subr.bf16.mxu0 0
        %1325 = vmatpush2.bf16.msra.mxu0 0
        %1326 = vmatprep.mubr.bf16.mxu0 0
        %1327 = vmatmul.mubr.bf16.gmra.mxu0 %v546
        %v1328 = vpop.f32.mrf.mxu0
        %v1329 = vadd.f32 %v1244, %v1328
        %v1330 = vpop.f32.mrf.mxu0
        %v1331 = vpop.f32.mrf.mxu0
        %v1332 = vpop.f32.mrf.mxu0
        %1333 = vdwg.mxu0
        %v1334 = vpack.c.bf16 %v1103, %v1103
        %v1335 = vpack.c.bf16 %v1216, %v1216
        %v1337 = vsel %vm882, %v1334, 0
        %v1340 = vsel %vm882, %v1335, 0
        %1342 = vmatprep.subr.bf16.mxu0 0
        %1343 = vmatpush1.bf16.xpose.msra.mxu0 0
        %1344 = vmatprep.subr.bf16.mxu0 0
        %1345 = vmatpush1.bf16.xpose.msra.mxu0 0
        %1346 = vmatprep.subr.bf16.mxu0 0
        %1347 = vmatpush1.bf16.xpose.msra.mxu0 0
        %1348 = vmatprep.subr.bf16.mxu0 0
        %1349 = vmatpush1.bf16.xpose.msra.mxu0 0
        %1350 = vmatprep.subr.bf16.mxu0 0
        %1351 = vmatpush1.bf16.xpose.msra.mxu0 0
        %1352 = vmatprep.subr.bf16.mxu0 0
        %1353 = vmatpush1.bf16.xpose.msra.mxu0 0
        %1354 = vmatprep.subr.bf16.mxu0 0
        %1355 = vmatpush1.bf16.xpose.msra.mxu0 0
        %1356 = vmatprep.subr.bf16.mxu0 0
        %1357 = vmatpush1.bf16.xpose.msra.mxu0 %v1340
        %1358 = vmatprep.subr.bf16.mxu0 0
        %1359 = vmatpush2.bf16.xpose.msra.mxu0 0
        %1360 = vmatprep.subr.bf16.mxu0 0
        %1361 = vmatpush2.bf16.xpose.msra.mxu0 0
        %1362 = vmatprep.subr.bf16.mxu0 0
        %1363 = vmatpush2.bf16.xpose.msra.mxu0 0
        %1364 = vmatprep.subr.bf16.mxu0 0
        %1365 = vmatpush2.bf16.xpose.msra.mxu0 0
        %1366 = vmatprep.subr.bf16.mxu0 0
        %1367 = vmatpush2.bf16.xpose.msra.mxu0 0
        %1368 = vmatprep.subr.bf16.mxu0 0
        %1369 = vmatpush2.bf16.xpose.msra.mxu0 0
        %1370 = vmatprep.subr.bf16.mxu0 0
        %1371 = vmatpush2.bf16.xpose.msra.mxu0 0
        %1372 = vmatprep.subr.bf16.mxu0 0
        %1373 = vmatpush2.bf16.xpose.msra.mxu0 0
        %1374 = vmatprep.mubr.bf16.mxu0 0
        %1375 = vmatmul.mubr.bf16.gmra.mxu0 %v1337
        %v1376 = vpop.f32.mrf.mxu0
        %v1377 = vadd.f32 0.0, %v1376
        %v1378 = vpop.f32.mrf.mxu0
        %v1379 = vpop.f32.mrf.mxu0
        %v1380 = vpop.f32.mrf.mxu0
        %1381 = vdwg.mxu0
        %v1382 = vsel %vm929, %v1377, -inf
        %1383 = vmax.xlane.f32.xlu0 %v1382
        %v1384 = vpop.xlane.xlu0 %1383
        %v1385 = vsub.f32 %v1377, %v1384
        %v1386 = vmul.f32 %v1385, 1.442695
        %v1387 = vpow.pop %v1386
        %v1388 = vsel %vm929, %v1387, 0.0
        %1389 = vadd.xlane.f32.xlu0 %v1388
        %v1390 = vpop.xlane.xlu0 %1389
        %v1391 = vrcp.pop %v1390
        %v1392 = vmul.f32 %v1387, %v1391
        %v1393 = vpack.c.bf16 %v1392, %v1392
        %v1394 = vpack.c.bf16 %v1329, %v1329
        %v1396 = vsel %vm929, %v1393, 0
        %v1399 = vsel %vm946, %v1394, 0
        %1401 = vmatprep.subr.bf16.mxu0 0
        %1402 = vmatpush1.bf16.msra.mxu0 0
        %1403 = vmatprep.subr.bf16.mxu0 0
        %1404 = vmatpush1.bf16.msra.mxu0 0
        %1405 = vmatprep.subr.bf16.mxu0 0
        %1406 = vmatpush1.bf16.msra.mxu0 0
        %1407 = vmatprep.subr.bf16.mxu0 0
        %1408 = vmatpush1.bf16.msra.mxu0 0
        %1409 = vmatprep.subr.bf16.mxu0 0
        %1410 = vmatpush1.bf16.msra.mxu0 0
        %1411 = vmatprep.subr.bf16.mxu0 0
        %1412 = vmatpush1.bf16.msra.mxu0 0
        %1413 = vmatprep.subr.bf16.mxu0 0
        %1414 = vmatpush1.bf16.msra.mxu0 0
        %1415 = vmatprep.subr.bf16.mxu0 0
        %1416 = vmatpush1.bf16.msra.mxu0 %v1399
        %1417 = vmatprep.subr.bf16.mxu0 0
        %1418 = vmatpush2.bf16.msra.mxu0 0
        %1419 = vmatprep.subr.bf16.mxu0 0
        %1420 = vmatpush2.bf16.msra.mxu0 0
        %1421 = vmatprep.subr.bf16.mxu0 0
        %1422 = vmatpush2.bf16.msra.mxu0 0
        %1423 = vmatprep.subr.bf16.mxu0 0
        %1424 = vmatpush2.bf16.msra.mxu0 0
        %1425 = vmatprep.subr.bf16.mxu0 0
        %1426 = vmatpush2.bf16.msra.mxu0 0
        %1427 = vmatprep.subr.bf16.mxu0 0
        %1428 = vmatpush2.bf16.msra.mxu0 0
        %1429 = vmatprep.subr.bf16.mxu0 0
        %1430 = vmatpush2.bf16.msra.mxu0 0
        %1431 = vmatprep.subr.bf16.mxu0 0
        %1432 = vmatpush2.bf16.msra.mxu0 0
        %1433 = vmatprep.mubr.bf16.mxu0 0
        %1434 = vmatmul.mubr.bf16.gmra.mxu0 %v1396
        %v1435 = vpop.f32.mrf.mxu0
        %v1436 = vadd.f32 0.0, %v1435
        %v1437 = vpop.f32.mrf.mxu0
        %v1438 = vpop.f32.mrf.mxu0
        %v1439 = vpop.f32.mrf.mxu0
        %1440 = vdwg.mxu0
        %v1441 = vpack.c.bf16 %v1436, %v1436
        %s1442 = scalar_lea.vmem %s7, 16
        %v1443 = vld [vmem:[%s1442] sm:$0xf]
        %v1444 = vld [vmem:[%s1442 + $0x4] sm:$0xf]
        %v1445 = vld [vmem:[%s1442 + $0x8] sm:$0xf]
        %v1446 = vld [vmem:[%s1442 + $0xc] sm:$0xf]
        %v1451 = vunpack.c.l.b16 %v1443
        %v1452 = vunpack.c.l.b16 %v1444
        %v1453 = vunpack.c.l.b16 %v1445
        %v1454 = vunpack.c.l.b16 %v1446
        %v1455 = vpack.c.b16 %v1452, %v1451
        %v1456 = vpack.c.b16 %v1454, %v1453
        %v1460 = vsel %vm882, %v1441, 0
        %1462 = vmatprep.subr.bf16.mxu0 0
        %1463 = vmatpush1.bf16.msra.mxu0 0
        %1464 = vmatprep.subr.bf16.mxu0 0
        %1465 = vmatpush1.bf16.msra.mxu0 0
        %1466 = vmatprep.subr.bf16.mxu0 0
        %1467 = vmatpush1.bf16.msra.mxu0 0
        %1468 = vmatprep.subr.bf16.mxu0 0
        %1469 = vmatpush1.bf16.msra.mxu0 0
        %1470 = vmatprep.subr.bf16.mxu0 0
        %1471 = vmatpush1.bf16.msra.mxu0 0
        %1472 = vmatprep.subr.bf16.mxu0 0
        %1473 = vmatpush1.bf16.msra.mxu0 0
        %1474 = vmatprep.subr.bf16.mxu0 0
        %1475 = vmatpush1.bf16.msra.mxu0 %v1456
        %1476 = vmatprep.subr.bf16.mxu0 0
        %1477 = vmatpush1.bf16.msra.mxu0 %v1455
        %1478 = vmatprep.subr.bf16.mxu0 0
        %1479 = vmatpush2.bf16.msra.mxu0 0
        %1480 = vmatprep.subr.bf16.mxu0 0
        %1481 = vmatpush2.bf16.msra.mxu0 0
        %1482 = vmatprep.subr.bf16.mxu0 0
        %1483 = vmatpush2.bf16.msra.mxu0 0
        %1484 = vmatprep.subr.bf16.mxu0 0
        %1485 = vmatpush2.bf16.msra.mxu0 0
        %1486 = vmatprep.subr.bf16.mxu0 0
        %1487 = vmatpush2.bf16.msra.mxu0 0
        %1488 = vmatprep.subr.bf16.mxu0 0
        %1489 = vmatpush2.bf16.msra.mxu0 0
        %1490 = vmatprep.subr.bf16.mxu0 0
        %1491 = vmatpush2.bf16.msra.mxu0 0
        %1492 = vmatprep.subr.bf16.mxu0 0
        %1493 = vmatpush2.bf16.msra.mxu0 0
        %1494 = vmatprep.mubr.bf16.mxu0 0
        %1495 = vmatmul.mubr.bf16.gmra.mxu0 %v1460
        %v1496 = vpop.f32.mrf.mxu0
        %v1497 = vadd.f32 0.0, %v1496
        %v1498 = vpop.f32.mrf.mxu0
        %v1499 = vpop.f32.mrf.mxu0
        %v1500 = vpop.f32.mrf.mxu0
        %1501 = vdwg.mxu0
        %v1506 = vunpack.c.l.b16 %v991
        %v1507 = vunpack.c.l.b16 %v992
        %v1508 = vunpack.c.l.b16 %v993
        %v1509 = vunpack.c.l.b16 %v994
        %v1510 = vpack.c.b16 %v1507, %v1506
        %v1511 = vpack.c.b16 %v1509, %v1508
        %v1515 = vsel %vm882, %v990, 0
        %1517 = vmatprep.subr.bf16.mxu0 0
        %1518 = vmatpush1.bf16.msra.mxu0 0
        %1519 = vmatprep.subr.bf16.mxu0 0
        %1520 = vmatpush1.bf16.msra.mxu0 0
        %1521 = vmatprep.subr.bf16.mxu0 0
        %1522 = vmatpush1.bf16.msra.mxu0 0
        %1523 = vmatprep.subr.bf16.mxu0 0
        %1524 = vmatpush1.bf16.msra.mxu0 0
        %1525 = vmatprep.subr.bf16.mxu0 0
        %1526 = vmatpush1.bf16.msra.mxu0 0
        %1527 = vmatprep.subr.bf16.mxu0 0
        %1528 = vmatpush1.bf16.msra.mxu0 0
        %1529 = vmatprep.subr.bf16.mxu0 0
        %1530 = vmatpush1.bf16.msra.mxu0 %v1511
        %1531 = vmatprep.subr.bf16.mxu0 0
        %1532 = vmatpush1.bf16.msra.mxu0 %v1510
        %1533 = vmatprep.subr.bf16.mxu0 0
        %1534 = vmatpush2.bf16.msra.mxu0 0
        %1535 = vmatprep.subr.bf16.mxu0 0
        %1536 = vmatpush2.bf16.msra.mxu0 0
        %1537 = vmatprep.subr.bf16.mxu0 0
        %1538 = vmatpush2.bf16.msra.mxu0 0
        %1539 = vmatprep.subr.bf16.mxu0 0
        %1540 = vmatpush2.bf16.msra.mxu0 0
        %1541 = vmatprep.subr.bf16.mxu0 0
        %1542 = vmatpush2.bf16.msra.mxu0 0
        %1543 = vmatprep.subr.bf16.mxu0 0
        %1544 = vmatpush2.bf16.msra.mxu0 0
        %1545 = vmatprep.subr.bf16.mxu0 0
        %1546 = vmatpush2.bf16.msra.mxu0 0
        %1547 = vmatprep.subr.bf16.mxu0 0
        %1548 = vmatpush2.bf16.msra.mxu0 0
        %1549 = vmatprep.mubr.bf16.mxu0 0
        %1550 = vmatmul.mubr.bf16.gmra.mxu0 %v1515
        %v1551 = vpop.f32.mrf.mxu0
        %v1552 = vadd.f32 %v1497, %v1551
        %v1553 = vpop.f32.mrf.mxu0
        %v1554 = vpop.f32.mrf.mxu0
        %v1555 = vpop.f32.mrf.mxu0
        %1556 = vdwg.mxu0
        %s1557 = scalar_lea.vmem %s1, 128
        %v1558 = vld [vmem:[%s1557] sm:$0xf]
        %v1559 = vld [vmem:[%s1557 + $0x4] sm:$0xf]
        %v1560 = vld [vmem:[%s1557 + $0x8] sm:$0xf]
        %v1561 = vld [vmem:[%s1557 + $0xc] sm:$0xf]
        %v1562 = vld [vmem:[%s1557 + $0x10] sm:$0xf]
        %v1563 = vld [vmem:[%s1557 + $0x14] sm:$0xf]
        %v1564 = vld [vmem:[%s1557 + $0x18] sm:$0xf]
        %v1565 = vld [vmem:[%s1557 + $0x1c] sm:$0xf]
        %v1566 = vld [vmem:[%s1557 + $0x20] sm:$0xf]
        %v1567 = vld [vmem:[%s1557 + $0x24] sm:$0xf]
        %v1568 = vld [vmem:[%s1557 + $0x28] sm:$0xf]
        %v1569 = vld [vmem:[%s1557 + $0x2c] sm:$0xf]
        %v1570 = vld [vmem:[%s1557 + $0x30] sm:$0xf]
        %v1571 = vld [vmem:[%s1557 + $0x34] sm:$0xf]
        %v1572 = vld [vmem:[%s1557 + $0x38] sm:$0xf]
        %v1573 = vld [vmem:[%s1557 + $0x3c] sm:$0xf]
        %s1574 = scalar_lea.vmem %s4, 2
        %v1575 = vld [vmem:[%s1574] sm:$0x1]
        %v1577 = vlaneseq
        %v1578 = vshrl.u32 %v1577, 7
        %v1579 = vsub.s32 0, %v1578
        %v1580 = vrot.slane %v1575, %v1579
        %v1598 = vunpack.c.l.b16 %v1558
        %v1599 = vunpack.c.l.b16 %v1559
        %v1600 = vunpack.c.l.b16 %v1560
        %v1601 = vunpack.c.l.b16 %v1561
        %v1602 = vunpack.c.l.b16 %v1562
        %v1603 = vunpack.c.l.b16 %v1563
        %v1604 = vunpack.c.l.b16 %v1564
        %v1605 = vunpack.c.l.b16 %v1565
        %v1606 = vunpack.c.l.b16 %v1566
        %v1607 = vunpack.c.l.b16 %v1567
        %v1608 = vunpack.c.l.b16 %v1568
        %v1609 = vunpack.c.l.b16 %v1569
        %v1610 = vunpack.c.l.b16 %v1570
        %v1611 = vunpack.c.l.b16 %v1571
        %v1612 = vunpack.c.l.b16 %v1572
        %v1613 = vunpack.c.l.b16 %v1573
        %v1614 = vpack.c.b16 %v1599, %v1598
        %v1615 = vpack.c.b16 %v1601, %v1600
        %v1616 = vpack.c.b16 %v1603, %v1602
        %v1617 = vpack.c.b16 %v1605, %v1604
        %v1618 = vpack.c.b16 %v1607, %v1606
        %v1619 = vpack.c.b16 %v1609, %v1608
        %v1620 = vpack.c.b16 %v1611, %v1610
        %v1621 = vpack.c.b16 %v1613, %v1612
        %1630 = vmatprep.subr.bf16.mxu0 0
        %1631 = vmatpush1.bf16.msra.mxu0 %v1621
        %1632 = vmatprep.subr.bf16.mxu0 0
        %1633 = vmatpush1.bf16.msra.mxu0 %v1620
        %1634 = vmatprep.subr.bf16.mxu0 0
        %1635 = vmatpush1.bf16.msra.mxu0 %v1619
        %1636 = vmatprep.subr.bf16.mxu0 0
        %1637 = vmatpush1.bf16.msra.mxu0 %v1618
        %1638 = vmatprep.subr.bf16.mxu0 0
        %1639 = vmatpush1.bf16.msra.mxu0 %v1617
        %1640 = vmatprep.subr.bf16.mxu0 0
        %1641 = vmatpush1.bf16.msra.mxu0 %v1616
        %1642 = vmatprep.subr.bf16.mxu0 0
        %1643 = vmatpush1.bf16.msra.mxu0 %v1615
        %1644 = vmatprep.subr.bf16.mxu0 0
        %1645 = vmatpush1.bf16.msra.mxu0 %v1614
        %1646 = vmatprep.subr.bf16.mxu0 0
        %1647 = vmatpush2.bf16.msra.mxu0 0
        %1648 = vmatprep.subr.bf16.mxu0 0
        %1649 = vmatpush2.bf16.msra.mxu0 0
        %1650 = vmatprep.subr.bf16.mxu0 0
        %1651 = vmatpush2.bf16.msra.mxu0 0
        %1652 = vmatprep.subr.bf16.mxu0 0
        %1653 = vmatpush2.bf16.msra.mxu0 0
        %1654 = vmatprep.subr.bf16.mxu0 0
        %1655 = vmatpush2.bf16.msra.mxu0 0
        %1656 = vmatprep.subr.bf16.mxu0 0
        %1657 = vmatpush2.bf16.msra.mxu0 0
        %1658 = vmatprep.subr.bf16.mxu0 0
        %1659 = vmatpush2.bf16.msra.mxu0 0
        %1660 = vmatprep.subr.bf16.mxu0 0
        %1661 = vmatpush2.bf16.msra.mxu0 0
        %1662 = vmatprep.mubr.bf16.mxu0 0
        %1663 = vmatmul.mubr.bf16.gmra.mxu0 %v546
        %v1664 = vpop.f32.mrf.mxu0
        %v1665 = vadd.f32 %v1580, %v1664
        %v1666 = vpop.f32.mrf.mxu0
        %v1667 = vpop.f32.mrf.mxu0
        %v1668 = vpop.f32.mrf.mxu0
        %1669 = vdwg.mxu0
        %s1670 = scalar_lea.vmem %s2, 128
        %v1671 = vld [vmem:[%s1670] sm:$0xf]
        %v1672 = vld [vmem:[%s1670 + $0x4] sm:$0xf]
        %v1673 = vld [vmem:[%s1670 + $0x8] sm:$0xf]
        %v1674 = vld [vmem:[%s1670 + $0xc] sm:$0xf]
        %v1675 = vld [vmem:[%s1670 + $0x10] sm:$0xf]
        %v1676 = vld [vmem:[%s1670 + $0x14] sm:$0xf]
        %v1677 = vld [vmem:[%s1670 + $0x18] sm:$0xf]
        %v1678 = vld [vmem:[%s1670 + $0x1c] sm:$0xf]
        %v1679 = vld [vmem:[%s1670 + $0x20] sm:$0xf]
        %v1680 = vld [vmem:[%s1670 + $0x24] sm:$0xf]
        %v1681 = vld [vmem:[%s1670 + $0x28] sm:$0xf]
        %v1682 = vld [vmem:[%s1670 + $0x2c] sm:$0xf]
        %v1683 = vld [vmem:[%s1670 + $0x30] sm:$0xf]
        %v1684 = vld [vmem:[%s1670 + $0x34] sm:$0xf]
        %v1685 = vld [vmem:[%s1670 + $0x38] sm:$0xf]
        %v1686 = vld [vmem:[%s1670 + $0x3c] sm:$0xf]
        %s1687 = scalar_lea.vmem %s5, 2
        %v1688 = vld [vmem:[%s1687] sm:$0x1]
        %v1690 = vlaneseq
        %v1691 = vshrl.u32 %v1690, 7
        %v1692 = vsub.s32 0, %v1691
        %v1693 = vrot.slane %v1688, %v1692
        %v1711 = vunpack.c.l.b16 %v1671
        %v1712 = vunpack.c.l.b16 %v1672
        %v1713 = vunpack.c.l.b16 %v1673
        %v1714 = vunpack.c.l.b16 %v1674
        %v1715 = vunpack.c.l.b16 %v1675
        %v1716 = vunpack.c.l.b16 %v1676
        %v1717 = vunpack.c.l.b16 %v1677
        %v1718 = vunpack.c.l.b16 %v1678
        %v1719 = vunpack.c.l.b16 %v1679
        %v1720 = vunpack.c.l.b16 %v1680
        %v1721 = vunpack.c.l.b16 %v1681
        %v1722 = vunpack.c.l.b16 %v1682
        %v1723 = vunpack.c.l.b16 %v1683
        %v1724 = vunpack.c.l.b16 %v1684
        %v1725 = vunpack.c.l.b16 %v1685
        %v1726 = vunpack.c.l.b16 %v1686
        %v1727 = vpack.c.b16 %v1712, %v1711
        %v1728 = vpack.c.b16 %v1714, %v1713
        %v1729 = vpack.c.b16 %v1716, %v1715
        %v1730 = vpack.c.b16 %v1718, %v1717
        %v1731 = vpack.c.b16 %v1720, %v1719
        %v1732 = vpack.c.b16 %v1722, %v1721
        %v1733 = vpack.c.b16 %v1724, %v1723
        %v1734 = vpack.c.b16 %v1726, %v1725
        %1743 = vmatprep.subr.bf16.mxu0 0
        %1744 = vmatpush1.bf16.msra.mxu0 %v1734
        %1745 = vmatprep.subr.bf16.mxu0 0
        %1746 = vmatpush1.bf16.msra.mxu0 %v1733
        %1747 = vmatprep.subr.bf16.mxu0 0
        %1748 = vmatpush1.bf16.msra.mxu0 %v1732
        %1749 = vmatprep.subr.bf16.mxu0 0
        %1750 = vmatpush1.bf16.msra.mxu0 %v1731
        %1751 = vmatprep.subr.bf16.mxu0 0
        %1752 = vmatpush1.bf16.msra.mxu0 %v1730
        %1753 = vmatprep.subr.bf16.mxu0 0
        %1754 = vmatpush1.bf16.msra.mxu0 %v1729
        %1755 = vmatprep.subr.bf16.mxu0 0
        %1756 = vmatpush1.bf16.msra.mxu0 %v1728
        %1757 = vmatprep.subr.bf16.mxu0 0
        %1758 = vmatpush1.bf16.msra.mxu0 %v1727
        %1759 = vmatprep.subr.bf16.mxu0 0
        %1760 = vmatpush2.bf16.msra.mxu0 0
        %1761 = vmatprep.subr.bf16.mxu0 0
        %1762 = vmatpush2.bf16.msra.mxu0 0
        %1763 = vmatprep.subr.bf16.mxu0 0
        %1764 = vmatpush2.bf16.msra.mxu0 0
        %1765 = vmatprep.subr.bf16.mxu0 0
        %1766 = vmatpush2.bf16.msra.mxu0 0
        %1767 = vmatprep.subr.bf16.mxu0 0
        %1768 = vmatpush2.bf16.msra.mxu0 0
        %1769 = vmatprep.subr.bf16.mxu0 0
        %1770 = vmatpush2.bf16.msra.mxu0 0
        %1771 = vmatprep.subr.bf16.mxu0 0
        %1772 = vmatpush2.bf16.msra.mxu0 0
        %1773 = vmatprep.subr.bf16.mxu0 0
        %1774 = vmatpush2.bf16.msra.mxu0 0
        %1775 = vmatprep.mubr.bf16.mxu0 0
        %1776 = vmatmul.mubr.bf16.gmra.mxu0 %v546
        %v1777 = vpop.f32.mrf.mxu0
        %v1778 = vadd.f32 %v1693, %v1777
        %v1779 = vpop.f32.mrf.mxu0
        %v1780 = vpop.f32.mrf.mxu0
        %v1781 = vpop.f32.mrf.mxu0
        %1782 = vdwg.mxu0
        %s1783 = scalar_lea.vmem %s3, 128
        %v1784 = vld [vmem:[%s1783] sm:$0xf]
        %v1785 = vld [vmem:[%s1783 + $0x4] sm:$0xf]
        %v1786 = vld [vmem:[%s1783 + $0x8] sm:$0xf]
        %v1787 = vld [vmem:[%s1783 + $0xc] sm:$0xf]
        %v1788 = vld [vmem:[%s1783 + $0x10] sm:$0xf]
        %v1789 = vld [vmem:[%s1783 + $0x14] sm:$0xf]
        %v1790 = vld [vmem:[%s1783 + $0x18] sm:$0xf]
        %v1791 = vld [vmem:[%s1783 + $0x1c] sm:$0xf]
        %v1792 = vld [vmem:[%s1783 + $0x20] sm:$0xf]
        %v1793 = vld [vmem:[%s1783 + $0x24] sm:$0xf]
        %v1794 = vld [vmem:[%s1783 + $0x28] sm:$0xf]
        %v1795 = vld [vmem:[%s1783 + $0x2c] sm:$0xf]
        %v1796 = vld [vmem:[%s1783 + $0x30] sm:$0xf]
        %v1797 = vld [vmem:[%s1783 + $0x34] sm:$0xf]
        %v1798 = vld [vmem:[%s1783 + $0x38] sm:$0xf]
        %v1799 = vld [vmem:[%s1783 + $0x3c] sm:$0xf]
        %s1800 = scalar_lea.vmem %s6, 2
        %v1801 = vld [vmem:[%s1800] sm:$0x1]
        %v1803 = vlaneseq
        %v1804 = vshrl.u32 %v1803, 7
        %v1805 = vsub.s32 0, %v1804
        %v1806 = vrot.slane %v1801, %v1805
        %v1824 = vunpack.c.l.b16 %v1784
        %v1825 = vunpack.c.l.b16 %v1785
        %v1826 = vunpack.c.l.b16 %v1786
        %v1827 = vunpack.c.l.b16 %v1787
        %v1828 = vunpack.c.l.b16 %v1788
        %v1829 = vunpack.c.l.b16 %v1789
        %v1830 = vunpack.c.l.b16 %v1790
        %v1831 = vunpack.c.l.b16 %v1791
        %v1832 = vunpack.c.l.b16 %v1792
        %v1833 = vunpack.c.l.b16 %v1793
        %v1834 = vunpack.c.l.b16 %v1794
        %v1835 = vunpack.c.l.b16 %v1795
        %v1836 = vunpack.c.l.b16 %v1796
        %v1837 = vunpack.c.l.b16 %v1797
        %v1838 = vunpack.c.l.b16 %v1798
        %v1839 = vunpack.c.l.b16 %v1799
        %v1840 = vpack.c.b16 %v1825, %v1824
        %v1841 = vpack.c.b16 %v1827, %v1826
        %v1842 = vpack.c.b16 %v1829, %v1828
        %v1843 = vpack.c.b16 %v1831, %v1830
        %v1844 = vpack.c.b16 %v1833, %v1832
        %v1845 = vpack.c.b16 %v1835, %v1834
        %v1846 = vpack.c.b16 %v1837, %v1836
        %v1847 = vpack.c.b16 %v1839, %v1838
        %1856 = vmatprep.subr.bf16.mxu0 0
        %1857 = vmatpush1.bf16.msra.mxu0 %v1847
        %1858 = vmatprep.subr.bf16.mxu0 0
        %1859 = vmatpush1.bf16.msra.mxu0 %v1846
        %1860 = vmatprep.subr.bf16.mxu0 0
        %1861 = vmatpush1.bf16.msra.mxu0 %v1845
        %1862 = vmatprep.subr.bf16.mxu0 0
        %1863 = vmatpush1.bf16.msra.mxu0 %v1844
        %1864 = vmatprep.subr.bf16.mxu0 0
        %1865 = vmatpush1.bf16.msra.mxu0 %v1843
        %1866 = vmatprep.subr.bf16.mxu0 0
        %1867 = vmatpush1.bf16.msra.mxu0 %v1842
        %1868 = vmatprep.subr.bf16.mxu0 0
        %1869 = vmatpush1.bf16.msra.mxu0 %v1841
        %1870 = vmatprep.subr.bf16.mxu0 0
        %1871 = vmatpush1.bf16.msra.mxu0 %v1840
        %1872 = vmatprep.subr.bf16.mxu0 0
        %1873 = vmatpush2.bf16.msra.mxu0 0
        %1874 = vmatprep.subr.bf16.mxu0 0
        %1875 = vmatpush2.bf16.msra.mxu0 0
        %1876 = vmatprep.subr.bf16.mxu0 0
        %1877 = vmatpush2.bf16.msra.mxu0 0
        %1878 = vmatprep.subr.bf16.mxu0 0
        %1879 = vmatpush2.bf16.msra.mxu0 0
        %1880 = vmatprep.subr.bf16.mxu0 0
        %1881 = vmatpush2.bf16.msra.mxu0 0
        %1882 = vmatprep.subr.bf16.mxu0 0
        %1883 = vmatpush2.bf16.msra.mxu0 0
        %1884 = vmatprep.subr.bf16.mxu0 0
        %1885 = vmatpush2.bf16.msra.mxu0 0
        %1886 = vmatprep.subr.bf16.mxu0 0
        %1887 = vmatpush2.bf16.msra.mxu0 0
        %1888 = vmatprep.mubr.bf16.mxu0 0
        %1889 = vmatmul.mubr.bf16.gmra.mxu0 %v546
        %v1890 = vpop.f32.mrf.mxu0
        %v1891 = vadd.f32 %v1806, %v1890
        %v1892 = vpop.f32.mrf.mxu0
        %v1893 = vpop.f32.mrf.mxu0
        %v1894 = vpop.f32.mrf.mxu0
        %1895 = vdwg.mxu0
        %v1896 = vpack.c.bf16 %v1665, %v1665
        %v1897 = vpack.c.bf16 %v1778, %v1778
        %v1899 = vsel %vm882, %v1896, 0
        %v1902 = vsel %vm882, %v1897, 0
        %1904 = vmatprep.subr.bf16.mxu0 0
        %1905 = vmatpush1.bf16.xpose.msra.mxu0 0
        %1906 = vmatprep.subr.bf16.mxu0 0
        %1907 = vmatpush1.bf16.xpose.msra.mxu0 0
        %1908 = vmatprep.subr.bf16.mxu0 0
        %1909 = vmatpush1.bf16.xpose.msra.mxu0 0
        %1910 = vmatprep.subr.bf16.mxu0 0
        %1911 = vmatpush1.bf16.xpose.msra.mxu0 0
        %1912 = vmatprep.subr.bf16.mxu0 0
        %1913 = vmatpush1.bf16.xpose.msra.mxu0 0
        %1914 = vmatprep.subr.bf16.mxu0 0
        %1915 = vmatpush1.bf16.xpose.msra.mxu0 0
        %1916 = vmatprep.subr.bf16.mxu0 0
        %1917 = vmatpush1.bf16.xpose.msra.mxu0 0
        %1918 = vmatprep.subr.bf16.mxu0 0
        %1919 = vmatpush1.bf16.xpose.msra.mxu0 %v1902
        %1920 = vmatprep.subr.bf16.mxu0 0
        %1921 = vmatpush2.bf16.xpose.msra.mxu0 0
        %1922 = vmatprep.subr.bf16.mxu0 0
        %1923 = vmatpush2.bf16.xpose.msra.mxu0 0
        %1924 = vmatprep.subr.bf16.mxu0 0
        %1925 = vmatpush2.bf16.xpose.msra.mxu0 0
        %1926 = vmatprep.subr.bf16.mxu0 0
        %1927 = vmatpush2.bf16.xpose.msra.mxu0 0
        %1928 = vmatprep.subr.bf16.mxu0 0
        %1929 = vmatpush2.bf16.xpose.msra.mxu0 0
        %1930 = vmatprep.subr.bf16.mxu0 0
        %1931 = vmatpush2.bf16.xpose.msra.mxu0 0
        %1932 = vmatprep.subr.bf16.mxu0 0
        %1933 = vmatpush2.bf16.xpose.msra.mxu0 0
        %1934 = vmatprep.subr.bf16.mxu0 0
        %1935 = vmatpush2.bf16.xpose.msra.mxu0 0
        %1936 = vmatprep.mubr.bf16.mxu0 0
        %1937 = vmatmul.mubr.bf16.gmra.mxu0 %v1899
        %v1938 = vpop.f32.mrf.mxu0
        %v1939 = vadd.f32 0.0, %v1938
        %v1940 = vpop.f32.mrf.mxu0
        %v1941 = vpop.f32.mrf.mxu0
        %v1942 = vpop.f32.mrf.mxu0
        %1943 = vdwg.mxu0
        %v1944 = vsel %vm929, %v1939, -inf
        %1945 = vmax.xlane.f32.xlu0 %v1944
        %v1946 = vpop.xlane.xlu0 %1945
        %v1947 = vsub.f32 %v1939, %v1946
        %v1948 = vmul.f32 %v1947, 1.442695
        %v1949 = vpow.pop %v1948
        %v1950 = vsel %vm929, %v1949, 0.0
        %1951 = vadd.xlane.f32.xlu0 %v1950
        %v1952 = vpop.xlane.xlu0 %1951
        %v1953 = vrcp.pop %v1952
        %v1954 = vmul.f32 %v1949, %v1953
        %v1955 = vpack.c.bf16 %v1954, %v1954
        %v1956 = vpack.c.bf16 %v1891, %v1891
        %v1958 = vsel %vm929, %v1955, 0
        %v1961 = vsel %vm946, %v1956, 0
        %1963 = vmatprep.subr.bf16.mxu0 0
        %1964 = vmatpush1.bf16.msra.mxu0 0
        %1965 = vmatprep.subr.bf16.mxu0 0
        %1966 = vmatpush1.bf16.msra.mxu0 0
        %1967 = vmatprep.subr.bf16.mxu0 0
        %1968 = vmatpush1.bf16.msra.mxu0 0
        %1969 = vmatprep.subr.bf16.mxu0 0
        %1970 = vmatpush1.bf16.msra.mxu0 0
        %1971 = vmatprep.subr.bf16.mxu0 0
        %1972 = vmatpush1.bf16.msra.mxu0 0
        %1973 = vmatprep.subr.bf16.mxu0 0
        %1974 = vmatpush1.bf16.msra.mxu0 0
        %1975 = vmatprep.subr.bf16.mxu0 0
        %1976 = vmatpush1.bf16.msra.mxu0 0
        %1977 = vmatprep.subr.bf16.mxu0 0
        %1978 = vmatpush1.bf16.msra.mxu0 %v1961
        %1979 = vmatprep.subr.bf16.mxu0 0
        %1980 = vmatpush2.bf16.msra.mxu0 0
        %1981 = vmatprep.subr.bf16.mxu0 0
        %1982 = vmatpush2.bf16.msra.mxu0 0
        %1983 = vmatprep.subr.bf16.mxu0 0
        %1984 = vmatpush2.bf16.msra.mxu0 0
        %1985 = vmatprep.subr.bf16.mxu0 0
        %1986 = vmatpush2.bf16.msra.mxu0 0
        %1987 = vmatprep.subr.bf16.mxu0 0
        %1988 = vmatpush2.bf16.msra.mxu0 0
        %1989 = vmatprep.subr.bf16.mxu0 0
        %1990 = vmatpush2.bf16.msra.mxu0 0
        %1991 = vmatprep.subr.bf16.mxu0 0
        %1992 = vmatpush2.bf16.msra.mxu0 0
        %1993 = vmatprep.subr.bf16.mxu0 0
        %1994 = vmatpush2.bf16.msra.mxu0 0
        %1995 = vmatprep.mubr.bf16.mxu0 0
        %1996 = vmatmul.mubr.bf16.gmra.mxu0 %v1958
        %v1997 = vpop.f32.mrf.mxu0
        %v1998 = vadd.f32 0.0, %v1997
        %v1999 = vpop.f32.mrf.mxu0
        %v2000 = vpop.f32.mrf.mxu0
        %v2001 = vpop.f32.mrf.mxu0
        %2002 = vdwg.mxu0
        %v2003 = vpack.c.bf16 %v1998, %v1998
        %s2004 = scalar_lea.vmem %s7, 32
        %v2005 = vld [vmem:[%s2004] sm:$0xf]
        %v2006 = vld [vmem:[%s2004 + $0x4] sm:$0xf]
        %v2007 = vld [vmem:[%s2004 + $0x8] sm:$0xf]
        %v2008 = vld [vmem:[%s2004 + $0xc] sm:$0xf]
        %v2013 = vunpack.c.l.b16 %v2005
        %v2014 = vunpack.c.l.b16 %v2006
        %v2015 = vunpack.c.l.b16 %v2007
        %v2016 = vunpack.c.l.b16 %v2008
        %v2017 = vpack.c.b16 %v2014, %v2013
        %v2018 = vpack.c.b16 %v2016, %v2015
        %v2022 = vsel %vm882, %v2003, 0
        %2024 = vmatprep.subr.bf16.mxu0 0
        %2025 = vmatpush1.bf16.msra.mxu0 0
        %2026 = vmatprep.subr.bf16.mxu0 0
        %2027 = vmatpush1.bf16.msra.mxu0 0
        %2028 = vmatprep.subr.bf16.mxu0 0
        %2029 = vmatpush1.bf16.msra.mxu0 0
        %2030 = vmatprep.subr.bf16.mxu0 0
        %2031 = vmatpush1.bf16.msra.mxu0 0
        %2032 = vmatprep.subr.bf16.mxu0 0
        %2033 = vmatpush1.bf16.msra.mxu0 0
        %2034 = vmatprep.subr.bf16.mxu0 0
        %2035 = vmatpush1.bf16.msra.mxu0 0
        %2036 = vmatprep.subr.bf16.mxu0 0
        %2037 = vmatpush1.bf16.msra.mxu0 %v2018
        %2038 = vmatprep.subr.bf16.mxu0 0
        %2039 = vmatpush1.bf16.msra.mxu0 %v2017
        %2040 = vmatprep.subr.bf16.mxu0 0
        %2041 = vmatpush2.bf16.msra.mxu0 0
        %2042 = vmatprep.subr.bf16.mxu0 0
        %2043 = vmatpush2.bf16.msra.mxu0 0
        %2044 = vmatprep.subr.bf16.mxu0 0
        %2045 = vmatpush2.bf16.msra.mxu0 0
        %2046 = vmatprep.subr.bf16.mxu0 0
        %2047 = vmatpush2.bf16.msra.mxu0 0
        %2048 = vmatprep.subr.bf16.mxu0 0
        %2049 = vmatpush2.bf16.msra.mxu0 0
        %2050 = vmatprep.subr.bf16.mxu0 0
        %2051 = vmatpush2.bf16.msra.mxu0 0
        %2052 = vmatprep.subr.bf16.mxu0 0
        %2053 = vmatpush2.bf16.msra.mxu0 0
        %2054 = vmatprep.subr.bf16.mxu0 0
        %2055 = vmatpush2.bf16.msra.mxu0 0
        %2056 = vmatprep.mubr.bf16.mxu0 0
        %2057 = vmatmul.mubr.bf16.gmra.mxu0 %v2022
        %v2058 = vpop.f32.mrf.mxu0
        %v2059 = vadd.f32 0.0, %v2058
        %v2060 = vpop.f32.mrf.mxu0
        %v2061 = vpop.f32.mrf.mxu0
        %v2062 = vpop.f32.mrf.mxu0
        %2063 = vdwg.mxu0
        %v2064 = vadd.f32 %v1552, %v2059
        %s2065 = scalar_lea.vmem %s1, 192
        %v2066 = vld [vmem:[%s2065] sm:$0xf]
        %v2067 = vld [vmem:[%s2065 + $0x4] sm:$0xf]
        %v2068 = vld [vmem:[%s2065 + $0x8] sm:$0xf]
        %v2069 = vld [vmem:[%s2065 + $0xc] sm:$0xf]
        %v2070 = vld [vmem:[%s2065 + $0x10] sm:$0xf]
        %v2071 = vld [vmem:[%s2065 + $0x14] sm:$0xf]
        %v2072 = vld [vmem:[%s2065 + $0x18] sm:$0xf]
        %v2073 = vld [vmem:[%s2065 + $0x1c] sm:$0xf]
        %v2074 = vld [vmem:[%s2065 + $0x20] sm:$0xf]
        %v2075 = vld [vmem:[%s2065 + $0x24] sm:$0xf]
        %v2076 = vld [vmem:[%s2065 + $0x28] sm:$0xf]
        %v2077 = vld [vmem:[%s2065 + $0x2c] sm:$0xf]
        %v2078 = vld [vmem:[%s2065 + $0x30] sm:$0xf]
        %v2079 = vld [vmem:[%s2065 + $0x34] sm:$0xf]
        %v2080 = vld [vmem:[%s2065 + $0x38] sm:$0xf]
        %v2081 = vld [vmem:[%s2065 + $0x3c] sm:$0xf]
        %s2082 = scalar_lea.vmem %s4, 3
        %v2083 = vld [vmem:[%s2082] sm:$0x1]
        %v2085 = vlaneseq
        %v2086 = vshrl.u32 %v2085, 7
        %v2087 = vsub.s32 0, %v2086
        %v2088 = vrot.slane %v2083, %v2087
        %v2106 = vunpack.c.l.b16 %v2066
        %v2107 = vunpack.c.l.b16 %v2067
        %v2108 = vunpack.c.l.b16 %v2068
        %v2109 = vunpack.c.l.b16 %v2069
        %v2110 = vunpack.c.l.b16 %v2070
        %v2111 = vunpack.c.l.b16 %v2071
        %v2112 = vunpack.c.l.b16 %v2072
        %v2113 = vunpack.c.l.b16 %v2073
        %v2114 = vunpack.c.l.b16 %v2074
        %v2115 = vunpack.c.l.b16 %v2075
        %v2116 = vunpack.c.l.b16 %v2076
        %v2117 = vunpack.c.l.b16 %v2077
        %v2118 = vunpack.c.l.b16 %v2078
        %v2119 = vunpack.c.l.b16 %v2079
        %v2120 = vunpack.c.l.b16 %v2080
        %v2121 = vunpack.c.l.b16 %v2081
        %v2122 = vpack.c.b16 %v2107, %v2106
        %v2123 = vpack.c.b16 %v2109, %v2108
        %v2124 = vpack.c.b16 %v2111, %v2110
        %v2125 = vpack.c.b16 %v2113, %v2112
        %v2126 = vpack.c.b16 %v2115, %v2114
        %v2127 = vpack.c.b16 %v2117, %v2116
        %v2128 = vpack.c.b16 %v2119, %v2118
        %v2129 = vpack.c.b16 %v2121, %v2120
        %2138 = vmatprep.subr.bf16.mxu0 0
        %2139 = vmatpush1.bf16.msra.mxu0 %v2129
        %2140 = vmatprep.subr.bf16.mxu0 0
        %2141 = vmatpush1.bf16.msra.mxu0 %v2128
        %2142 = vmatprep.subr.bf16.mxu0 0
        %2143 = vmatpush1.bf16.msra.mxu0 %v2127
        %2144 = vmatprep.subr.bf16.mxu0 0
        %2145 = vmatpush1.bf16.msra.mxu0 %v2126
        %2146 = vmatprep.subr.bf16.mxu0 0
        %2147 = vmatpush1.bf16.msra.mxu0 %v2125
        %2148 = vmatprep.subr.bf16.mxu0 0
        %2149 = vmatpush1.bf16.msra.mxu0 %v2124
        %2150 = vmatprep.subr.bf16.mxu0 0
        %2151 = vmatpush1.bf16.msra.mxu0 %v2123
        %2152 = vmatprep.subr.bf16.mxu0 0
        %2153 = vmatpush1.bf16.msra.mxu0 %v2122
        %2154 = vmatprep.subr.bf16.mxu0 0
        %2155 = vmatpush2.bf16.msra.mxu0 0
        %2156 = vmatprep.subr.bf16.mxu0 0
        %2157 = vmatpush2.bf16.msra.mxu0 0
        %2158 = vmatprep.subr.bf16.mxu0 0
        %2159 = vmatpush2.bf16.msra.mxu0 0
        %2160 = vmatprep.subr.bf16.mxu0 0
        %2161 = vmatpush2.bf16.msra.mxu0 0
        %2162 = vmatprep.subr.bf16.mxu0 0
        %2163 = vmatpush2.bf16.msra.mxu0 0
        %2164 = vmatprep.subr.bf16.mxu0 0
        %2165 = vmatpush2.bf16.msra.mxu0 0
        %2166 = vmatprep.subr.bf16.mxu0 0
        %2167 = vmatpush2.bf16.msra.mxu0 0
        %2168 = vmatprep.subr.bf16.mxu0 0
        %2169 = vmatpush2.bf16.msra.mxu0 0
        %2170 = vmatprep.mubr.bf16.mxu0 0
        %2171 = vmatmul.mubr.bf16.gmra.mxu0 %v546
        %v2172 = vpop.f32.mrf.mxu0
        %v2173 = vadd.f32 %v2088, %v2172
        %v2174 = vpop.f32.mrf.mxu0
        %v2175 = vpop.f32.mrf.mxu0
        %v2176 = vpop.f32.mrf.mxu0
        %2177 = vdwg.mxu0
        %s2178 = scalar_lea.vmem %s2, 192
        %v2179 = vld [vmem:[%s2178] sm:$0xf]
        %v2180 = vld [vmem:[%s2178 + $0x4] sm:$0xf]
        %v2181 = vld [vmem:[%s2178 + $0x8] sm:$0xf]
        %v2182 = vld [vmem:[%s2178 + $0xc] sm:$0xf]
        %v2183 = vld [vmem:[%s2178 + $0x10] sm:$0xf]
        %v2184 = vld [vmem:[%s2178 + $0x14] sm:$0xf]
        %v2185 = vld [vmem:[%s2178 + $0x18] sm:$0xf]
        %v2186 = vld [vmem:[%s2178 + $0x1c] sm:$0xf]
        %v2187 = vld [vmem:[%s2178 + $0x20] sm:$0xf]
        %v2188 = vld [vmem:[%s2178 + $0x24] sm:$0xf]
        %v2189 = vld [vmem:[%s2178 + $0x28] sm:$0xf]
        %v2190 = vld [vmem:[%s2178 + $0x2c] sm:$0xf]
        %v2191 = vld [vmem:[%s2178 + $0x30] sm:$0xf]
        %v2192 = vld [vmem:[%s2178 + $0x34] sm:$0xf]
        %v2193 = vld [vmem:[%s2178 + $0x38] sm:$0xf]
        %v2194 = vld [vmem:[%s2178 + $0x3c] sm:$0xf]
        %s2195 = scalar_lea.vmem %s5, 3
        %v2196 = vld [vmem:[%s2195] sm:$0x1]
        %v2198 = vlaneseq
        %v2199 = vshrl.u32 %v2198, 7
        %v2200 = vsub.s32 0, %v2199
        %v2201 = vrot.slane %v2196, %v2200
        %v2219 = vunpack.c.l.b16 %v2179
        %v2220 = vunpack.c.l.b16 %v2180
        %v2221 = vunpack.c.l.b16 %v2181
        %v2222 = vunpack.c.l.b16 %v2182
        %v2223 = vunpack.c.l.b16 %v2183
        %v2224 = vunpack.c.l.b16 %v2184
        %v2225 = vunpack.c.l.b16 %v2185
        %v2226 = vunpack.c.l.b16 %v2186
        %v2227 = vunpack.c.l.b16 %v2187
        %v2228 = vunpack.c.l.b16 %v2188
        %v2229 = vunpack.c.l.b16 %v2189
        %v2230 = vunpack.c.l.b16 %v2190
        %v2231 = vunpack.c.l.b16 %v2191
        %v2232 = vunpack.c.l.b16 %v2192
        %v2233 = vunpack.c.l.b16 %v2193
        %v2234 = vunpack.c.l.b16 %v2194
        %v2235 = vpack.c.b16 %v2220, %v2219
        %v2236 = vpack.c.b16 %v2222, %v2221
        %v2237 = vpack.c.b16 %v2224, %v2223
        %v2238 = vpack.c.b16 %v2226, %v2225
        %v2239 = vpack.c.b16 %v2228, %v2227
        %v2240 = vpack.c.b16 %v2230, %v2229
        %v2241 = vpack.c.b16 %v2232, %v2231
        %v2242 = vpack.c.b16 %v2234, %v2233
        %2251 = vmatprep.subr.bf16.mxu0 0
        %2252 = vmatpush1.bf16.msra.mxu0 %v2242
        %2253 = vmatprep.subr.bf16.mxu0 0
        %2254 = vmatpush1.bf16.msra.mxu0 %v2241
        %2255 = vmatprep.subr.bf16.mxu0 0
        %2256 = vmatpush1.bf16.msra.mxu0 %v2240
        %2257 = vmatprep.subr.bf16.mxu0 0
        %2258 = vmatpush1.bf16.msra.mxu0 %v2239
        %2259 = vmatprep.subr.bf16.mxu0 0
        %2260 = vmatpush1.bf16.msra.mxu0 %v2238
        %2261 = vmatprep.subr.bf16.mxu0 0
        %2262 = vmatpush1.bf16.msra.mxu0 %v2237
        %2263 = vmatprep.subr.bf16.mxu0 0
        %2264 = vmatpush1.bf16.msra.mxu0 %v2236
        %2265 = vmatprep.subr.bf16.mxu0 0
        %2266 = vmatpush1.bf16.msra.mxu0 %v2235
        %2267 = vmatprep.subr.bf16.mxu0 0
        %2268 = vmatpush2.bf16.msra.mxu0 0
        %2269 = vmatprep.subr.bf16.mxu0 0
        %2270 = vmatpush2.bf16.msra.mxu0 0
        %2271 = vmatprep.subr.bf16.mxu0 0
        %2272 = vmatpush2.bf16.msra.mxu0 0
        %2273 = vmatprep.subr.bf16.mxu0 0
        %2274 = vmatpush2.bf16.msra.mxu0 0
        %2275 = vmatprep.subr.bf16.mxu0 0
        %2276 = vmatpush2.bf16.msra.mxu0 0
        %2277 = vmatprep.subr.bf16.mxu0 0
        %2278 = vmatpush2.bf16.msra.mxu0 0
        %2279 = vmatprep.subr.bf16.mxu0 0
        %2280 = vmatpush2.bf16.msra.mxu0 0
        %2281 = vmatprep.subr.bf16.mxu0 0
        %2282 = vmatpush2.bf16.msra.mxu0 0
        %2283 = vmatprep.mubr.bf16.mxu0 0
        %2284 = vmatmul.mubr.bf16.gmra.mxu0 %v546
        %v2285 = vpop.f32.mrf.mxu0
        %v2286 = vadd.f32 %v2201, %v2285
        %v2287 = vpop.f32.mrf.mxu0
        %v2288 = vpop.f32.mrf.mxu0
        %v2289 = vpop.f32.mrf.mxu0
        %2290 = vdwg.mxu0
        %s2291 = scalar_lea.vmem %s3, 192
        %v2292 = vld [vmem:[%s2291] sm:$0xf]
        %v2293 = vld [vmem:[%s2291 + $0x4] sm:$0xf]
        %v2294 = vld [vmem:[%s2291 + $0x8] sm:$0xf]
        %v2295 = vld [vmem:[%s2291 + $0xc] sm:$0xf]
        %v2296 = vld [vmem:[%s2291 + $0x10] sm:$0xf]
        %v2297 = vld [vmem:[%s2291 + $0x14] sm:$0xf]
        %v2298 = vld [vmem:[%s2291 + $0x18] sm:$0xf]
        %v2299 = vld [vmem:[%s2291 + $0x1c] sm:$0xf]
        %v2300 = vld [vmem:[%s2291 + $0x20] sm:$0xf]
        %v2301 = vld [vmem:[%s2291 + $0x24] sm:$0xf]
        %v2302 = vld [vmem:[%s2291 + $0x28] sm:$0xf]
        %v2303 = vld [vmem:[%s2291 + $0x2c] sm:$0xf]
        %v2304 = vld [vmem:[%s2291 + $0x30] sm:$0xf]
        %v2305 = vld [vmem:[%s2291 + $0x34] sm:$0xf]
        %v2306 = vld [vmem:[%s2291 + $0x38] sm:$0xf]
        %v2307 = vld [vmem:[%s2291 + $0x3c] sm:$0xf]
        %s2308 = scalar_lea.vmem %s6, 3
        %v2309 = vld [vmem:[%s2308] sm:$0x1]
        %v2311 = vlaneseq
        %v2312 = vshrl.u32 %v2311, 7
        %v2313 = vsub.s32 0, %v2312
        %v2314 = vrot.slane %v2309, %v2313
        %v2332 = vunpack.c.l.b16 %v2292
        %v2333 = vunpack.c.l.b16 %v2293
        %v2334 = vunpack.c.l.b16 %v2294
        %v2335 = vunpack.c.l.b16 %v2295
        %v2336 = vunpack.c.l.b16 %v2296
        %v2337 = vunpack.c.l.b16 %v2297
        %v2338 = vunpack.c.l.b16 %v2298
        %v2339 = vunpack.c.l.b16 %v2299
        %v2340 = vunpack.c.l.b16 %v2300
        %v2341 = vunpack.c.l.b16 %v2301
        %v2342 = vunpack.c.l.b16 %v2302
        %v2343 = vunpack.c.l.b16 %v2303
        %v2344 = vunpack.c.l.b16 %v2304
        %v2345 = vunpack.c.l.b16 %v2305
        %v2346 = vunpack.c.l.b16 %v2306
        %v2347 = vunpack.c.l.b16 %v2307
        %v2348 = vpack.c.b16 %v2333, %v2332
        %v2349 = vpack.c.b16 %v2335, %v2334
        %v2350 = vpack.c.b16 %v2337, %v2336
        %v2351 = vpack.c.b16 %v2339, %v2338
        %v2352 = vpack.c.b16 %v2341, %v2340
        %v2353 = vpack.c.b16 %v2343, %v2342
        %v2354 = vpack.c.b16 %v2345, %v2344
        %v2355 = vpack.c.b16 %v2347, %v2346
        %2364 = vmatprep.subr.bf16.mxu0 0
        %2365 = vmatpush1.bf16.msra.mxu0 %v2355
        %2366 = vmatprep.subr.bf16.mxu0 0
        %2367 = vmatpush1.bf16.msra.mxu0 %v2354
        %2368 = vmatprep.subr.bf16.mxu0 0
        %2369 = vmatpush1.bf16.msra.mxu0 %v2353
        %2370 = vmatprep.subr.bf16.mxu0 0
        %2371 = vmatpush1.bf16.msra.mxu0 %v2352
        %2372 = vmatprep.subr.bf16.mxu0 0
        %2373 = vmatpush1.bf16.msra.mxu0 %v2351
        %2374 = vmatprep.subr.bf16.mxu0 0
        %2375 = vmatpush1.bf16.msra.mxu0 %v2350
        %2376 = vmatprep.subr.bf16.mxu0 0
        %2377 = vmatpush1.bf16.msra.mxu0 %v2349
        %2378 = vmatprep.subr.bf16.mxu0 0
        %2379 = vmatpush1.bf16.msra.mxu0 %v2348
        %2380 = vmatprep.subr.bf16.mxu0 0
        %2381 = vmatpush2.bf16.msra.mxu0 0
        %2382 = vmatprep.subr.bf16.mxu0 0
        %2383 = vmatpush2.bf16.msra.mxu0 0
        %2384 = vmatprep.subr.bf16.mxu0 0
        %2385 = vmatpush2.bf16.msra.mxu0 0
        %2386 = vmatprep.subr.bf16.mxu0 0
        %2387 = vmatpush2.bf16.msra.mxu0 0
        %2388 = vmatprep.subr.bf16.mxu0 0
        %2389 = vmatpush2.bf16.msra.mxu0 0
        %2390 = vmatprep.subr.bf16.mxu0 0
        %2391 = vmatpush2.bf16.msra.mxu0 0
        %2392 = vmatprep.subr.bf16.mxu0 0
        %2393 = vmatpush2.bf16.msra.mxu0 0
        %2394 = vmatprep.subr.bf16.mxu0 0
        %2395 = vmatpush2.bf16.msra.mxu0 0
        %2396 = vmatprep.mubr.bf16.mxu0 0
        %2397 = vmatmul.mubr.bf16.gmra.mxu0 %v546
        %v2398 = vpop.f32.mrf.mxu0
        %v2399 = vadd.f32 %v2314, %v2398
        %v2400 = vpop.f32.mrf.mxu0
        %v2401 = vpop.f32.mrf.mxu0
        %v2402 = vpop.f32.mrf.mxu0
        %2403 = vdwg.mxu0
        %v2404 = vpack.c.bf16 %v2173, %v2173
        %v2405 = vpack.c.bf16 %v2286, %v2286
        %v2407 = vsel %vm882, %v2404, 0
        %v2410 = vsel %vm882, %v2405, 0
        %2412 = vmatprep.subr.bf16.mxu0 0
        %2413 = vmatpush1.bf16.xpose.msra.mxu0 0
        %2414 = vmatprep.subr.bf16.mxu0 0
        %2415 = vmatpush1.bf16.xpose.msra.mxu0 0
        %2416 = vmatprep.subr.bf16.mxu0 0
        %2417 = vmatpush1.bf16.xpose.msra.mxu0 0
        %2418 = vmatprep.subr.bf16.mxu0 0
        %2419 = vmatpush1.bf16.xpose.msra.mxu0 0
        %2420 = vmatprep.subr.bf16.mxu0 0
        %2421 = vmatpush1.bf16.xpose.msra.mxu0 0
        %2422 = vmatprep.subr.bf16.mxu0 0
        %2423 = vmatpush1.bf16.xpose.msra.mxu0 0
        %2424 = vmatprep.subr.bf16.mxu0 0
        %2425 = vmatpush1.bf16.xpose.msra.mxu0 0
        %2426 = vmatprep.subr.bf16.mxu0 0
        %2427 = vmatpush1.bf16.xpose.msra.mxu0 %v2410
        %2428 = vmatprep.subr.bf16.mxu0 0
        %2429 = vmatpush2.bf16.xpose.msra.mxu0 0
        %2430 = vmatprep.subr.bf16.mxu0 0
        %2431 = vmatpush2.bf16.xpose.msra.mxu0 0
        %2432 = vmatprep.subr.bf16.mxu0 0
        %2433 = vmatpush2.bf16.xpose.msra.mxu0 0
        %2434 = vmatprep.subr.bf16.mxu0 0
        %2435 = vmatpush2.bf16.xpose.msra.mxu0 0
        %2436 = vmatprep.subr.bf16.mxu0 0
        %2437 = vmatpush2.bf16.xpose.msra.mxu0 0
        %2438 = vmatprep.subr.bf16.mxu0 0
        %2439 = vmatpush2.bf16.xpose.msra.mxu0 0
        %2440 = vmatprep.subr.bf16.mxu0 0
        %2441 = vmatpush2.bf16.xpose.msra.mxu0 0
        %2442 = vmatprep.subr.bf16.mxu0 0
        %2443 = vmatpush2.bf16.xpose.msra.mxu0 0
        %2444 = vmatprep.mubr.bf16.mxu0 0
        %2445 = vmatmul.mubr.bf16.gmra.mxu0 %v2407
        %v2446 = vpop.f32.mrf.mxu0
        %v2447 = vadd.f32 0.0, %v2446
        %v2448 = vpop.f32.mrf.mxu0
        %v2449 = vpop.f32.mrf.mxu0
        %v2450 = vpop.f32.mrf.mxu0
        %2451 = vdwg.mxu0
        %v2452 = vsel %vm929, %v2447, -inf
        %2453 = vmax.xlane.f32.xlu0 %v2452
        %v2454 = vpop.xlane.xlu0 %2453
        %v2455 = vsub.f32 %v2447, %v2454
        %v2456 = vmul.f32 %v2455, 1.442695
        %v2457 = vpow.pop %v2456
        %v2458 = vsel %vm929, %v2457, 0.0
        %2459 = vadd.xlane.f32.xlu0 %v2458
        %v2460 = vpop.xlane.xlu0 %2459
        %v2461 = vrcp.pop %v2460
        %v2462 = vmul.f32 %v2457, %v2461
        %v2463 = vpack.c.bf16 %v2462, %v2462
        %v2464 = vpack.c.bf16 %v2399, %v2399
        %v2466 = vsel %vm929, %v2463, 0
        %v2469 = vsel %vm946, %v2464, 0
        %2471 = vmatprep.subr.bf16.mxu0 0
        %2472 = vmatpush1.bf16.msra.mxu0 0
        %2473 = vmatprep.subr.bf16.mxu0 0
        %2474 = vmatpush1.bf16.msra.mxu0 0
        %2475 = vmatprep.subr.bf16.mxu0 0
        %2476 = vmatpush1.bf16.msra.mxu0 0
        %2477 = vmatprep.subr.bf16.mxu0 0
        %2478 = vmatpush1.bf16.msra.mxu0 0
        %2479 = vmatprep.subr.bf16.mxu0 0
        %2480 = vmatpush1.bf16.msra.mxu0 0
        %2481 = vmatprep.subr.bf16.mxu0 0
        %2482 = vmatpush1.bf16.msra.mxu0 0
        %2483 = vmatprep.subr.bf16.mxu0 0
        %2484 = vmatpush1.bf16.msra.mxu0 0
        %2485 = vmatprep.subr.bf16.mxu0 0
        %2486 = vmatpush1.bf16.msra.mxu0 %v2469
        %2487 = vmatprep.subr.bf16.mxu0 0
        %2488 = vmatpush2.bf16.msra.mxu0 0
        %2489 = vmatprep.subr.bf16.mxu0 0
        %2490 = vmatpush2.bf16.msra.mxu0 0
        %2491 = vmatprep.subr.bf16.mxu0 0
        %2492 = vmatpush2.bf16.msra.mxu0 0
        %2493 = vmatprep.subr.bf16.mxu0 0
        %2494 = vmatpush2.bf16.msra.mxu0 0
        %2495 = vmatprep.subr.bf16.mxu0 0
        %2496 = vmatpush2.bf16.msra.mxu0 0
        %2497 = vmatprep.subr.bf16.mxu0 0
        %2498 = vmatpush2.bf16.msra.mxu0 0
        %2499 = vmatprep.subr.bf16.mxu0 0
        %2500 = vmatpush2.bf16.msra.mxu0 0
        %2501 = vmatprep.subr.bf16.mxu0 0
        %2502 = vmatpush2.bf16.msra.mxu0 0
        %2503 = vmatprep.mubr.bf16.mxu0 0
        %2504 = vmatmul.mubr.bf16.gmra.mxu0 %v2466
        %v2505 = vpop.f32.mrf.mxu0
        %v2506 = vadd.f32 0.0, %v2505
        %v2507 = vpop.f32.mrf.mxu0
        %v2508 = vpop.f32.mrf.mxu0
        %v2509 = vpop.f32.mrf.mxu0
        %2510 = vdwg.mxu0
        %v2511 = vpack.c.bf16 %v2506, %v2506
        %s2512 = scalar_lea.vmem %s7, 48
        %v2513 = vld [vmem:[%s2512] sm:$0xf]
        %v2514 = vld [vmem:[%s2512 + $0x4] sm:$0xf]
        %v2515 = vld [vmem:[%s2512 + $0x8] sm:$0xf]
        %v2516 = vld [vmem:[%s2512 + $0xc] sm:$0xf]
        %v2521 = vunpack.c.l.b16 %v2513
        %v2522 = vunpack.c.l.b16 %v2514
        %v2523 = vunpack.c.l.b16 %v2515
        %v2524 = vunpack.c.l.b16 %v2516
        %v2525 = vpack.c.b16 %v2522, %v2521
        %v2526 = vpack.c.b16 %v2524, %v2523
        %v2530 = vsel %vm882, %v2511, 0
        %2532 = vmatprep.subr.bf16.mxu0 0
        %2533 = vmatpush1.bf16.msra.mxu0 0
        %2534 = vmatprep.subr.bf16.mxu0 0
        %2535 = vmatpush1.bf16.msra.mxu0 0
        %2536 = vmatprep.subr.bf16.mxu0 0
        %2537 = vmatpush1.bf16.msra.mxu0 0
        %2538 = vmatprep.subr.bf16.mxu0 0
        %2539 = vmatpush1.bf16.msra.mxu0 0
        %2540 = vmatprep.subr.bf16.mxu0 0
        %2541 = vmatpush1.bf16.msra.mxu0 0
        %2542 = vmatprep.subr.bf16.mxu0 0
        %2543 = vmatpush1.bf16.msra.mxu0 0
        %2544 = vmatprep.subr.bf16.mxu0 0
        %2545 = vmatpush1.bf16.msra.mxu0 %v2526
        %2546 = vmatprep.subr.bf16.mxu0 0
        %2547 = vmatpush1.bf16.msra.mxu0 %v2525
        %2548 = vmatprep.subr.bf16.mxu0 0
        %2549 = vmatpush2.bf16.msra.mxu0 0
        %2550 = vmatprep.subr.bf16.mxu0 0
        %2551 = vmatpush2.bf16.msra.mxu0 0
        %2552 = vmatprep.subr.bf16.mxu0 0
        %2553 = vmatpush2.bf16.msra.mxu0 0
        %2554 = vmatprep.subr.bf16.mxu0 0
        %2555 = vmatpush2.bf16.msra.mxu0 0
        %2556 = vmatprep.subr.bf16.mxu0 0
        %2557 = vmatpush2.bf16.msra.mxu0 0
        %2558 = vmatprep.subr.bf16.mxu0 0
        %2559 = vmatpush2.bf16.msra.mxu0 0
        %2560 = vmatprep.subr.bf16.mxu0 0
        %2561 = vmatpush2.bf16.msra.mxu0 0
        %2562 = vmatprep.subr.bf16.mxu0 0
        %2563 = vmatpush2.bf16.msra.mxu0 0
        %2564 = vmatprep.mubr.bf16.mxu0 0
        %2565 = vmatmul.mubr.bf16.gmra.mxu0 %v2530
        %v2566 = vpop.f32.mrf.mxu0
        %v2567 = vadd.f32 0.0, %v2566
        %v2568 = vpop.f32.mrf.mxu0
        %v2569 = vpop.f32.mrf.mxu0
        %v2570 = vpop.f32.mrf.mxu0
        %2571 = vdwg.mxu0
        %v2572 = vadd.f32 %v2064, %v2567
        %v2573 = vld [vmem:[%s8] sm:$0x1]
        %v2575 = vlaneseq
        %v2576 = vshrl.u32 %v2575, 7
        %v2577 = vsub.s32 0, %v2576
        %v2578 = vrot.slane %v2573, %v2577
        %v2580 = vadd.f32 %v2572, %v2578
        %v2581 = vadd.f32 %v545, %v2580
        %2582 = vadd.xlane.f32.xlu0 %v2581
        %v2583 = vpop.xlane.xlu0 %2582
        %v2584 = vrcp.pop 128.0
        %v2585 = vmul.f32 %v2583, %v2584
        %v2586 = vsub.f32 %v2581, %v2585
        %v2587 = vmul.f32 %v2586, %v2586
        %2588 = vadd.xlane.f32.xlu0 %v2587
        %v2589 = vpop.xlane.xlu0 %2588
        %v2590 = vmul.f32 %v2589, %v2584
        %v2591 = vadd.f32 %v2590, 1e-05
        %v2592 = vrsqrt.pop %v2591
        %v2593 = vmul.f32 %v2586, %v2592
        %v2594 = vld [vmem:[%s9] sm:$0x1]
        %v2596 = vlaneseq
        %v2597 = vshrl.u32 %v2596, 7
        %v2598 = vsub.s32 0, %v2597
        %v2599 = vrot.slane %v2594, %v2598
        %v2601 = vmul.f32 %v2593, %v2599
        %v2602 = vld [vmem:[%s10] sm:$0x1]
        %v2604 = vlaneseq
        %v2605 = vshrl.u32 %v2604, 7
        %v2606 = vsub.s32 0, %v2605
        %v2607 = vrot.slane %v2602, %v2606
        %v2609 = vadd.f32 %v2601, %v2607
        %v2610 = vpack.c.bf16 %v2609, %v2609
        %v2611 = vld [vmem:[%s11] sm:$0xff]
        %v2612 = vld [vmem:[%s11 + $0x8] sm:$0xff]
        %v2613 = vld [vmem:[%s11 + $0x10] sm:$0xff]
        %v2614 = vld [vmem:[%s11 + $0x18] sm:$0xff]
        %v2615 = vld [vmem:[%s11 + $0x20] sm:$0xff]
        %v2616 = vld [vmem:[%s11 + $0x28] sm:$0xff]
        %v2617 = vld [vmem:[%s11 + $0x30] sm:$0xff]
        %v2618 = vld [vmem:[%s11 + $0x38] sm:$0xff]
        %v2619 = vld [vmem:[%s11 + $0x40] sm:$0xff]
        %v2620 = vld [vmem:[%s11 + $0x48] sm:$0xff]
        %v2621 = vld [vmem:[%s11 + $0x50] sm:$0xff]
        %v2622 = vld [vmem:[%s11 + $0x58] sm:$0xff]
        %v2623 = vld [vmem:[%s11 + $0x60] sm:$0xff]
        %v2624 = vld [vmem:[%s11 + $0x68] sm:$0xff]
        %v2625 = vld [vmem:[%s11 + $0x70] sm:$0xff]
        %v2626 = vld [vmem:[%s11 + $0x78] sm:$0xff]
        %v2627 = vld [vmem:[%s12] sm:$0x3]
        %v2629 = vlaneseq
        %v2630 = vshrl.u32 %v2629, 7
        %v2631 = vsub.s32 0, %v2630
        %v2632 = vrot.slane %v2627, %v2631
        %v2633 = vlaneseq
        %v2634 = vshrl.u32 %v2633, 7
        %v2635 = vsub.s32 1, %v2634
        %v2636 = vrot.slane %v2627, %v2635
        %v2655 = vunpack.c.l.b16 %v2611
        %v2656 = vunpack.c.h.b16 %v2611
        %v2657 = vunpack.c.l.b16 %v2612
        %v2658 = vunpack.c.h.b16 %v2612
        %v2659 = vunpack.c.l.b16 %v2613
        %v2660 = vunpack.c.h.b16 %v2613
        %v2661 = vunpack.c.l.b16 %v2614
        %v2662 = vunpack.c.h.b16 %v2614
        %v2663 = vunpack.c.l.b16 %v2615
        %v2664 = vunpack.c.h.b16 %v2615
        %v2665 = vunpack.c.l.b16 %v2616
        %v2666 = vunpack.c.h.b16 %v2616
        %v2667 = vunpack.c.l.b16 %v2617
        %v2668 = vunpack.c.h.b16 %v2617
        %v2669 = vunpack.c.l.b16 %v2618
        %v2670 = vunpack.c.h.b16 %v2618
        %v2671 = vunpack.c.l.b16 %v2619
        %v2672 = vunpack.c.h.b16 %v2619
        %v2673 = vunpack.c.l.b16 %v2620
        %v2674 = vunpack.c.h.b16 %v2620
        %v2675 = vunpack.c.l.b16 %v2621
        %v2676 = vunpack.c.h.b16 %v2621
        %v2677 = vunpack.c.l.b16 %v2622
        %v2678 = vunpack.c.h.b16 %v2622
        %v2679 = vunpack.c.l.b16 %v2623
        %v2680 = vunpack.c.h.b16 %v2623
        %v2681 = vunpack.c.l.b16 %v2624
        %v2682 = vunpack.c.h.b16 %v2624
        %v2683 = vunpack.c.l.b16 %v2625
        %v2684 = vunpack.c.h.b16 %v2625
        %v2685 = vunpack.c.l.b16 %v2626
        %v2686 = vunpack.c.h.b16 %v2626
        %v2687 = vpack.c.b16 %v2657, %v2655
        %v2688 = vpack.c.b16 %v2658, %v2656
        %v2689 = vpack.c.b16 %v2661, %v2659
        %v2690 = vpack.c.b16 %v2662, %v2660
        %v2691 = vpack.c.b16 %v2665, %v2663
        %v2692 = vpack.c.b16 %v2666, %v2664
        %v2693 = vpack.c.b16 %v2669, %v2667
        %v2694 = vpack.c.b16 %v2670, %v2668
        %v2695 = vpack.c.b16 %v2673, %v2671
        %v2696 = vpack.c.b16 %v2674, %v2672
        %v2697 = vpack.c.b16 %v2677, %v2675
        %v2698 = vpack.c.b16 %v2678, %v2676
        %v2699 = vpack.c.b16 %v2681, %v2679
        %v2700 = vpack.c.b16 %v2682, %v2680
        %v2701 = vpack.c.b16 %v2685, %v2683
        %v2702 = vpack.c.b16 %v2686, %v2684
        %2719 = vmatprep.subr.bf16.mxu0 %v2702
        %2720 = vmatpush1.bf16.msra.mxu0 %v2701
        %2721 = vmatprep.subr.bf16.mxu0 %v2700
        %2722 = vmatpush1.bf16.msra.mxu0 %v2699
        %2723 = vmatprep.subr.bf16.mxu0 %v2698
        %2724 = vmatpush1.bf16.msra.mxu0 %v2697
        %2725 = vmatprep.subr.bf16.mxu0 %v2696
        %2726 = vmatpush1.bf16.msra.mxu0 %v2695
        %2727 = vmatprep.subr.bf16.mxu0 %v2694
        %2728 = vmatpush1.bf16.msra.mxu0 %v2693
        %2729 = vmatprep.subr.bf16.mxu0 %v2692
        %2730 = vmatpush1.bf16.msra.mxu0 %v2691
        %2731 = vmatprep.subr.bf16.mxu0 %v2690
        %2732 = vmatpush1.bf16.msra.mxu0 %v2689
        %2733 = vmatprep.subr.bf16.mxu0 %v2688
        %2734 = vmatpush1.bf16.msra.mxu0 %v2687
        %2735 = vmatprep.subr.bf16.mxu0 0
        %2736 = vmatpush2.bf16.msra.mxu0 0
        %2737 = vmatprep.subr.bf16.mxu0 0
        %2738 = vmatpush2.bf16.msra.mxu0 0
        %2739 = vmatprep.subr.bf16.mxu0 0
        %2740 = vmatpush2.bf16.msra.mxu0 0
        %2741 = vmatprep.subr.bf16.mxu0 0
        %2742 = vmatpush2.bf16.msra.mxu0 0
        %2743 = vmatprep.subr.bf16.mxu0 0
        %2744 = vmatpush2.bf16.msra.mxu0 0
        %2745 = vmatprep.subr.bf16.mxu0 0
        %2746 = vmatpush2.bf16.msra.mxu0 0
        %2747 = vmatprep.subr.bf16.mxu0 0
        %2748 = vmatpush2.bf16.msra.mxu0 0
        %2749 = vmatprep.subr.bf16.mxu0 0
        %2750 = vmatpush2.bf16.msra.mxu0 0
        %2751 = vmatprep.mubr.bf16.mxu0 0
        %2752 = vmatmul.mubr.bf16.gmra.mxu0 %v2610
        %v2753 = vpop.f32.mrf.mxu0
        %v2754 = vadd.f32 %v2632, %v2753
        %v2755 = vpop.f32.mrf.mxu0
        %v2756 = vadd.f32 %v2636, %v2755
        %v2757 = vpop.f32.mrf.mxu0
        %v2758 = vpop.f32.mrf.mxu0
        %2759 = vdwg.mxu0
        %v2760 = vmul.f32 %v2754, 0.5
        %v2761 = vmul.f32 %v2756, 0.5
        %v2762 = vmul.f32 %v2754, 0.70710677
        %v2763 = vmul.f32 %v2756, 0.70710677
        %v2764 = verf.f32.pop %v2762
        %v2765 = verf.f32.pop %v2763
        %v2766 = vadd.f32 %v2764, 1.0
        %v2767 = vadd.f32 %v2765, 1.0
        %v2768 = vmul.f32 %v2760, %v2766
        %v2769 = vmul.f32 %v2761, %v2767
        %v2770 = vpack.c.bf16 %v2768, %v2768
        %v2771 = vpack.c.bf16 %v2769, %v2769
        %v2772 = vld [vmem:[%s13] sm:$0xf]
        %v2773 = vld [vmem:[%s13 + $0x4] sm:$0xf]
        %v2774 = vld [vmem:[%s13 + $0x8] sm:$0xf]
        %v2775 = vld [vmem:[%s13 + $0xc] sm:$0xf]
        %v2776 = vld [vmem:[%s13 + $0x10] sm:$0xf]
        %v2777 = vld [vmem:[%s13 + $0x14] sm:$0xf]
        %v2778 = vld [vmem:[%s13 + $0x18] sm:$0xf]
        %v2779 = vld [vmem:[%s13 + $0x1c] sm:$0xf]
        %v2780 = vld [vmem:[%s13 + $0x20] sm:$0xf]
        %v2781 = vld [vmem:[%s13 + $0x24] sm:$0xf]
        %v2782 = vld [vmem:[%s13 + $0x28] sm:$0xf]
        %v2783 = vld [vmem:[%s13 + $0x2c] sm:$0xf]
        %v2784 = vld [vmem:[%s13 + $0x30] sm:$0xf]
        %v2785 = vld [vmem:[%s13 + $0x34] sm:$0xf]
        %v2786 = vld [vmem:[%s13 + $0x38] sm:$0xf]
        %v2787 = vld [vmem:[%s13 + $0x3c] sm:$0xf]
        %v2788 = vld [vmem:[%s13 + $0x40] sm:$0xf]
        %v2789 = vld [vmem:[%s13 + $0x44] sm:$0xf]
        %v2790 = vld [vmem:[%s13 + $0x48] sm:$0xf]
        %v2791 = vld [vmem:[%s13 + $0x4c] sm:$0xf]
        %v2792 = vld [vmem:[%s13 + $0x50] sm:$0xf]
        %v2793 = vld [vmem:[%s13 + $0x54] sm:$0xf]
        %v2794 = vld [vmem:[%s13 + $0x58] sm:$0xf]
        %v2795 = vld [vmem:[%s13 + $0x5c] sm:$0xf]
        %v2796 = vld [vmem:[%s13 + $0x60] sm:$0xf]
        %v2797 = vld [vmem:[%s13 + $0x64] sm:$0xf]
        %v2798 = vld [vmem:[%s13 + $0x68] sm:$0xf]
        %v2799 = vld [vmem:[%s13 + $0x6c] sm:$0xf]
        %v2800 = vld [vmem:[%s13 + $0x70] sm:$0xf]
        %v2801 = vld [vmem:[%s13 + $0x74] sm:$0xf]
        %v2802 = vld [vmem:[%s13 + $0x78] sm:$0xf]
        %v2803 = vld [vmem:[%s13 + $0x7c] sm:$0xf]
        %v2804 = vld [vmem:[%s14] sm:$0x1]
        %v2806 = vlaneseq
        %v2807 = vshrl.u32 %v2806, 7
        %v2808 = vsub.s32 0, %v2807
        %v2809 = vrot.slane %v2804, %v2808
        %v2843 = vunpack.c.l.b16 %v2772
        %v2844 = vunpack.c.l.b16 %v2773
        %v2845 = vunpack.c.l.b16 %v2774
        %v2846 = vunpack.c.l.b16 %v2775
        %v2847 = vunpack.c.l.b16 %v2776
        %v2848 = vunpack.c.l.b16 %v2777
        %v2849 = vunpack.c.l.b16 %v2778
        %v2850 = vunpack.c.l.b16 %v2779
        %v2851 = vunpack.c.l.b16 %v2780
        %v2852 = vunpack.c.l.b16 %v2781
        %v2853 = vunpack.c.l.b16 %v2782
        %v2854 = vunpack.c.l.b16 %v2783
        %v2855 = vunpack.c.l.b16 %v2784
        %v2856 = vunpack.c.l.b16 %v2785
        %v2857 = vunpack.c.l.b16 %v2786
        %v2858 = vunpack.c.l.b16 %v2787
        %v2859 = vunpack.c.l.b16 %v2788
        %v2860 = vunpack.c.l.b16 %v2789
        %v2861 = vunpack.c.l.b16 %v2790
        %v2862 = vunpack.c.l.b16 %v2791
        %v2863 = vunpack.c.l.b16 %v2792
        %v2864 = vunpack.c.l.b16 %v2793
        %v2865 = vunpack.c.l.b16 %v2794
        %v2866 = vunpack.c.l.b16 %v2795
        %v2867 = vunpack.c.l.b16 %v2796
        %v2868 = vunpack.c.l.b16 %v2797
        %v2869 = vunpack.c.l.b16 %v2798
        %v2870 = vunpack.c.l.b16 %v2799
        %v2871 = vunpack.c.l.b16 %v2800
        %v2872 = vunpack.c.l.b16 %v2801
        %v2873 = vunpack.c.l.b16 %v2802
        %v2874 = vunpack.c.l.b16 %v2803
        %v2875 = vpack.c.b16 %v2844, %v2843
        %v2876 = vpack.c.b16 %v2846, %v2845
        %v2877 = vpack.c.b16 %v2848, %v2847
        %v2878 = vpack.c.b16 %v2850, %v2849
        %v2879 = vpack.c.b16 %v2852, %v2851
        %v2880 = vpack.c.b16 %v2854, %v2853
        %v2881 = vpack.c.b16 %v2856, %v2855
        %v2882 = vpack.c.b16 %v2858, %v2857
        %v2883 = vpack.c.b16 %v2860, %v2859
        %v2884 = vpack.c.b16 %v2862, %v2861
        %v2885 = vpack.c.b16 %v2864, %v2863
        %v2886 = vpack.c.b16 %v2866, %v2865
        %v2887 = vpack.c.b16 %v2868, %v2867
        %v2888 = vpack.c.b16 %v2870, %v2869
        %v2889 = vpack.c.b16 %v2872, %v2871
        %v2890 = vpack.c.b16 %v2874, %v2873
        %2907 = vmatprep.subr.bf16.mxu0 0
        %2908 = vmatpush1.bf16.msra.mxu0 %v2882
        %2909 = vmatprep.subr.bf16.mxu0 0
        %2910 = vmatpush1.bf16.msra.mxu0 %v2881
        %2911 = vmatprep.subr.bf16.mxu0 0
        %2912 = vmatpush1.bf16.msra.mxu0 %v2880
        %2913 = vmatprep.subr.bf16.mxu0 0
        %2914 = vmatpush1.bf16.msra.mxu0 %v2879
        %2915 = vmatprep.subr.bf16.mxu0 0
        %2916 = vmatpush1.bf16.msra.mxu0 %v2878
        %2917 = vmatprep.subr.bf16.mxu0 0
        %2918 = vmatpush1.bf16.msra.mxu0 %v2877
        %2919 = vmatprep.subr.bf16.mxu0 0
        %2920 = vmatpush1.bf16.msra.mxu0 %v2876
        %2921 = vmatprep.subr.bf16.mxu0 0
        %2922 = vmatpush1.bf16.msra.mxu0 %v2875
        %2923 = vmatprep.subr.bf16.mxu0 0
        %2924 = vmatpush2.bf16.msra.mxu0 %v2890
        %2925 = vmatprep.subr.bf16.mxu0 0
        %2926 = vmatpush2.bf16.msra.mxu0 %v2889
        %2927 = vmatprep.subr.bf16.mxu0 0
        %2928 = vmatpush2.bf16.msra.mxu0 %v2888
        %2929 = vmatprep.subr.bf16.mxu0 0
        %2930 = vmatpush2.bf16.msra.mxu0 %v2887
        %2931 = vmatprep.subr.bf16.mxu0 0
        %2932 = vmatpush2.bf16.msra.mxu0 %v2886
        %2933 = vmatprep.subr.bf16.mxu0 0
        %2934 = vmatpush2.bf16.msra.mxu0 %v2885
        %2935 = vmatprep.subr.bf16.mxu0 0
        %2936 = vmatpush2.bf16.msra.mxu0 %v2884
        %2937 = vmatprep.subr.bf16.mxu0 0
        %2938 = vmatpush2.bf16.msra.mxu0 %v2883
        %2939 = vmatprep.mubr.bf16.mxu0 %v2771
        %2940 = vmatmul.mubr.bf16.gmra.mxu0 %v2770
        %v2941 = vpop.f32.mrf.mxu0
        %v2942 = vadd.f32 %v2809, %v2941
        %v2943 = vpop.f32.mrf.mxu0
        %v2944 = vpop.f32.mrf.mxu0
        %v2945 = vpop.f32.mrf.mxu0
        %2946 = vdwg.mxu0
        %v2947 = vadd.f32 %v2609, %v2942
        %2948 = vadd.xlane.f32.xlu0 %v2947
        %v2949 = vpop.xlane.xlu0 %2948
        %v2950 = vmul.f32 %v2949, %v2584
        %v2951 = vsub.f32 %v2947, %v2950
        %v2952 = vmul.f32 %v2951, %v2951
        %2953 = vadd.xlane.f32.xlu0 %v2952
        %v2954 = vpop.xlane.xlu0 %2953
        %v2955 = vmul.f32 %v2954, %v2584
        %v2956 = vadd.f32 %v2955, 1e-05
        %v2957 = vrsqrt.pop %v2956
        %v2958 = vmul.f32 %v2951, %v2957
        %v2959 = vld [vmem:[%s15] sm:$0x1]
        %v2961 = vlaneseq
        %v2962 = vshrl.u32 %v2961, 7
        %v2963 = vsub.s32 0, %v2962
        %v2964 = vrot.slane %v2959, %v2963
        %v2966 = vmul.f32 %v2958, %v2964
        %v2967 = vld [vmem:[%s16] sm:$0x1]
        %v2969 = vlaneseq
        %v2970 = vshrl.u32 %v2969, 7
        %v2971 = vsub.s32 0, %v2970
        %v2972 = vrot.slane %v2967, %v2971
        %v2974 = vadd.f32 %v2966, %v2972
        %2975 = vst [vmem:[%s539] sm:$0xff] %v2974
        %s2976 = sand.u32 %s401, 1
        %s2977 = scalar_lea.sflag [#allocation3], %s2976
        %s2978 = sand.u32 %s401, 1
        %s2979 = smul.addr %s2978, 8
        %s2980 = scalar_lea.vmem [#allocation2], %s2979
        // Predicated region
        $region89: #{tpu_custom_call.1} parent=87 // pred_check
          %p2981 = pneg %p411
        $region90: #{tpu_custom_call.1} parent=87 // pred_check_branch
          %2983 = sbr.rel (%p2981) target = $region92
        $region91: #{tpu_custom_call.1} parent=87 // pred_region
          %s2985 = ssub.s32 128, 128
          %2986 = vsyncadd %s2977, %s2985
          %s2987 = smul.addr %s31, 128
          %s2988 = scalar_lea.hbm %s17, %s2987
          %s2990 = sshll.u32 %s2980, 4
          %s2991 = int_to_ptr.vmem [resolvable:$true] %s2990
          %2993 = dma.vmem_to_hbm [thread:$0]  %s2991, 128, %s2988, %s2977
        $region92: #{tpu_custom_call.1} parent=87 // pred_fallthru
          _
      $region88: #{tpu_custom_call.1} parent=5 // pred_fallthru
        _
      %p2994 = scmp.le.s32.totalorder 2, %s26
      // Predicated region
      $region93: #{tpu_custom_call.1} parent=5 // pred_check
        %p2995 = pneg %p2994
      $region94: #{tpu_custom_call.1} parent=5 // pred_check_branch
        %2997 = sbr.rel (%p2995) target = $region96
      $region95: #{tpu_custom_call.1} parent=5 // pred_region
        %s2998 = ssub.s32 %s26, 2
        // Predicated region
        $region97: #{tpu_custom_call.1} parent=95 // pred_check
          %p2999 = pneg %p417
        $region98: #{tpu_custom_call.1} parent=95 // pred_check_branch
          %3001 = sbr.rel (%p2999) target = $region100
        $region99: #{tpu_custom_call.1} parent=95 // pred_region
          %s3002 = sand.u32 %s402, 1
          %s3003 = scalar_lea.sflag [#allocation3], %s3002
          %s3004 = sand.u32 %s402, 1
          %s3005 = smul.addr %s3004, 8
          %s3006 = scalar_lea.vmem [#allocation2], %s3005
          %3007 = dma.done %s3003, 128
        $region100: #{tpu_custom_call.1} parent=95 // pred_fallthru
          _
      $region96: #{tpu_custom_call.1} parent=5 // pred_fallthru
        _
    $region6: #{tpu_custom_call.1} parent=1 // loop_footer
      %s30 = sadd.s32 1, %s26
    $region7: #{tpu_custom_call.1} parent=1 // loop_footer_branch
      %25 = sbr.rel target = $region3
    $region8: #{tpu_custom_call.1} parent=1 // loop_exit
      _
    %3008 = vsyncpa [#allocation3], 1
    %s3009 = scalar_lea.sflag [#allocation3], 1
    %3010 = vsyncpa %s3009, 1

</llo_original>
